<compile_context>
chip_gen: v6e
topology: v6e:2x2x1
jax: 0.10.0
libtpu: 0.0.40
codegen_flags: <defaults>
</compile_context>

<pallas_src>
from functools import partial

import jax
import jax.numpy as jnp
from jax import lax
from jax.experimental import pallas as pl
from jax.experimental.pallas import tpu as pltpu


# ---------------------------------------------------------------------------
# tiling helpers
# ---------------------------------------------------------------------------
def _choose_head_group(num_heads, head_dim):
    """Heads per head-group (grid step along the out_proj reduction axis).

    Prefer the smallest group whose packed lane width N = HG*D is a multiple
    of 128, so the per-group weight blocks (E, 3N) / (N, E) are lane-tile
    aligned and as small as possible.  Fall back to a single group
    (full-extent weight blocks, always legal) otherwise.
    """
    for hg in range(1, num_heads + 1):
        if num_heads % hg == 0 and (hg * head_dim) % 128 == 0:
            return hg
    return num_heads


def _choose_q_tile(s_pad):
    """s_pad is always a multiple of 128; keep TQ large to amortize MXU push/drain."""
    if s_pad % 256 == 0 and s_pad > 128:
        return 256
    return 128


def _vmem_limit_bytes():
    cap = 64 * 1024 * 1024                       # safe default (v7x physical)
    try:
        info = pltpu.get_tpu_info()
        cap = int(getattr(info, "vmem_capacity_bytes", cap)) or cap
    except Exception:
        pass
    # Leave headroom for compiler-internal scratch / double buffers:
    # ~48 MiB on v7x (64 MiB physical), ~96 MiB on v5e/v6e (128 MiB physical).
    return int(min(cap * 3 // 4, 112 * 1024 * 1024))


# ---------------------------------------------------------------------------
# fused attention + out_proj kernel
# ---------------------------------------------------------------------------
def _siglip_attn_kernel(x_ref, wqkv_ref, bqkv_ref, wo_ref, bo_ref, *refs,
                        scale, HG, D, G, TQ, S_real, S_pad, need_weights):
    if need_weights:
        out_ref, attnw_ref, k_scr, v_scr, o_scr, acc_scr = refs
    else:
        out_ref, k_scr, v_scr, o_scr, acc_scr = refs
        attnw_ref = None

    qt = pl.program_id(1)          # query-tile index
    g = pl.program_id(2)           # head-group index (innermost; out_proj reduction)
    N = HG * D
    cdt = k_scr.dtype              # MXU operand dtype (bf16 by default)

    # --- K/V projection for THIS head group, once per batch element ----------
    # Spread across g steps (no all-groups prologue spike); the per-group K/V
    # scratch stays resident across the remaining query tiles of this batch.
    @pl.when(qt == 0)
    def _():
        xc = x_ref[0]                                                 # (S_pad, E)
        k = jnp.dot(xc, wqkv_ref[:, N:2 * N], preferred_element_type=jnp.float32)
        v = jnp.dot(xc, wqkv_ref[:, 2 * N:3 * N], preferred_element_type=jnp.float32)
        k_scr[g] = (k + bqkv_ref[:, N:2 * N]).astype(cdt)
        v_scr[g] = (v + bqkv_ref[:, 2 * N:3 * N]).astype(cdt)

    # --- Q projection for this (qt, g) step, inline (no Q scratch) -----------
    start = pl.multiple_of(qt * TQ, TQ)
    xq = x_ref[0, pl.ds(start, TQ), :]                                # (TQ, E)
    q = (jnp.dot(xq, wqkv_ref[:, 0:N], preferred_element_type=jnp.float32)
         + bqkv_ref[:, 0:N]).astype(cdt)                              # (TQ, N)

    kg = k_scr[g]                                                     # (S_pad, N)
    vg = v_scr[g]                                                     # (S_pad, N)

    if S_real < S_pad:
        # Key-side padding mask (computed once, shared by every head).
        kmask = lax.broadcasted_iota(jnp.int32, (1, S_pad), 1) < S_real

    # --- attention for the HG heads of group g --------------------------------
    # Per-head results are stored at static lane offsets into o_scr (no
    # jnp.concatenate relayout) which also bounds the (TQ, S_pad) temporaries.
    for h in range(HG):                                               # small static unroll
        hs = slice(h * D, (h + 1) * D)
        s = lax.dot_general(q[:, hs], kg[:, hs],
                            (((1,), (1,)), ((), ())),
                            preferred_element_type=jnp.float32) * scale   # (TQ, S_pad)
        if S_real < S_pad:
            s = jnp.where(kmask, s, -1e30)
        m = jnp.max(s, axis=-1, keepdims=True)
        p = jnp.exp(s - m)                                            # fp32 softmax
        l = jnp.sum(p, axis=-1, keepdims=True)
        if need_weights:
            w = p / l                                                 # exact: matches torch.softmax
            attnw_ref[0, h] = w.astype(attnw_ref.dtype)
            oh = jnp.dot(w.astype(cdt), vg[:, hs], preferred_element_type=jnp.float32)
        else:
            # Normalize AFTER the PV matmul: one (TQ, D) scale instead of a
            # (TQ, S_pad) multiply + cast; EUP approximate reciprocal.
            oh = jnp.dot(p.astype(cdt), vg[:, hs], preferred_element_type=jnp.float32)
            oh = oh * pl.reciprocal(l, approx=True)
        o_scr[:, hs] = oh.astype(cdt)

    # --- fused out_proj: this head group's contribution ----------------------
    prod = jnp.dot(o_scr[...], wo_ref[...], preferred_element_type=jnp.float32)  # (TQ, E)

    @pl.when(g == 0)
    def _():
        acc_scr[...] = prod            # first group writes directly (no zero fill)

    @pl.when(g > 0)
    def _():
        acc_scr[...] += prod

    # --- last head group: add bias and emit the (TQ, E) output tile ----------
    @pl.when(g == G - 1)
    def _():
        out_ref[0] = (acc_scr[...] + bo_ref[...]).astype(out_ref.dtype)


# ---------------------------------------------------------------------------
# wrapper
# ---------------------------------------------------------------------------
def siglip_attention(hidden_states, params, num_heads, *,
                     compute_dtype=None, need_weights=False):
    """hidden_states: (B, S, E). Returns (attn_output (B,S,E), attn_weights (B,H,S,S) or None)."""
    B, S, E = hidden_states.shape
    H = num_heads
    assert E % H == 0, "hidden_size must be divisible by num_heads"
    D = E // H
    scale = D ** (-0.5)
    out_dtype = hidden_states.dtype

    # bf16 MXU operands by default (fp32 accumulation, fp32 softmax).
    if compute_dtype is None:
        cdt = jnp.bfloat16 if jnp.dtype(out_dtype) == jnp.dtype(jnp.float32) \
            else jnp.dtype(out_dtype)
    else:
        cdt = jnp.dtype(compute_dtype)

    HG = _choose_head_group(H, D)      # heads per head group
    G = H // HG                        # number of head groups
    N = HG * D                         # packed lane width per group

    # Pad the sequence to a multiple of 128 (lane-dense stores, fixed tiles).
    S_pad = max(128, ((S + 127) // 128) * 128)
    TQ = _choose_q_tile(S_pad)
    QT = S_pad // TQ

    x = hidden_states
    if S_pad != S:
        x = jnp.pad(x, ((0, 0), (0, S_pad - S), (0, 0)))
    x = x.astype(cdt)

    # Fused, pre-transposed projection weights laid out GROUP-MAJOR:
    # columns [q_g | k_g | v_g] for g = 0..G-1, so the per-group (E, 3N)
    # block is contiguous and selected by the index_map.
    # (PyTorch Linear stores W as (out, in); y = x @ W.T + b.)
    wq_t, wk_t, wv_t = params["q_w"].T, params["k_w"].T, params["v_w"].T
    bq, bk, bv = params["q_b"], params["k_b"], params["v_b"]
    w_groups, b_groups = [], []
    for gg in range(G):
        cs = slice(gg * N, (gg + 1) * N)
        w_groups += [wq_t[:, cs], wk_t[:, cs], wv_t[:, cs]]
        b_groups += [bq[cs], bk[cs], bv[cs]]
    wqkv = jnp.concatenate(w_groups, axis=1).astype(cdt)              # (E, 3E) group-major
    bqkv = jnp.concatenate(b_groups).reshape(1, 3 * E).astype(jnp.float32)
    wo = params["o_w"].T.astype(cdt)                                  # (E, E), rows (head, d)
    bo = params["o_b"].reshape(1, E).astype(jnp.float32)

    kernel = partial(_siglip_attn_kernel, scale=scale, HG=HG, D=D, G=G, TQ=TQ,
                     S_real=S, S_pad=S_pad, need_weights=need_weights)

    out_spec = pl.BlockSpec((1, TQ, E), lambda b, qt, g: (b, qt, 0))
    if need_weights:
        out_shape = (jax.ShapeDtypeStruct((B, S_pad, E), out_dtype),
                     jax.ShapeDtypeStruct((B, H, S_pad, S_pad), out_dtype))
        out_specs = (out_spec,
                     pl.BlockSpec((1, HG, TQ, S_pad), lambda b, qt, g: (b, g, qt, 0)))
    else:
        out_shape = jax.ShapeDtypeStruct((B, S_pad, E), out_dtype)
        out_specs = out_spec

    res = pl.pallas_call(
        kernel,
        out_shape=out_shape,
        grid_spec=pltpu.PrefetchScalarGridSpec(
            num_scalar_prefetch=0,
            # Head-group axis innermost: it is the reduction axis for the
            # fused out_proj accumulator.  The query-tile axis must stay
            # sequential ("arbitrary"): K/V scratch written at qt == 0 is
            # reused across it (and re-derived per batch element / per core).
            grid=(B, QT, G),
            in_specs=[
                pl.BlockSpec((1, S_pad, E), lambda b, qt, g: (b, 0, 0)),   # x, resident per b
                pl.BlockSpec((E, 3 * N), lambda b, qt, g: (0, g)),         # qkv weight, per group
                pl.BlockSpec((1, 3 * N), lambda b, qt, g: (0, g)),         # qkv bias,   per group
                pl.BlockSpec((N, E), lambda b, qt, g: (g, 0)),             # out_proj W, per group
                pl.BlockSpec((1, E), lambda b, qt, g: (0, 0)),             # out_proj bias
            ],
            out_specs=out_specs,
            scratch_shapes=[
                pltpu.VMEM((G, S_pad, N), cdt),          # K (all groups, this batch elem)
                pltpu.VMEM((G, S_pad, N), cdt),          # V
                pltpu.VMEM((TQ, N), cdt),                # per-group head-packed PV output
                pltpu.VMEM((TQ, E), jnp.float32),        # fused out_proj accumulator
            ]),
        compiler_params=pltpu.CompilerParams(
            dimension_semantics=("parallel", "arbitrary", "arbitrary"),
            vmem_limit_bytes=_vmem_limit_bytes()),
    )(x, wqkv, bqkv, wo, bo)

    if need_weights:
        attn_output, attn_weights = res
        attn_weights = attn_weights[:, :, :S, :S] if S_pad != S else attn_weights
    else:
        attn_output, attn_weights = res, None
    if S_pad != S:
        attn_output = attn_output[:, :S, :]
    return attn_output, attn_weights


# ---------------------------------------------------------------------------
# pure-JAX reference (mirrors the PyTorch forward exactly)
# ---------------------------------------------------------------------------
def siglip_attention_ref(x, params, num_heads):
    B, S, E = x.shape
    H = num_heads
    D = E // H
    scale = D ** (-0.5)

    def lin(t, W, b):
        return t @ W.T + b

    q = lin(x, params["q_w"], params["q_b"]).reshape(B, S, H, D).transpose(0, 2, 1, 3)
    k = lin(x, params["k_w"], params["k_b"]).reshape(B, S, H, D).transpose(0, 2, 1, 3)
    v = lin(x, params["v_w"], params["v_b"]).reshape(B, S, H, D).transpose(0, 2, 1, 3)

    w = jnp.einsum("bhqd,bhkd->bhqk", q, k) * scale
    w = jax.nn.softmax(w.astype(jnp.float32), axis=-1).astype(x.dtype)
    o = jnp.einsum("bhqk,bhkd->bhqd", w, v)
    o = o.transpose(0, 2, 1, 3).reshape(B, S, E)
    o = lin(o, params["o_w"], params["o_b"])
    return o, w


# ---------------------------------------------------------------------------
if __name__ == "__main__":
    def make_params(key, E):
        keys = jax.random.split(key, 8)
        init = lambda k, shape: jax.random.normal(k, shape, jnp.float32) * 0.05
        return {
            "q_w": init(keys[0], (E, E)), "q_b": init(keys[1], (E,)),
            "k_w": init(keys[2], (E, E)), "k_b": init(keys[3], (E,)),
            "v_w": init(keys[4], (E, E)), "v_b": init(keys[5], (E,)),
            "o_w": init(keys[6], (E, E)), "o_b": init(keys[7], (E,)),
        }

    key = jax.random.PRNGKey(0)

    # ---- small config: B=2, S=16, E=32, H=4  (G=1, S padded to 128 -> key masking) ----
    B, S, E, H = 2, 16, 32, 4
    k_p, k_x, key = jax.random.split(key, 3)
    params = make_params(k_p, E)
    x = jax.random.normal(k_x, (B, S, E), jnp.float32)
    ref_out, ref_w = siglip_attention_ref(x, params, num_heads=H)

    # Default path: bf16 MXU operands, no attention-weights write.
    out, w_none = siglip_attention(x, params, num_heads=H)
    out = jax.block_until_ready(out)
    assert w_none is None and out.shape == (B, S, E)
    assert jnp.allclose(out, ref_out, atol=3e-2, rtol=3e-2)

    # Weights requested (exact softmax normalization on this path).
    out_w, attn_w = siglip_attention(x, params, num_heads=H, need_weights=True)
    attn_w = jax.block_until_ready(attn_w)
    assert attn_w.shape == (B, H, S, S)
    assert jnp.allclose(out_w, ref_out, atol=3e-2, rtol=3e-2)
    assert jnp.allclose(attn_w, ref_w, atol=1e-2, rtol=1e-2)

    # fp32 MXU operands: tight check of the math path.
    out32, w32 = siglip_attention(x, params, num_heads=H,
                                  compute_dtype=jnp.float32, need_weights=True)
    out32 = jax.block_until_ready(out32)
    assert jnp.allclose(out32, ref_out, atol=5e-3, rtol=5e-3)
    assert jnp.allclose(w32, ref_w, atol=5e-3, rtol=5e-3)

    # ---- medium config exercising G > 1 and multiple query tiles --------------------
    # E=256, H=2 -> D=128 -> HG=1, G=2; S=300 -> S_pad=384 -> TQ=128, 3 query tiles.
    B2, S2, E2, H2 = 1, 300, 256, 2
    k_p2, k_x2, key = jax.random.split(key, 3)
    params2 = make_params(k_p2, E2)
    x2 = jax.random.normal(k_x2, (B2, S2, E2), jnp.float32)
    ref_out2, ref_w2 = siglip_attention_ref(x2, params2, num_heads=H2)

    out2, attn_w2 = siglip_attention(x2, params2, num_heads=H2, need_weights=True)
    out2 = jax.block_until_ready(out2)
    assert out2.shape == (B2, S2, E2) and attn_w2.shape == (B2, H2, S2, S2)
    assert jnp.allclose(out2, ref_out2, atol=5e-2, rtol=5e-2)
    assert jnp.allclose(attn_w2, ref_w2, atol=6e-3, rtol=2e-2)

    out2_nw, w2_none = siglip_attention(x2, params2, num_heads=H2)  # need_weights=False default
    out2_nw = jax.block_until_ready(out2_nw)
    assert w2_none is None
    assert jnp.allclose(out2_nw, ref_out2, atol=5e-2, rtol=5e-2)

    print("KERNEL_OK")
</pallas_src>

<mosaic_0001>
module attributes {stable_mosaic.version = 11 : i64} {
  func.func @_siglip_attn_kernel(%arg0: i32, %arg1: i32, %arg2: i32, %arg3: memref<1x128x32xbf16, #tpu.memory_space<vmem>>, %arg4: memref<32x96xbf16, #tpu.memory_space<vmem>>, %arg5: memref<1x96xf32, #tpu.memory_space<vmem>>, %arg6: memref<32x32xbf16, #tpu.memory_space<vmem>>, %arg7: memref<1x32xf32, #tpu.memory_space<vmem>>, %arg8: memref<1x128x32xf32, #tpu.memory_space<vmem>>, %arg9: memref<1x128x32xbf16, #tpu.memory_space<vmem>>, %arg10: memref<1x128x32xbf16, #tpu.memory_space<vmem>>, %arg11: memref<128x32xbf16, #tpu.memory_space<vmem>>, %arg12: memref<128x32xf32, #tpu.memory_space<vmem>>) attributes {dimension_semantics = [#tpu.dimension_semantics<parallel>, #tpu.dimension_semantics<arbitrary>, #tpu.dimension_semantics<arbitrary>], iteration_bounds = array<i64: 2, 1, 1>, scalar_prefetch = 0 : i64, scratch_operands = 4 : i64, tpu.core_type = #tpu.core_type<tc>, window_params = [{transform_indices = @transform_0, window_bounds = array<i64: 1, 128, 32>}, {transform_indices = @transform_1, window_bounds = array<i64: 32, 96>}, {transform_indices = @transform_2, window_bounds = array<i64: 1, 96>}, {transform_indices = @transform_3, window_bounds = array<i64: 32, 32>}, {pipeline_mode = #tpu.pipeline_mode<synchronous>, transform_indices = @transform_4, window_bounds = array<i64: 1, 32>}, {transform_indices = @transform_5, window_bounds = array<i64: 1, 128, 32>}]} {
    %c0_i32 = arith.constant 0 : i32
    %0 = arith.cmpi eq, %arg1, %c0_i32 : i32
    %1 = arith.extui %0 : i1 to i32
    %c0_i32_0 = arith.constant 0 : i32
    %2 = arith.cmpi ne, %1, %c0_i32_0 : i32
    scf.if %2 {
      %c0_50 = arith.constant 0 : index
      %c0_51 = arith.constant 0 : index
      %c0_52 = arith.constant 0 : index
      %131 = vector.load %arg3[%c0_50, %c0_51, %c0_52] : memref<1x128x32xbf16, #tpu.memory_space<vmem>>, vector<1x128x32xbf16>
      %132 = vector.shape_cast %131 : vector<1x128x32xbf16> to vector<128x32xbf16>
      %c0_53 = arith.constant 0 : index
      %c32 = arith.constant 32 : index
      %133 = vector.load %arg4[%c0_53, %c32] : memref<32x96xbf16, #tpu.memory_space<vmem>>, vector<32x32xbf16>
      %cst_54 = arith.constant dense<0.000000e+00> : vector<128x32xf32>
      %134 = tpu.matmul %132, %133, %cst_54 {dimension_numbers = #tpu.dot_dimension_numbers<[1], [0], [0], [1], [0, 0, 1, 1], [], []>} : vector<128x32xbf16>, vector<32x32xbf16>, vector<128x32xf32> -> vector<128x32xf32>
      %c0_55 = arith.constant 0 : index
      %c64 = arith.constant 64 : index
      %135 = vector.load %arg4[%c0_55, %c64] : memref<32x96xbf16, #tpu.memory_space<vmem>>, vector<32x32xbf16>
      %cst_56 = arith.constant dense<0.000000e+00> : vector<128x32xf32>
      %136 = tpu.matmul %132, %135, %cst_56 {dimension_numbers = #tpu.dot_dimension_numbers<[1], [0], [0], [1], [0, 0, 1, 1], [], []>} : vector<128x32xbf16>, vector<32x32xbf16>, vector<128x32xf32> -> vector<128x32xf32>
      %c0_57 = arith.constant 0 : index
      %c32_58 = arith.constant 32 : index
      %137 = vector.load %arg5[%c0_57, %c32_58] : memref<1x96xf32, #tpu.memory_space<vmem>>, vector<1x32xf32>
      %138 = vector.broadcast %137 : vector<1x32xf32> to vector<128x32xf32>
      %139 = arith.addf %134, %138 : vector<128x32xf32>
      %140 = arith.truncf %139 : vector<128x32xf32> to vector<128x32xbf16>
      %141 = arith.index_cast %arg2 : i32 to index
      %c0_59 = arith.constant 0 : index
      %c0_60 = arith.constant 0 : index
      %142 = vector.load %arg9[%141, %c0_59, %c0_60] : memref<1x128x32xbf16, #tpu.memory_space<vmem>>, vector<1x128x32xbf16>
      %143 = vector.shape_cast %142 : vector<1x128x32xbf16> to vector<128x32xbf16>
      %144 = vector.shape_cast %140 : vector<128x32xbf16> to vector<1x128x32xbf16>
      tpu.vector_store %arg9[%141, %c0_59, %c0_60], %144 {strides = array<i32>} : memref<1x128x32xbf16, #tpu.memory_space<vmem>>, vector<1x128x32xbf16>,
      %c0_61 = arith.constant 0 : index
      %c64_62 = arith.constant 64 : index
      %145 = vector.load %arg5[%c0_61, %c64_62] : memref<1x96xf32, #tpu.memory_space<vmem>>, vector<1x32xf32>
      %146 = vector.broadcast %145 : vector<1x32xf32> to vector<128x32xf32>
      %147 = arith.addf %136, %146 : vector<128x32xf32>
      %148 = arith.truncf %147 : vector<128x32xf32> to vector<128x32xbf16>
      %149 = arith.index_cast %arg2 : i32 to index
      %c0_63 = arith.constant 0 : index
      %c0_64 = arith.constant 0 : index
      %150 = vector.load %arg10[%149, %c0_63, %c0_64] : memref<1x128x32xbf16, #tpu.memory_space<vmem>>, vector<1x128x32xbf16>
      %151 = vector.shape_cast %150 : vector<1x128x32xbf16> to vector<128x32xbf16>
      %152 = vector.shape_cast %148 : vector<128x32xbf16> to vector<1x128x32xbf16>
      tpu.vector_store %arg10[%149, %c0_63, %c0_64], %152 {strides = array<i32>} : memref<1x128x32xbf16, #tpu.memory_space<vmem>>, vector<1x128x32xbf16>,
    } else {
    }
    %c128_i32 = arith.constant 128 : i32
    %3 = arith.muli %arg1, %c128_i32 : i32
    %4 = tpu.assume_multiple %3, 128 : i32
    %c0 = arith.constant 0 : index
    %5 = arith.index_cast %4 : i32 to index
    %c0_1 = arith.constant 0 : index
    %6 = vector.load %arg3[%c0, %5, %c0_1] : memref<1x128x32xbf16, #tpu.memory_space<vmem>>, vector<1x128x32xbf16>
    %7 = vector.shape_cast %6 : vector<1x128x32xbf16> to vector<128x32xbf16>
    %c0_2 = arith.constant 0 : index
    %c0_3 = arith.constant 0 : index
    %8 = vector.load %arg4[%c0_2, %c0_3] : memref<32x96xbf16, #tpu.memory_space<vmem>>, vector<32x32xbf16>
    %cst = arith.constant dense<0.000000e+00> : vector<128x32xf32>
    %9 = tpu.matmul %7, %8, %cst {dimension_numbers = #tpu.dot_dimension_numbers<[1], [0], [0], [1], [0, 0, 1, 1], [], []>} : vector<128x32xbf16>, vector<32x32xbf16>, vector<128x32xf32> -> vector<128x32xf32>
    %c0_4 = arith.constant 0 : index
    %c0_5 = arith.constant 0 : index
    %10 = vector.load %arg5[%c0_4, %c0_5] : memref<1x96xf32, #tpu.memory_space<vmem>>, vector<1x32xf32>
    %11 = vector.broadcast %10 : vector<1x32xf32> to vector<128x32xf32>
    %12 = arith.addf %9, %11 : vector<128x32xf32>
    %13 = arith.truncf %12 : vector<128x32xf32> to vector<128x32xbf16>
    %14 = arith.index_cast %arg2 : i32 to index
    %c0_6 = arith.constant 0 : index
    %c0_7 = arith.constant 0 : index
    %15 = vector.load %arg9[%14, %c0_6, %c0_7] : memref<1x128x32xbf16, #tpu.memory_space<vmem>>, vector<1x128x32xbf16>
    %16 = vector.shape_cast %15 : vector<1x128x32xbf16> to vector<128x32xbf16>
    %17 = arith.index_cast %arg2 : i32 to index
    %c0_8 = arith.constant 0 : index
    %c0_9 = arith.constant 0 : index
    %18 = vector.load %arg10[%17, %c0_8, %c0_9] : memref<1x128x32xbf16, #tpu.memory_space<vmem>>, vector<1x128x32xbf16>
    %19 = vector.shape_cast %18 : vector<1x128x32xbf16> to vector<128x32xbf16>
    %20 = tpu.iota {dimensions = array<i32: 1>} : vector<1x128xi32>
    %c16_i32 = arith.constant 16 : i32
    %21 = vector.broadcast %c16_i32 : i32 to vector<1x128xi32>
    %22 = arith.cmpi slt, %20, %21 : vector<1x128xi32>
    %23 = vector.extract_strided_slice %13 {offsets = [0, 0], sizes = [128, 8], strides = [1, 1]} : vector<128x32xbf16> to vector<128x8xbf16>
    %24 = vector.extract_strided_slice %16 {offsets = [0, 0], sizes = [128, 8], strides = [1, 1]} : vector<128x32xbf16> to vector<128x8xbf16>
    %cst_10 = arith.constant dense<0.000000e+00> : vector<128x128xf32>
    %25 = tpu.matmul %23, %24, %cst_10 {dimension_numbers = #tpu.dot_dimension_numbers<[1], [1], [0], [0], [0, 0, 1, 0], [], []>} : vector<128x8xbf16>, vector<128x8xbf16>, vector<128x128xf32> -> vector<128x128xf32>
    %cst_11 = arith.constant 0.353553385 : f32
    %26 = vector.broadcast %cst_11 : f32 to vector<128x128xf32>
    %27 = arith.mulf %25, %26 : vector<128x128xf32>
    %cst_12 = arith.constant -1.000000e+30 : f32
    %28 = vector.shape_cast %22 : vector<1x128xi1> to vector<1x128xi1>
    %29 = vector.broadcast %28 : vector<1x128xi1> to vector<128x128xi1>
    %30 = vector.broadcast %cst_12 : f32 to vector<128x128xf32>
    %31 = arith.select %29, %27, %30 : vector<128x128xi1>, vector<128x128xf32>
    %cst_13 = arith.constant dense<0xFF800000> : vector<128xf32>
    %32 = vector.multi_reduction <maximumf>, %31, %cst_13 [1] : vector<128x128xf32> to vector<128xf32>
    %33 = vector.shape_cast %32 : vector<128xf32> to vector<128x1xf32>
    %34 = vector.broadcast %33 : vector<128x1xf32> to vector<128x128xf32>
    %35 = arith.subf %31, %34 : vector<128x128xf32>
    %36 = math.exp %35 : vector<128x128xf32>
    %cst_14 = arith.constant dense<0.000000e+00> : vector<128xf32>
    %37 = vector.multi_reduction <add>, %36, %cst_14 [1] : vector<128x128xf32> to vector<128xf32>
    %38 = vector.shape_cast %37 : vector<128xf32> to vector<128x1xf32>
    %39 = arith.truncf %36 : vector<128x128xf32> to vector<128x128xbf16>
    %40 = vector.extract_strided_slice %19 {offsets = [0, 0], sizes = [128, 8], strides = [1, 1]} : vector<128x32xbf16> to vector<128x8xbf16>
    %cst_15 = arith.constant dense<0.000000e+00> : vector<128x8xf32>
    %41 = tpu.matmul %39, %40, %cst_15 {dimension_numbers = #tpu.dot_dimension_numbers<[1], [0], [0], [1], [0, 0, 1, 1], [], []>} : vector<128x128xbf16>, vector<128x8xbf16>, vector<128x8xf32> -> vector<128x8xf32>
    %42 = tpu.reciprocal %38 {approx = true} : vector<128x1xf32> -> vector<128x1xf32>
    %43 = vector.broadcast %42 : vector<128x1xf32> to vector<128x8xf32>
    %44 = arith.mulf %41, %43 : vector<128x8xf32>
    %45 = arith.truncf %44 : vector<128x8xf32> to vector<128x8xbf16>
    %c0_16 = arith.constant 0 : index
    %c0_17 = arith.constant 0 : index
    %46 = vector.load %arg11[%c0_16, %c0_17] : memref<128x32xbf16, #tpu.memory_space<vmem>>, vector<128x8xbf16>
    tpu.vector_store %arg11[%c0_16, %c0_17], %45 {strides = array<i32>} : memref<128x32xbf16, #tpu.memory_space<vmem>>, vector<128x8xbf16>,
    %47 = vector.extract_strided_slice %13 {offsets = [0, 8], sizes = [128, 8], strides = [1, 1]} : vector<128x32xbf16> to vector<128x8xbf16>
    %48 = vector.extract_strided_slice %16 {offsets = [0, 8], sizes = [128, 8], strides = [1, 1]} : vector<128x32xbf16> to vector<128x8xbf16>
    %cst_18 = arith.constant dense<0.000000e+00> : vector<128x128xf32>
    %49 = tpu.matmul %47, %48, %cst_18 {dimension_numbers = #tpu.dot_dimension_numbers<[1], [1], [0], [0], [0, 0, 1, 0], [], []>} : vector<128x8xbf16>, vector<128x8xbf16>, vector<128x128xf32> -> vector<128x128xf32>
    %cst_19 = arith.constant 0.353553385 : f32
    %50 = vector.broadcast %cst_19 : f32 to vector<128x128xf32>
    %51 = arith.mulf %49, %50 : vector<128x128xf32>
    %cst_20 = arith.constant -1.000000e+30 : f32
    %52 = vector.shape_cast %22 : vector<1x128xi1> to vector<1x128xi1>
    %53 = vector.broadcast %52 : vector<1x128xi1> to vector<128x128xi1>
    %54 = vector.broadcast %cst_20 : f32 to vector<128x128xf32>
    %55 = arith.select %53, %51, %54 : vector<128x128xi1>, vector<128x128xf32>
    %cst_21 = arith.constant dense<0xFF800000> : vector<128xf32>
    %56 = vector.multi_reduction <maximumf>, %55, %cst_21 [1] : vector<128x128xf32> to vector<128xf32>
    %57 = vector.shape_cast %56 : vector<128xf32> to vector<128x1xf32>
    %58 = vector.broadcast %57 : vector<128x1xf32> to vector<128x128xf32>
    %59 = arith.subf %55, %58 : vector<128x128xf32>
    %60 = math.exp %59 : vector<128x128xf32>
    %cst_22 = arith.constant dense<0.000000e+00> : vector<128xf32>
    %61 = vector.multi_reduction <add>, %60, %cst_22 [1] : vector<128x128xf32> to vector<128xf32>
    %62 = vector.shape_cast %61 : vector<128xf32> to vector<128x1xf32>
    %63 = arith.truncf %60 : vector<128x128xf32> to vector<128x128xbf16>
    %64 = vector.extract_strided_slice %19 {offsets = [0, 8], sizes = [128, 8], strides = [1, 1]} : vector<128x32xbf16> to vector<128x8xbf16>
    %cst_23 = arith.constant dense<0.000000e+00> : vector<128x8xf32>
    %65 = tpu.matmul %63, %64, %cst_23 {dimension_numbers = #tpu.dot_dimension_numbers<[1], [0], [0], [1], [0, 0, 1, 1], [], []>} : vector<128x128xbf16>, vector<128x8xbf16>, vector<128x8xf32> -> vector<128x8xf32>
    %66 = tpu.reciprocal %62 {approx = true} : vector<128x1xf32> -> vector<128x1xf32>
    %67 = vector.broadcast %66 : vector<128x1xf32> to vector<128x8xf32>
    %68 = arith.mulf %65, %67 : vector<128x8xf32>
    %69 = arith.truncf %68 : vector<128x8xf32> to vector<128x8xbf16>
    %c0_24 = arith.constant 0 : index
    %c8 = arith.constant 8 : index
    %70 = vector.load %arg11[%c0_24, %c8] : memref<128x32xbf16, #tpu.memory_space<vmem>>, vector<128x8xbf16>
    tpu.vector_store %arg11[%c0_24, %c8], %69 {strides = array<i32>} : memref<128x32xbf16, #tpu.memory_space<vmem>>, vector<128x8xbf16>,
    %71 = vector.extract_strided_slice %13 {offsets = [0, 16], sizes = [128, 8], strides = [1, 1]} : vector<128x32xbf16> to vector<128x8xbf16>
    %72 = vector.extract_strided_slice %16 {offsets = [0, 16], sizes = [128, 8], strides = [1, 1]} : vector<128x32xbf16> to vector<128x8xbf16>
    %cst_25 = arith.constant dense<0.000000e+00> : vector<128x128xf32>
    %73 = tpu.matmul %71, %72, %cst_25 {dimension_numbers = #tpu.dot_dimension_numbers<[1], [1], [0], [0], [0, 0, 1, 0], [], []>} : vector<128x8xbf16>, vector<128x8xbf16>, vector<128x128xf32> -> vector<128x128xf32>
    %cst_26 = arith.constant 0.353553385 : f32
    %74 = vector.broadcast %cst_26 : f32 to vector<128x128xf32>
    %75 = arith.mulf %73, %74 : vector<128x128xf32>
    %cst_27 = arith.constant -1.000000e+30 : f32
    %76 = vector.shape_cast %22 : vector<1x128xi1> to vector<1x128xi1>
    %77 = vector.broadcast %76 : vector<1x128xi1> to vector<128x128xi1>
    %78 = vector.broadcast %cst_27 : f32 to vector<128x128xf32>
    %79 = arith.select %77, %75, %78 : vector<128x128xi1>, vector<128x128xf32>
    %cst_28 = arith.constant dense<0xFF800000> : vector<128xf32>
    %80 = vector.multi_reduction <maximumf>, %79, %cst_28 [1] : vector<128x128xf32> to vector<128xf32>
    %81 = vector.shape_cast %80 : vector<128xf32> to vector<128x1xf32>
    %82 = vector.broadcast %81 : vector<128x1xf32> to vector<128x128xf32>
    %83 = arith.subf %79, %82 : vector<128x128xf32>
    %84 = math.exp %83 : vector<128x128xf32>
    %cst_29 = arith.constant dense<0.000000e+00> : vector<128xf32>
    %85 = vector.multi_reduction <add>, %84, %cst_29 [1] : vector<128x128xf32> to vector<128xf32>
    %86 = vector.shape_cast %85 : vector<128xf32> to vector<128x1xf32>
    %87 = arith.truncf %84 : vector<128x128xf32> to vector<128x128xbf16>
    %88 = vector.extract_strided_slice %19 {offsets = [0, 16], sizes = [128, 8], strides = [1, 1]} : vector<128x32xbf16> to vector<128x8xbf16>
    %cst_30 = arith.constant dense<0.000000e+00> : vector<128x8xf32>
    %89 = tpu.matmul %87, %88, %cst_30 {dimension_numbers = #tpu.dot_dimension_numbers<[1], [0], [0], [1], [0, 0, 1, 1], [], []>} : vector<128x128xbf16>, vector<128x8xbf16>, vector<128x8xf32> -> vector<128x8xf32>
    %90 = tpu.reciprocal %86 {approx = true} : vector<128x1xf32> -> vector<128x1xf32>
    %91 = vector.broadcast %90 : vector<128x1xf32> to vector<128x8xf32>
    %92 = arith.mulf %89, %91 : vector<128x8xf32>
    %93 = arith.truncf %92 : vector<128x8xf32> to vector<128x8xbf16>
    %c0_31 = arith.constant 0 : index
    %c16 = arith.constant 16 : index
    %94 = vector.load %arg11[%c0_31, %c16] : memref<128x32xbf16, #tpu.memory_space<vmem>>, vector<128x8xbf16>
    tpu.vector_store %arg11[%c0_31, %c16], %93 {strides = array<i32>} : memref<128x32xbf16, #tpu.memory_space<vmem>>, vector<128x8xbf16>,
    %95 = vector.extract_strided_slice %13 {offsets = [0, 24], sizes = [128, 8], strides = [1, 1]} : vector<128x32xbf16> to vector<128x8xbf16>
    %96 = vector.extract_strided_slice %16 {offsets = [0, 24], sizes = [128, 8], strides = [1, 1]} : vector<128x32xbf16> to vector<128x8xbf16>
    %cst_32 = arith.constant dense<0.000000e+00> : vector<128x128xf32>
    %97 = tpu.matmul %95, %96, %cst_32 {dimension_numbers = #tpu.dot_dimension_numbers<[1], [1], [0], [0], [0, 0, 1, 0], [], []>} : vector<128x8xbf16>, vector<128x8xbf16>, vector<128x128xf32> -> vector<128x128xf32>
    %cst_33 = arith.constant 0.353553385 : f32
    %98 = vector.broadcast %cst_33 : f32 to vector<128x128xf32>
    %99 = arith.mulf %97, %98 : vector<128x128xf32>
    %cst_34 = arith.constant -1.000000e+30 : f32
    %100 = vector.shape_cast %22 : vector<1x128xi1> to vector<1x128xi1>
    %101 = vector.broadcast %100 : vector<1x128xi1> to vector<128x128xi1>
    %102 = vector.broadcast %cst_34 : f32 to vector<128x128xf32>
    %103 = arith.select %101, %99, %102 : vector<128x128xi1>, vector<128x128xf32>
    %cst_35 = arith.constant dense<0xFF800000> : vector<128xf32>
    %104 = vector.multi_reduction <maximumf>, %103, %cst_35 [1] : vector<128x128xf32> to vector<128xf32>
    %105 = vector.shape_cast %104 : vector<128xf32> to vector<128x1xf32>
    %106 = vector.broadcast %105 : vector<128x1xf32> to vector<128x128xf32>
    %107 = arith.subf %103, %106 : vector<128x128xf32>
    %108 = math.exp %107 : vector<128x128xf32>
    %cst_36 = arith.constant dense<0.000000e+00> : vector<128xf32>
    %109 = vector.multi_reduction <add>, %108, %cst_36 [1] : vector<128x128xf32> to vector<128xf32>
    %110 = vector.shape_cast %109 : vector<128xf32> to vector<128x1xf32>
    %111 = arith.truncf %108 : vector<128x128xf32> to vector<128x128xbf16>
    %112 = vector.extract_strided_slice %19 {offsets = [0, 24], sizes = [128, 8], strides = [1, 1]} : vector<128x32xbf16> to vector<128x8xbf16>
    %cst_37 = arith.constant dense<0.000000e+00> : vector<128x8xf32>
    %113 = tpu.matmul %111, %112, %cst_37 {dimension_numbers = #tpu.dot_dimension_numbers<[1], [0], [0], [1], [0, 0, 1, 1], [], []>} : vector<128x128xbf16>, vector<128x8xbf16>, vector<128x8xf32> -> vector<128x8xf32>
    %114 = tpu.reciprocal %110 {approx = true} : vector<128x1xf32> -> vector<128x1xf32>
    %115 = vector.broadcast %114 : vector<128x1xf32> to vector<128x8xf32>
    %116 = arith.mulf %113, %115 : vector<128x8xf32>
    %117 = arith.truncf %116 : vector<128x8xf32> to vector<128x8xbf16>
    %c0_38 = arith.constant 0 : index
    %c24 = arith.constant 24 : index
    %118 = vector.load %arg11[%c0_38, %c24] : memref<128x32xbf16, #tpu.memory_space<vmem>>, vector<128x8xbf16>
    tpu.vector_store %arg11[%c0_38, %c24], %117 {strides = array<i32>} : memref<128x32xbf16, #tpu.memory_space<vmem>>, vector<128x8xbf16>,
    %c0_39 = arith.constant 0 : index
    %c0_40 = arith.constant 0 : index
    %119 = vector.load %arg11[%c0_39, %c0_40] : memref<128x32xbf16, #tpu.memory_space<vmem>>, vector<128x32xbf16>
    %c0_41 = arith.constant 0 : index
    %c0_42 = arith.constant 0 : index
    %120 = vector.load %arg6[%c0_41, %c0_42] : memref<32x32xbf16, #tpu.memory_space<vmem>>, vector<32x32xbf16>
    %cst_43 = arith.constant dense<0.000000e+00> : vector<128x32xf32>
    %121 = tpu.matmul %119, %120, %cst_43 {dimension_numbers = #tpu.dot_dimension_numbers<[1], [0], [0], [1], [0, 0, 1, 1], [], []>} : vector<128x32xbf16>, vector<32x32xbf16>, vector<128x32xf32> -> vector<128x32xf32>
    %c0_i32_44 = arith.constant 0 : i32
    %122 = arith.cmpi eq, %arg2, %c0_i32_44 : i32
    %123 = arith.extui %122 : i1 to i32
    %c0_i32_45 = arith.constant 0 : i32
    %124 = arith.cmpi ne, %123, %c0_i32_45 : i32
    scf.if %124 {
      %c0_50 = arith.constant 0 : index
      %c0_51 = arith.constant 0 : index
      %131 = vector.load %arg12[%c0_50, %c0_51] : memref<128x32xf32, #tpu.memory_space<vmem>>, vector<128x32xf32>
      tpu.vector_store %arg12[%c0_50, %c0_51], %121 {strides = array<i32>} : memref<128x32xf32, #tpu.memory_space<vmem>>, vector<128x32xf32>,
    } else {
    }
    %c0_i32_46 = arith.constant 0 : i32
    %125 = arith.cmpi sgt, %arg2, %c0_i32_46 : i32
    %126 = arith.extui %125 : i1 to i32
    %c0_i32_47 = arith.constant 0 : i32
    %127 = arith.cmpi ne, %126, %c0_i32_47 : i32
    scf.if %127 {
      %c0_50 = arith.constant 0 : index
      %c0_51 = arith.constant 0 : index
      %131 = vector.load %arg12[%c0_50, %c0_51] : memref<128x32xf32, #tpu.memory_space<vmem>>, vector<128x32xf32>
      %132 = arith.addf %131, %121 : vector<128x32xf32>
      %c0_52 = arith.constant 0 : index
      %c0_53 = arith.constant 0 : index
      %133 = vector.load %arg12[%c0_52, %c0_53] : memref<128x32xf32, #tpu.memory_space<vmem>>, vector<128x32xf32>
      tpu.vector_store %arg12[%c0_52, %c0_53], %132 {strides = array<i32>} : memref<128x32xf32, #tpu.memory_space<vmem>>, vector<128x32xf32>,
    } else {
    }
    %c0_i32_48 = arith.constant 0 : i32
    %128 = arith.cmpi eq, %arg2, %c0_i32_48 : i32
    %129 = arith.extui %128 : i1 to i32
    %c0_i32_49 = arith.constant 0 : i32
    %130 = arith.cmpi ne, %129, %c0_i32_49 : i32
    scf.if %130 {
      %c0_50 = arith.constant 0 : index
      %c0_51 = arith.constant 0 : index
      %131 = vector.load %arg12[%c0_50, %c0_51] : memref<128x32xf32, #tpu.memory_space<vmem>>, vector<128x32xf32>
      %c0_52 = arith.constant 0 : index
      %c0_53 = arith.constant 0 : index
      %132 = vector.load %arg7[%c0_52, %c0_53] : memref<1x32xf32, #tpu.memory_space<vmem>>, vector<1x32xf32>
      %133 = vector.broadcast %132 : vector<1x32xf32> to vector<128x32xf32>
      %134 = arith.addf %131, %133 : vector<128x32xf32>
      %c0_54 = arith.constant 0 : index
      %c0_55 = arith.constant 0 : index
      %c0_56 = arith.constant 0 : index
      %135 = vector.load %arg8[%c0_54, %c0_55, %c0_56] : memref<1x128x32xf32, #tpu.memory_space<vmem>>, vector<1x128x32xf32>
      %136 = vector.shape_cast %135 : vector<1x128x32xf32> to vector<128x32xf32>
      %137 = vector.shape_cast %134 : vector<128x32xf32> to vector<1x128x32xf32>
      tpu.vector_store %arg8[%c0_54, %c0_55, %c0_56], %137 {strides = array<i32>} : memref<1x128x32xf32, #tpu.memory_space<vmem>>, vector<1x128x32xf32>,
    } else {
    }
    return
  }
  func.func @transform_0(%arg0: i32, %arg1: i32, %arg2: i32) -> (i32, i32, i32) {
    %c0_i32 = arith.constant 0 : i32
    %c0_i32_0 = arith.constant 0 : i32
    %c0_i32_1 = arith.constant 0 : i32
    return %arg0, %c0_i32, %c0_i32_0 : i32, i32, i32
  }
  func.func @transform_1(%arg0: i32, %arg1: i32, %arg2: i32) -> (i32, i32) {
    %c0_i32 = arith.constant 0 : i32
    %c0_i32_0 = arith.constant 0 : i32
    return %c0_i32, %arg2 : i32, i32
  }
  func.func @transform_2(%arg0: i32, %arg1: i32, %arg2: i32) -> (i32, i32) {
    %c0_i32 = arith.constant 0 : i32
    %c0_i32_0 = arith.constant 0 : i32
    return %c0_i32, %arg2 : i32, i32
  }
  func.func @transform_3(%arg0: i32, %arg1: i32, %arg2: i32) -> (i32, i32) {
    %c0_i32 = arith.constant 0 : i32
    %c0_i32_0 = arith.constant 0 : i32
    return %arg2, %c0_i32 : i32, i32
  }
  func.func @transform_4(%arg0: i32, %arg1: i32, %arg2: i32) -> (i32, i32) {
    %c0_i32 = arith.constant 0 : i32
    %c0_i32_0 = arith.constant 0 : i32
    %c0_i32_1 = arith.constant 0 : i32
    return %c0_i32, %c0_i32_0 : i32, i32
  }
  func.func @transform_5(%arg0: i32, %arg1: i32, %arg2: i32) -> (i32, i32, i32) {
    %c0_i32 = arith.constant 0 : i32
    %c0_i32_0 = arith.constant 0 : i32
    return %arg0, %arg1, %c0_i32 : i32, i32, i32
  }
}

</mosaic_0001>

<llo_original>
// kernel: tpu_custom_call.1
$region0: #{tpu_custom_call.1}
  #allocation0 [shape = 'u32[]', space=smem, size = 0x4, offset = 0x4, fixed_abs, tag = 'smem constant byte address 0x4 - core index']
  #allocation1 [shape = 'u32[144,128]{1,0:T(1,128)}', space=vmem, size = 0x12000, scoped, tag = 'internal scratch']
  #allocation2 [shape = 'bf16[1,128,32]{2,1,0:T(8,128)(2,1)}', space=vmem, size = 0x8000, scoped, tag = 'scratch operand']
  #allocation3 [shape = 'bf16[1,128,32]{2,1,0:T(8,128)(2,1)}', space=vmem, size = 0x8000, scoped, tag = 'scratch operand']
  #allocation4 [shape = 'bf16[128,32]{1,0:T(8,128)(2,1)}', space=vmem, size = 0x8000, scoped, tag = 'scratch operand']
  #allocation5 [shape = 'f32[128,32]{1,0:T(8,128)}', space=vmem, size = 0x10000, scoped, tag = 'scratch operand']
  %s0 = inlined_call_operand.vmem [shape: bf16[2,128,32], index: 0, kind: input, shape index: {}]
  %s1 = inlined_call_operand.vmem [shape: bf16[32,96], index: 1, kind: input, shape index: {}]
  %s2 = inlined_call_operand.vmem [shape: f32[1,96], index: 2, kind: input, shape index: {}]
  %s3 = inlined_call_operand.vmem [shape: bf16[32,32], index: 3, kind: input, shape index: {}]
  %s4 = inlined_call_operand.vmem [shape: f32[1,32], index: 4, kind: input, shape index: {}]
  %s5 = inlined_call_operand.vmem [shape: f32[2,128,32], index: 5, kind: output, shape index: {}]
  %s6 = sld [smem:[#allocation0]]
  $region69: #{tpu_custom_call.1} parent=0
    _
  %s8 = ssub.s32 1, %s6
  %s9 = scalar_select 0, %s8, %s6
  loop: start=0, step=1, limit=4
  $region2: #{tpu_custom_call.1} parent=0 // loop_pre_header
    _
  $region3: #{tpu_custom_call.1} parent=0 // loop_header
    %s11 = sphi 0, %s15
    %p12 = scmp.ge.s32.totalorder %s11, 4
    %s18 = sphi 0, %s37
    %s19 = sphi 0, %s33
    %s20 = sphi 0, %s29
    %s21 = sphi 0, %s18
    %s22 = sphi 0, %s19
    %s23 = sphi 0, %s20
    %s24 = sphi 0, %s21
    %s25 = sphi 0, %s22
    %s26 = sphi 0, %s23
    %s40 = sphi 0, %s42
    %s43 = sphi 0, %s40
    %s44 = sphi 0, %s43
    %s60 = sphi 0, %s44
    %s66 = sphi 0, %s68
    %s69 = sphi 0, %s66
    %s70 = sphi 0, %s69
    %s86 = sphi 0, %s70
    %s92 = sphi 0, %s94
    %s95 = sphi 0, %s92
    %s96 = sphi 0, %s95
    %s112 = sphi 0, %s96
    %s118 = sphi 0, %s120
    %s121 = sphi 0, %s118
    %s122 = sphi 0, %s121
    %s138 = sphi 0, %s122
    %s142 = sphi 0, %s142
    %s144 = sphi 0, %s142
    %s145 = sphi 0, %s144
    %s159 = sphi 0, %s145
    %s167 = sphi 0, %s169
    %s170 = sphi 0, %s167
    %s171 = sphi 0, %s170
    %s187 = sphi 0, %s171
  $region4: #{tpu_custom_call.1} parent=0 // loop_header_branch
    %14 = sbr.rel (%p12) target = $region8
  $region5: #{tpu_custom_call.1} parent=0 // loop_body
    %s16 = ssub.s32 %s11, 1
    %s17 = ssub.s32 %s11, 2
    %s27 = sadd.s32 1, %s20
    %p28 = scmp.ge.s32.totalorder %s27, 1
    %s29 = scalar_select %p28, 0, %s27
    %s30 = sadd.s32 1, %s19
    %s31 = scalar_select %p28, %s30, %s19
    %p32 = scmp.ge.s32.totalorder %s31, 1
    %s33 = scalar_select %p32, 0, %s31
    %s34 = sadd.s32 1, %s18
    %s35 = scalar_select %p32, %s34, %s18
    %p36 = scmp.ge.s32.totalorder %s35, 2
    %s37 = scalar_select %p36, 0, %s35
    %s38 = ssub.s32 %s18, %s37
    %p39 = scmp.eq.s32.totalorder %s38, 0
    %s41 = sadd.s32 %s40, 1
    %s42 = scalar_select %p39, %s40, %s41
    %p45 = pneg %p39
    %p46 = scmp.eq.s32.totalorder %s11, 1
    %p47 = por %p45, %p46
    %p48 = scmp.ne.s32.totalorder %s40, %s43
    %p49 = scmp.eq.s32.totalorder %s11, 0
    %p50 = por %p48, %p49
    %p51 = scmp.ne.s32.totalorder %s40, %s43
    %p52 = scmp.eq.s32.totalorder %s16, 1
    %p53 = por %p51, %p52
    %p54 = scmp.ne.s32.totalorder %s43, %s44
    %p55 = scmp.eq.s32.totalorder %s16, 0
    %p56 = por %p54, %p55
    %p57 = scmp.ne.s32.totalorder %s43, %s44
    %p58 = scmp.eq.s32.totalorder %s17, 1
    %p59 = por %p57, %p58
    %p61 = scmp.ne.s32.totalorder %s44, %s60
    %p62 = scmp.eq.s32.totalorder %s17, 0
    %p63 = por %p61, %p62
    %s64 = ssub.s32 %s20, %s29
    %p65 = scmp.eq.s32.totalorder %s64, 0
    %s67 = sadd.s32 %s66, 1
    %s68 = scalar_select %p65, %s66, %s67
    %p71 = pneg %p65
    %p72 = scmp.eq.s32.totalorder %s11, 1
    %p73 = por %p71, %p72
    %p74 = scmp.ne.s32.totalorder %s66, %s69
    %p75 = scmp.eq.s32.totalorder %s11, 0
    %p76 = por %p74, %p75
    %p77 = scmp.ne.s32.totalorder %s66, %s69
    %p78 = scmp.eq.s32.totalorder %s16, 1
    %p79 = por %p77, %p78
    %p80 = scmp.ne.s32.totalorder %s69, %s70
    %p81 = scmp.eq.s32.totalorder %s16, 0
    %p82 = por %p80, %p81
    %p83 = scmp.ne.s32.totalorder %s69, %s70
    %p84 = scmp.eq.s32.totalorder %s17, 1
    %p85 = por %p83, %p84
    %p87 = scmp.ne.s32.totalorder %s70, %s86
    %p88 = scmp.eq.s32.totalorder %s17, 0
    %p89 = por %p87, %p88
    %s90 = ssub.s32 %s20, %s29
    %p91 = scmp.eq.s32.totalorder %s90, 0
    %s93 = sadd.s32 %s92, 1
    %s94 = scalar_select %p91, %s92, %s93
    %p97 = pneg %p91
    %p98 = scmp.eq.s32.totalorder %s11, 1
    %p99 = por %p97, %p98
    %p100 = scmp.ne.s32.totalorder %s92, %s95
    %p101 = scmp.eq.s32.totalorder %s11, 0
    %p102 = por %p100, %p101
    %p103 = scmp.ne.s32.totalorder %s92, %s95
    %p104 = scmp.eq.s32.totalorder %s16, 1
    %p105 = por %p103, %p104
    %p106 = scmp.ne.s32.totalorder %s95, %s96
    %p107 = scmp.eq.s32.totalorder %s16, 0
    %p108 = por %p106, %p107
    %p109 = scmp.ne.s32.totalorder %s95, %s96
    %p110 = scmp.eq.s32.totalorder %s17, 1
    %p111 = por %p109, %p110
    %p113 = scmp.ne.s32.totalorder %s96, %s112
    %p114 = scmp.eq.s32.totalorder %s17, 0
    %p115 = por %p113, %p114
    %s116 = ssub.s32 %s20, %s29
    %p117 = scmp.eq.s32.totalorder %s116, 0
    %s119 = sadd.s32 %s118, 1
    %s120 = scalar_select %p117, %s118, %s119
    %p123 = pneg %p117
    %p124 = scmp.eq.s32.totalorder %s11, 1
    %p125 = por %p123, %p124
    %p126 = scmp.ne.s32.totalorder %s118, %s121
    %p127 = scmp.eq.s32.totalorder %s11, 0
    %p128 = por %p126, %p127
    %p129 = scmp.ne.s32.totalorder %s118, %s121
    %p130 = scmp.eq.s32.totalorder %s16, 1
    %p131 = por %p129, %p130
    %p132 = scmp.ne.s32.totalorder %s121, %s122
    %p133 = scmp.eq.s32.totalorder %s16, 0
    %p134 = por %p132, %p133
    %p135 = scmp.ne.s32.totalorder %s121, %s122
    %p136 = scmp.eq.s32.totalorder %s17, 1
    %p137 = por %p135, %p136
    %p139 = scmp.ne.s32.totalorder %s122, %s138
    %p140 = scmp.eq.s32.totalorder %s17, 0
    %p141 = por %p139, %p140
    %s143 = sadd.s32 %s142, 1
    %p146 = scmp.eq.s32.totalorder %s11, 1
    %p147 = scmp.ne.s32.totalorder %s142, %s144
    %p148 = scmp.eq.s32.totalorder %s11, 0
    %p149 = por %p147, %p148
    %p150 = scmp.ne.s32.totalorder %s142, %s144
    %p151 = scmp.eq.s32.totalorder %s16, 1
    %p152 = por %p150, %p151
    %p153 = scmp.ne.s32.totalorder %s144, %s145
    %p154 = scmp.eq.s32.totalorder %s16, 0
    %p155 = por %p153, %p154
    %p156 = scmp.ne.s32.totalorder %s144, %s145
    %p157 = scmp.eq.s32.totalorder %s17, 1
    %p158 = por %p156, %p157
    %p160 = scmp.ne.s32.totalorder %s145, %s159
    %p161 = scmp.eq.s32.totalorder %s17, 0
    %p162 = por %p160, %p161
    %s163 = ssub.s32 %s18, %s37
    %s164 = ssub.s32 %s19, %s33
    %s165 = sor.u32 %s163, %s164
    %p166 = scmp.eq.s32.totalorder %s165, 0
    %s168 = sadd.s32 %s167, 1
    %s169 = scalar_select %p166, %s167, %s168
    %p172 = pneg %p166
    %p173 = scmp.eq.s32.totalorder %s11, 1
    %p174 = por %p172, %p173
    %p175 = scmp.ne.s32.totalorder %s167, %s170
    %p176 = scmp.eq.s32.totalorder %s11, 0
    %p177 = por %p175, %p176
    %p178 = scmp.ne.s32.totalorder %s167, %s170
    %p179 = scmp.eq.s32.totalorder %s16, 1
    %p180 = por %p178, %p179
    %p181 = scmp.ne.s32.totalorder %s170, %s171
    %p182 = scmp.eq.s32.totalorder %s16, 0
    %p183 = por %p181, %p182
    %p184 = scmp.ne.s32.totalorder %s170, %s171
    %p185 = scmp.eq.s32.totalorder %s17, 1
    %p186 = por %p184, %p185
    %p188 = scmp.ne.s32.totalorder %s171, %s187
    %p189 = scmp.eq.s32.totalorder %s17, 0
    %p190 = por %p188, %p189
    %p191 = scmp.le.s32.totalorder 1, %s11
    %p192 = scmp.lt.s32.totalorder %s11, 3
    %p193 = pnand %p191, %p192
    %p194 = pneg %p193
    // Predicated region
    $region9: #{tpu_custom_call.1} parent=5 // pred_check
      _
    $region10: #{tpu_custom_call.1} parent=5 // pred_check_branch
      %196 = sbr.rel (%p193) target = $region12
    $region11: #{tpu_custom_call.1} parent=5 // pred_region
      %s197 = ssub.s32 %s11, 1
      // Predicated region
      $region13: #{tpu_custom_call.1} parent=11 // pred_check
        %p198 = pneg %p82
      $region14: #{tpu_custom_call.1} parent=11 // pred_check_branch
        %200 = sbr.rel (%p198) target = $region16
      $region15: #{tpu_custom_call.1} parent=11 // pred_region
        %p201 = scmp.lt.s32.totalorder %s23, 0
        %s202 = scalar_select %p201, %s23, 0
        %s203 = smul.addr %s202, 4
        %s204 = scalar_lea.vmem %s1, %s203
      $region16: #{tpu_custom_call.1} parent=11 // pred_fallthru
        _
      // Predicated region
      $region17: #{tpu_custom_call.1} parent=11 // pred_check
        %p205 = pneg %p108
      $region18: #{tpu_custom_call.1} parent=11 // pred_check_branch
        %207 = sbr.rel (%p205) target = $region20
      $region19: #{tpu_custom_call.1} parent=11 // pred_region
        %p208 = scmp.lt.s32.totalorder %s23, 0
        %s209 = scalar_select %p208, %s23, 0
        %s210 = scalar_lea.vmem %s2, %s209
      $region20: #{tpu_custom_call.1} parent=11 // pred_fallthru
        _
      // Predicated region
      $region21: #{tpu_custom_call.1} parent=11 // pred_check
        %p211 = pneg %p134
      $region22: #{tpu_custom_call.1} parent=11 // pred_check_branch
        %213 = sbr.rel (%p211) target = $region24
      $region23: #{tpu_custom_call.1} parent=11 // pred_region
        %s214 = smul.u32 4, %s23
        %p215 = scmp.lt.s32.totalorder %s214, 3
        %s216 = scalar_select %p215, %s214, 3
        %s217 = smul.addr %s216, 4
        %s218 = scalar_lea.vmem %s3, %s217
        %s219 = smul.u32 4, %s23
      $region24: #{tpu_custom_call.1} parent=11 // pred_fallthru
        _
      // Predicated region
      $region25: #{tpu_custom_call.1} parent=11 // pred_check
        %p220 = pneg %p155
      $region26: #{tpu_custom_call.1} parent=11 // pred_check_branch
        %222 = sbr.rel (%p220) target = $region28
      $region27: #{tpu_custom_call.1} parent=11 // pred_region
        _
      $region28: #{tpu_custom_call.1} parent=11 // pred_fallthru
        _
    $region12: #{tpu_custom_call.1} parent=5 // pred_fallthru
      _
    %p223 = scmp.lt.s32.totalorder %s11, 2
    // Predicated region
    $region29: #{tpu_custom_call.1} parent=5 // pred_check
      %p224 = pneg %p223
    $region30: #{tpu_custom_call.1} parent=5 // pred_check_branch
      %226 = sbr.rel (%p224) target = $region32
    $region31: #{tpu_custom_call.1} parent=5 // pred_region
      // Predicated region
      $region33: #{tpu_custom_call.1} parent=31 // pred_check
        %p227 = pneg %p50
      $region34: #{tpu_custom_call.1} parent=31 // pred_check_branch
        %229 = sbr.rel (%p227) target = $region36
      $region35: #{tpu_custom_call.1} parent=31 // pred_region
        %p230 = scmp.lt.s32.totalorder %s18, 1
        %s231 = scalar_select %p230, %s18, 1
        %s232 = smul.addr %s231, 16
        %s233 = smul.addr %s232, 4
        %s234 = scalar_lea.vmem %s0, %s233
      $region36: #{tpu_custom_call.1} parent=31 // pred_fallthru
        _
    $region32: #{tpu_custom_call.1} parent=5 // pred_fallthru
      _
    %p235 = scmp.le.s32.totalorder 1, %s11
    %p236 = scmp.lt.s32.totalorder %s11, 3
    %p237 = pnand %p235, %p236
    %p238 = pneg %p237
    // Predicated region
    $region37: #{tpu_custom_call.1} parent=5 // pred_check
      _
    $region38: #{tpu_custom_call.1} parent=5 // pred_check_branch
      %240 = sbr.rel (%p237) target = $region40
    $region39: #{tpu_custom_call.1} parent=5 // pred_region
      %s241 = ssub.s32 %s11, 1
      %p242 = scmp.lt.s32.totalorder %s21, 1
      %s243 = scalar_select %p242, %s21, 1
      %s244 = smul.addr %s243, 16
      %s245 = smul.addr %s244, 4
      %s246 = scalar_lea.vmem %s0, %s245
      %p247 = pneg %p56
      %p248 = pneg %p53
      %p249 = scmp.lt.s32.totalorder %s23, 0
      %s250 = scalar_select %p249, %s23, 0
      %s251 = smul.addr %s250, 4
      %s252 = scalar_lea.vmem %s1, %s251
      %p253 = pneg %p82
      %p254 = pneg %p79
      %p255 = scmp.lt.s32.totalorder %s23, 0
      %s256 = scalar_select %p255, %s23, 0
      %s257 = scalar_lea.vmem %s2, %s256
      %p258 = pneg %p108
      %p259 = pneg %p105
      %s260 = smul.u32 4, %s23
      %p261 = scmp.lt.s32.totalorder %s260, 3
      %s262 = scalar_select %p261, %s260, 3
      %s263 = smul.addr %s262, 4
      %s264 = scalar_lea.vmem %s3, %s263
      %p265 = pneg %p134
      %p266 = pneg %p131
      %p267 = pneg %p155
      %p268 = pneg %p152
      %p269 = pneg %p183
      %p270 = pneg %p180
      %s271 = smul.u32 16, %s22
      %p272 = scmp.lt.s32.totalorder %s21, 1
      %s273 = scalar_select %p272, %s21, 1
      %p274 = scmp.lt.s32.totalorder %s271, 15
      %s275 = scalar_select %p274, %s271, 15
      %s276 = smul.addr %s273, 16
      %s277 = sadd.s32 %s275, %s276
      %s278 = smul.addr %s277, 8
      %s279 = scalar_lea.vmem %s5, %s278
      %p280 = scmp.lt.s32.totalorder %s21, 1
      %s281 = scalar_select %p280, %s21, 1
      %s282 = smul.addr %s281, 16
      %s283 = smul.addr %s282, 4
      %s284 = scalar_lea.vmem %s0, %s283
      %p285 = scmp.lt.s32.totalorder %s23, 0
      %s286 = scalar_select %p285, %s23, 0
      %s287 = smul.addr %s286, 4
      %s288 = scalar_lea.vmem %s1, %s287
      %p289 = scmp.lt.s32.totalorder %s23, 0
      %s290 = scalar_select %p289, %s23, 0
      %s291 = scalar_lea.vmem %s2, %s290
      %s292 = smul.u32 4, %s23
      %p293 = scmp.lt.s32.totalorder %s292, 3
      %s294 = scalar_select %p293, %s292, 3
      %s295 = smul.addr %s294, 4
      %s296 = scalar_lea.vmem %s3, %s295
      %s297 = smul.u32 4, %s23
      %s298 = smul.u32 16, %s22
      %p299 = scmp.lt.s32.totalorder %s21, 1
      %s300 = scalar_select %p299, %s21, 1
      %p301 = scmp.lt.s32.totalorder %s298, 15
      %s302 = scalar_select %p301, %s298, 15
      %s303 = smul.addr %s300, 16
      %s304 = sadd.s32 %s302, %s303
      %s305 = smul.addr %s304, 8
      %s306 = scalar_lea.vmem %s5, %s305
      %s307 = smul.u32 16, %s22
      %p309 = scmp.eq.s32.totalorder %s22, 0
      // Predicated region
      $region41: #{tpu_custom_call.1} parent=39 // pred_check
        %p310 = pneg %p309
      $region42: #{tpu_custom_call.1} parent=39 // pred_check_branch
        %312 = sbr.rel (%p310) target = $region44
      $region43: #{tpu_custom_call.1} parent=39 // pred_region
        %v313 = vld [vmem:[%s284] sm:$0xf]
        %v314 = vld [vmem:[%s284 + $0x4] sm:$0xf]
        %v315 = vld [vmem:[%s284 + $0x8] sm:$0xf]
        %v316 = vld [vmem:[%s284 + $0xc] sm:$0xf]
        %v317 = vld [vmem:[%s284 + $0x10] sm:$0xf]
        %v318 = vld [vmem:[%s284 + $0x14] sm:$0xf]
        %v319 = vld [vmem:[%s284 + $0x18] sm:$0xf]
        %v320 = vld [vmem:[%s284 + $0x1c] sm:$0xf]
        %v321 = vld [vmem:[%s284 + $0x20] sm:$0xf]
        %v322 = vld [vmem:[%s284 + $0x24] sm:$0xf]
        %v323 = vld [vmem:[%s284 + $0x28] sm:$0xf]
        %v324 = vld [vmem:[%s284 + $0x2c] sm:$0xf]
        %v325 = vld [vmem:[%s284 + $0x30] sm:$0xf]
        %v326 = vld [vmem:[%s284 + $0x34] sm:$0xf]
        %v327 = vld [vmem:[%s284 + $0x38] sm:$0xf]
        %v328 = vld [vmem:[%s284 + $0x3c] sm:$0xf]
        %v329 = vld [vmem:[%s288] sm:$0xf]
        %v330 = vld [vmem:[%s288 + $0x4] sm:$0xf]
        %v331 = vld [vmem:[%s288 + $0x8] sm:$0xf]
        %v332 = vld [vmem:[%s288 + $0xc] sm:$0xf]
        %v333 = vld [vmem:[%s291] sm:$0x1]
        %v335 = vlaneseq
        %v336 = vshrl.u32 %v335, 7
        %v337 = vsub.s32 0, %v336
        %v338 = vrot.slane %v333, %v337
        %v355 = vunpack.c.l.b16 %v313
        %v356 = vunpack.c.l.b16 %v314
        %v357 = vunpack.c.l.b16 %v315
        %v358 = vunpack.c.l.b16 %v316
        %v359 = vunpack.c.l.b16 %v317
        %v360 = vunpack.c.l.b16 %v318
        %v361 = vunpack.c.l.b16 %v319
        %v362 = vunpack.c.l.b16 %v320
        %v363 = vunpack.c.l.b16 %v321
        %v364 = vunpack.c.l.b16 %v322
        %v365 = vunpack.c.l.b16 %v323
        %v366 = vunpack.c.l.b16 %v324
        %v367 = vunpack.c.l.b16 %v325
        %v368 = vunpack.c.l.b16 %v326
        %v369 = vunpack.c.l.b16 %v327
        %v370 = vunpack.c.l.b16 %v328
        %v371 = vpack.c.b16 %v356, %v355
        %v372 = vpack.c.b16 %v358, %v357
        %v373 = vpack.c.b16 %v360, %v359
        %v374 = vpack.c.b16 %v362, %v361
        %v375 = vpack.c.b16 %v364, %v363
        %v376 = vpack.c.b16 %v366, %v365
        %v377 = vpack.c.b16 %v368, %v367
        %v378 = vpack.c.b16 %v370, %v369
        %v383 = vunpack.c.l.b16 %v329
        %v384 = vunpack.c.l.b16 %v330
        %v385 = vunpack.c.l.b16 %v331
        %v386 = vunpack.c.l.b16 %v332
        %v387 = vpack.c.b16 %v384, %v383
        %v388 = vpack.c.b16 %v386, %v385
        %389 = vrot.lane.b32.xlu0 %v387, 96
        %v390 = vpop.permute.xlu0 %389
        %391 = vrot.lane.b32.xlu0 %v388, 96
        %v392 = vpop.permute.xlu0 %391
        %395 = vrot.lane.b32.xlu0 %v338, 96
        %v396 = vpop.permute.xlu0 %395
        %vm398 = vcmask 261120
        %v400 = vsel %vm398, %v371, 0
        %v403 = vsel %vm398, %v372, 0
        %v406 = vsel %vm398, %v373, 0
        %v409 = vsel %vm398, %v374, 0
        %v412 = vsel %vm398, %v375, 0
        %v415 = vsel %vm398, %v376, 0
        %v418 = vsel %vm398, %v377, 0
        %v421 = vsel %vm398, %v378, 0
        %423 = vmatprep.subr.bf16.mxu0 0
        %424 = vmatpush1.bf16.msra.mxu0 0
        %425 = vmatprep.subr.bf16.mxu0 0
        %426 = vmatpush1.bf16.msra.mxu0 0
        %427 = vmatprep.subr.bf16.mxu0 0
        %428 = vmatpush1.bf16.msra.mxu0 0
        %429 = vmatprep.subr.bf16.mxu0 0
        %430 = vmatpush1.bf16.msra.mxu0 0
        %431 = vmatprep.subr.bf16.mxu0 0
        %432 = vmatpush1.bf16.msra.mxu0 0
        %433 = vmatprep.subr.bf16.mxu0 0
        %434 = vmatpush1.bf16.msra.mxu0 0
        %435 = vmatprep.subr.bf16.mxu0 0
        %436 = vmatpush1.bf16.msra.mxu0 %v392
        %437 = vmatprep.subr.bf16.mxu0 0
        %438 = vmatpush1.bf16.msra.mxu0 %v390
        %439 = vmatprep.subr.bf16.mxu0 0
        %440 = vmatpush2.bf16.msra.mxu0 0
        %441 = vmatprep.subr.bf16.mxu0 0
        %442 = vmatpush2.bf16.msra.mxu0 0
        %443 = vmatprep.subr.bf16.mxu0 0
        %444 = vmatpush2.bf16.msra.mxu0 0
        %445 = vmatprep.subr.bf16.mxu0 0
        %446 = vmatpush2.bf16.msra.mxu0 0
        %447 = vmatprep.subr.bf16.mxu0 0
        %448 = vmatpush2.bf16.msra.mxu0 0
        %449 = vmatprep.subr.bf16.mxu0 0
        %450 = vmatpush2.bf16.msra.mxu0 0
        %451 = vmatprep.subr.bf16.mxu0 0
        %452 = vmatpush2.bf16.msra.mxu0 0
        %453 = vmatprep.subr.bf16.mxu0 0
        %454 = vmatpush2.bf16.msra.mxu0 0
        %455 = vmatprep.mubr.bf16.mxu0 0
        %456 = vmatmul.mubr.bf16.gmra.mxu0 %v400
        %v457 = vpop.f32.mrf.mxu0
        %v458 = vadd.f32 %v396, %v457
        %v459 = vpop.f32.mrf.mxu0
        %v460 = vpop.f32.mrf.mxu0
        %v461 = vadd.f32 %v396, %v460
        %v462 = vpop.f32.mrf.mxu0
        %463 = vmatprep.mubr.bf16.mxu0 0
        %464 = vmatmul.mubr.bf16.gmra.mxu0 %v403
        %v465 = vpop.f32.mrf.mxu0
        %v466 = vadd.f32 %v396, %v465
        %v467 = vpop.f32.mrf.mxu0
        %v468 = vpop.f32.mrf.mxu0
        %v469 = vadd.f32 %v396, %v468
        %v470 = vpop.f32.mrf.mxu0
        %471 = vmatprep.mubr.bf16.mxu0 0
        %472 = vmatmul.mubr.bf16.gmra.mxu0 %v406
        %v473 = vpop.f32.mrf.mxu0
        %v474 = vadd.f32 %v396, %v473
        %v475 = vpop.f32.mrf.mxu0
        %v476 = vpop.f32.mrf.mxu0
        %v477 = vadd.f32 %v396, %v476
        %v478 = vpop.f32.mrf.mxu0
        %479 = vmatprep.mubr.bf16.mxu0 0
        %480 = vmatmul.mubr.bf16.gmra.mxu0 %v409
        %v481 = vpop.f32.mrf.mxu0
        %v482 = vadd.f32 %v396, %v481
        %v483 = vpop.f32.mrf.mxu0
        %v484 = vpop.f32.mrf.mxu0
        %v485 = vadd.f32 %v396, %v484
        %v486 = vpop.f32.mrf.mxu0
        %487 = vmatprep.mubr.bf16.mxu0 0
        %488 = vmatmul.mubr.bf16.gmra.mxu0 %v412
        %v489 = vpop.f32.mrf.mxu0
        %v490 = vadd.f32 %v396, %v489
        %v491 = vpop.f32.mrf.mxu0
        %v492 = vpop.f32.mrf.mxu0
        %v493 = vadd.f32 %v396, %v492
        %v494 = vpop.f32.mrf.mxu0
        %495 = vmatprep.mubr.bf16.mxu0 0
        %496 = vmatmul.mubr.bf16.gmra.mxu0 %v415
        %v497 = vpop.f32.mrf.mxu0
        %v498 = vadd.f32 %v396, %v497
        %v499 = vpop.f32.mrf.mxu0
        %v500 = vpop.f32.mrf.mxu0
        %v501 = vadd.f32 %v396, %v500
        %v502 = vpop.f32.mrf.mxu0
        %503 = vmatprep.mubr.bf16.mxu0 0
        %504 = vmatmul.mubr.bf16.gmra.mxu0 %v418
        %v505 = vpop.f32.mrf.mxu0
        %v506 = vadd.f32 %v396, %v505
        %v507 = vpop.f32.mrf.mxu0
        %v508 = vpop.f32.mrf.mxu0
        %v509 = vadd.f32 %v396, %v508
        %v510 = vpop.f32.mrf.mxu0
        %511 = vmatprep.mubr.bf16.mxu0 0
        %512 = vmatmul.mubr.bf16.gmra.mxu0 %v421
        %v513 = vpop.f32.mrf.mxu0
        %v514 = vadd.f32 %v396, %v513
        %v515 = vpop.f32.mrf.mxu0
        %v516 = vpop.f32.mrf.mxu0
        %v517 = vadd.f32 %v396, %v516
        %v518 = vpop.f32.mrf.mxu0
        %519 = vdwg.mxu0
        %v520 = vpack.c.bf16 %v461, %v458
        %v521 = vpack.c.bf16 %v469, %v466
        %v522 = vpack.c.bf16 %v477, %v474
        %v523 = vpack.c.bf16 %v485, %v482
        %v524 = vpack.c.bf16 %v493, %v490
        %v525 = vpack.c.bf16 %v501, %v498
        %v526 = vpack.c.bf16 %v509, %v506
        %v527 = vpack.c.bf16 %v517, %v514
        %v536 = vunpack.c.l.b16 %v520
        %v537 = vunpack.c.h.b16 %v520
        %v538 = vunpack.c.l.b16 %v521
        %v539 = vunpack.c.h.b16 %v521
        %v540 = vunpack.c.l.b16 %v522
        %v541 = vunpack.c.h.b16 %v522
        %v542 = vunpack.c.l.b16 %v523
        %v543 = vunpack.c.h.b16 %v523
        %v544 = vunpack.c.l.b16 %v524
        %v545 = vunpack.c.h.b16 %v524
        %v546 = vunpack.c.l.b16 %v525
        %v547 = vunpack.c.h.b16 %v525
        %v548 = vunpack.c.l.b16 %v526
        %v549 = vunpack.c.h.b16 %v526
        %v550 = vunpack.c.l.b16 %v527
        %v551 = vunpack.c.h.b16 %v527
        %v552 = vpack.c.b16 %v536, %v536
        %v553 = vpack.c.b16 %v537, %v537
        %v554 = vpack.c.b16 %v538, %v538
        %v555 = vpack.c.b16 %v539, %v539
        %v556 = vpack.c.b16 %v540, %v540
        %v557 = vpack.c.b16 %v541, %v541
        %v558 = vpack.c.b16 %v542, %v542
        %v559 = vpack.c.b16 %v543, %v543
        %v560 = vpack.c.b16 %v544, %v544
        %v561 = vpack.c.b16 %v545, %v545
        %v562 = vpack.c.b16 %v546, %v546
        %v563 = vpack.c.b16 %v547, %v547
        %v564 = vpack.c.b16 %v548, %v548
        %v565 = vpack.c.b16 %v549, %v549
        %v566 = vpack.c.b16 %v550, %v550
        %v567 = vpack.c.b16 %v551, %v551
        %s584 = smul.u32 %s23, 16
        %s585 = smul.addr %s584, 4
        %s586 = scalar_lea.vmem [#allocation2], %s585
        %vm587 = vcmask 257024
        %588 = vst.msk [vmem:[%s586] sm:$0xf] %vm587, %v552
        %589 = vst.msk [vmem:[%s586 + $0x4] sm:$0xf] %vm587, %v553
        %590 = vst.msk [vmem:[%s586 + $0x8] sm:$0xf] %vm587, %v554
        %591 = vst.msk [vmem:[%s586 + $0xc] sm:$0xf] %vm587, %v555
        %592 = vst.msk [vmem:[%s586 + $0x10] sm:$0xf] %vm587, %v556
        %593 = vst.msk [vmem:[%s586 + $0x14] sm:$0xf] %vm587, %v557
        %594 = vst.msk [vmem:[%s586 + $0x18] sm:$0xf] %vm587, %v558
        %595 = vst.msk [vmem:[%s586 + $0x1c] sm:$0xf] %vm587, %v559
        %596 = vst.msk [vmem:[%s586 + $0x20] sm:$0xf] %vm587, %v560
        %597 = vst.msk [vmem:[%s586 + $0x24] sm:$0xf] %vm587, %v561
        %598 = vst.msk [vmem:[%s586 + $0x28] sm:$0xf] %vm587, %v562
        %599 = vst.msk [vmem:[%s586 + $0x2c] sm:$0xf] %vm587, %v563
        %600 = vst.msk [vmem:[%s586 + $0x30] sm:$0xf] %vm587, %v564
        %601 = vst.msk [vmem:[%s586 + $0x34] sm:$0xf] %vm587, %v565
        %602 = vst.msk [vmem:[%s586 + $0x38] sm:$0xf] %vm587, %v566
        %603 = vst.msk [vmem:[%s586 + $0x3c] sm:$0xf] %vm587, %v567
        %v604 = vld [vmem:[%s291] sm:$0x1]
        %v606 = vlaneseq
        %v607 = vshrl.u32 %v606, 7
        %v608 = vsub.s32 0, %v607
        %v609 = vrot.slane %v604, %v608
        %610 = vrot.lane.b32.xlu0 %v387, 64
        %v611 = vpop.permute.xlu0 %610
        %612 = vrot.lane.b32.xlu0 %v388, 64
        %v613 = vpop.permute.xlu0 %612
        %616 = vrot.lane.b32.xlu0 %v609, 64
        %v617 = vpop.permute.xlu0 %616
        %619 = vmatprep.subr.bf16.mxu0 0
        %620 = vmatpush1.bf16.msra.mxu0 0
        %621 = vmatprep.subr.bf16.mxu0 0
        %622 = vmatpush1.bf16.msra.mxu0 0
        %623 = vmatprep.subr.bf16.mxu0 0
        %624 = vmatpush1.bf16.msra.mxu0 0
        %625 = vmatprep.subr.bf16.mxu0 0
        %626 = vmatpush1.bf16.msra.mxu0 0
        %627 = vmatprep.subr.bf16.mxu0 0
        %628 = vmatpush1.bf16.msra.mxu0 0
        %629 = vmatprep.subr.bf16.mxu0 0
        %630 = vmatpush1.bf16.msra.mxu0 0
        %631 = vmatprep.subr.bf16.mxu0 0
        %632 = vmatpush1.bf16.msra.mxu0 %v613
        %633 = vmatprep.subr.bf16.mxu0 0
        %634 = vmatpush1.bf16.msra.mxu0 %v611
        %635 = vmatprep.subr.bf16.mxu0 0
        %636 = vmatpush2.bf16.msra.mxu0 0
        %637 = vmatprep.subr.bf16.mxu0 0
        %638 = vmatpush2.bf16.msra.mxu0 0
        %639 = vmatprep.subr.bf16.mxu0 0
        %640 = vmatpush2.bf16.msra.mxu0 0
        %641 = vmatprep.subr.bf16.mxu0 0
        %642 = vmatpush2.bf16.msra.mxu0 0
        %643 = vmatprep.subr.bf16.mxu0 0
        %644 = vmatpush2.bf16.msra.mxu0 0
        %645 = vmatprep.subr.bf16.mxu0 0
        %646 = vmatpush2.bf16.msra.mxu0 0
        %647 = vmatprep.subr.bf16.mxu0 0
        %648 = vmatpush2.bf16.msra.mxu0 0
        %649 = vmatprep.subr.bf16.mxu0 0
        %650 = vmatpush2.bf16.msra.mxu0 0
        %651 = vmatprep.mubr.bf16.mxu0 0
        %652 = vmatmul.mubr.bf16.gmra.mxu0 %v400
        %v653 = vpop.f32.mrf.mxu0
        %v654 = vadd.f32 %v617, %v653
        %v655 = vpop.f32.mrf.mxu0
        %v656 = vpop.f32.mrf.mxu0
        %v657 = vadd.f32 %v617, %v656
        %v658 = vpop.f32.mrf.mxu0
        %659 = vmatprep.mubr.bf16.mxu0 0
        %660 = vmatmul.mubr.bf16.gmra.mxu0 %v403
        %v661 = vpop.f32.mrf.mxu0
        %v662 = vadd.f32 %v617, %v661
        %v663 = vpop.f32.mrf.mxu0
        %v664 = vpop.f32.mrf.mxu0
        %v665 = vadd.f32 %v617, %v664
        %v666 = vpop.f32.mrf.mxu0
        %667 = vmatprep.mubr.bf16.mxu0 0
        %668 = vmatmul.mubr.bf16.gmra.mxu0 %v406
        %v669 = vpop.f32.mrf.mxu0
        %v670 = vadd.f32 %v617, %v669
        %v671 = vpop.f32.mrf.mxu0
        %v672 = vpop.f32.mrf.mxu0
        %v673 = vadd.f32 %v617, %v672
        %v674 = vpop.f32.mrf.mxu0
        %675 = vmatprep.mubr.bf16.mxu0 0
        %676 = vmatmul.mubr.bf16.gmra.mxu0 %v409
        %v677 = vpop.f32.mrf.mxu0
        %v678 = vadd.f32 %v617, %v677
        %v679 = vpop.f32.mrf.mxu0
        %v680 = vpop.f32.mrf.mxu0
        %v681 = vadd.f32 %v617, %v680
        %v682 = vpop.f32.mrf.mxu0
        %683 = vmatprep.mubr.bf16.mxu0 0
        %684 = vmatmul.mubr.bf16.gmra.mxu0 %v412
        %v685 = vpop.f32.mrf.mxu0
        %v686 = vadd.f32 %v617, %v685
        %v687 = vpop.f32.mrf.mxu0
        %v688 = vpop.f32.mrf.mxu0
        %v689 = vadd.f32 %v617, %v688
        %v690 = vpop.f32.mrf.mxu0
        %691 = vmatprep.mubr.bf16.mxu0 0
        %692 = vmatmul.mubr.bf16.gmra.mxu0 %v415
        %v693 = vpop.f32.mrf.mxu0
        %v694 = vadd.f32 %v617, %v693
        %v695 = vpop.f32.mrf.mxu0
        %v696 = vpop.f32.mrf.mxu0
        %v697 = vadd.f32 %v617, %v696
        %v698 = vpop.f32.mrf.mxu0
        %699 = vmatprep.mubr.bf16.mxu0 0
        %700 = vmatmul.mubr.bf16.gmra.mxu0 %v418
        %v701 = vpop.f32.mrf.mxu0
        %v702 = vadd.f32 %v617, %v701
        %v703 = vpop.f32.mrf.mxu0
        %v704 = vpop.f32.mrf.mxu0
        %v705 = vadd.f32 %v617, %v704
        %v706 = vpop.f32.mrf.mxu0
        %707 = vmatprep.mubr.bf16.mxu0 0
        %708 = vmatmul.mubr.bf16.gmra.mxu0 %v421
        %v709 = vpop.f32.mrf.mxu0
        %v710 = vadd.f32 %v617, %v709
        %v711 = vpop.f32.mrf.mxu0
        %v712 = vpop.f32.mrf.mxu0
        %v713 = vadd.f32 %v617, %v712
        %v714 = vpop.f32.mrf.mxu0
        %715 = vdwg.mxu0
        %v716 = vpack.c.bf16 %v657, %v654
        %v717 = vpack.c.bf16 %v665, %v662
        %v718 = vpack.c.bf16 %v673, %v670
        %v719 = vpack.c.bf16 %v681, %v678
        %v720 = vpack.c.bf16 %v689, %v686
        %v721 = vpack.c.bf16 %v697, %v694
        %v722 = vpack.c.bf16 %v705, %v702
        %v723 = vpack.c.bf16 %v713, %v710
        %v732 = vunpack.c.l.b16 %v716
        %v733 = vunpack.c.h.b16 %v716
        %v734 = vunpack.c.l.b16 %v717
        %v735 = vunpack.c.h.b16 %v717
        %v736 = vunpack.c.l.b16 %v718
        %v737 = vunpack.c.h.b16 %v718
        %v738 = vunpack.c.l.b16 %v719
        %v739 = vunpack.c.h.b16 %v719
        %v740 = vunpack.c.l.b16 %v720
        %v741 = vunpack.c.h.b16 %v720
        %v742 = vunpack.c.l.b16 %v721
        %v743 = vunpack.c.h.b16 %v721
        %v744 = vunpack.c.l.b16 %v722
        %v745 = vunpack.c.h.b16 %v722
        %v746 = vunpack.c.l.b16 %v723
        %v747 = vunpack.c.h.b16 %v723
        %v748 = vpack.c.b16 %v732, %v732
        %v749 = vpack.c.b16 %v733, %v733
        %v750 = vpack.c.b16 %v734, %v734
        %v751 = vpack.c.b16 %v735, %v735
        %v752 = vpack.c.b16 %v736, %v736
        %v753 = vpack.c.b16 %v737, %v737
        %v754 = vpack.c.b16 %v738, %v738
        %v755 = vpack.c.b16 %v739, %v739
        %v756 = vpack.c.b16 %v740, %v740
        %v757 = vpack.c.b16 %v741, %v741
        %v758 = vpack.c.b16 %v742, %v742
        %v759 = vpack.c.b16 %v743, %v743
        %v760 = vpack.c.b16 %v744, %v744
        %v761 = vpack.c.b16 %v745, %v745
        %v762 = vpack.c.b16 %v746, %v746
        %v763 = vpack.c.b16 %v747, %v747
        %s780 = smul.addr %s584, 4
        %s781 = scalar_lea.vmem [#allocation3], %s780
        %782 = vst.msk [vmem:[%s781] sm:$0xf] %vm587, %v748
        %783 = vst.msk [vmem:[%s781 + $0x4] sm:$0xf] %vm587, %v749
        %784 = vst.msk [vmem:[%s781 + $0x8] sm:$0xf] %vm587, %v750
        %785 = vst.msk [vmem:[%s781 + $0xc] sm:$0xf] %vm587, %v751
        %786 = vst.msk [vmem:[%s781 + $0x10] sm:$0xf] %vm587, %v752
        %787 = vst.msk [vmem:[%s781 + $0x14] sm:$0xf] %vm587, %v753
        %788 = vst.msk [vmem:[%s781 + $0x18] sm:$0xf] %vm587, %v754
        %789 = vst.msk [vmem:[%s781 + $0x1c] sm:$0xf] %vm587, %v755
        %790 = vst.msk [vmem:[%s781 + $0x20] sm:$0xf] %vm587, %v756
        %791 = vst.msk [vmem:[%s781 + $0x24] sm:$0xf] %vm587, %v757
        %792 = vst.msk [vmem:[%s781 + $0x28] sm:$0xf] %vm587, %v758
        %793 = vst.msk [vmem:[%s781 + $0x2c] sm:$0xf] %vm587, %v759
        %794 = vst.msk [vmem:[%s781 + $0x30] sm:$0xf] %vm587, %v760
        %795 = vst.msk [vmem:[%s781 + $0x34] sm:$0xf] %vm587, %v761
        %796 = vst.msk [vmem:[%s781 + $0x38] sm:$0xf] %vm587, %v762
        %797 = vst.msk [vmem:[%s781 + $0x3c] sm:$0xf] %vm587, %v763
      $region44: #{tpu_custom_call.1} parent=39 // pred_fallthru
        _
      %s798 = smul.u32 %s22, 128
      %s799 = sshra.s32 %s798, 3
      %s800 = sand.u32 %s798, 7
      %s801 = smul.addr %s799, 4
      %s802 = scalar_lea.vmem %s284, %s801
      %v803 = vld [vmem:[%s802] sm:$0xf]
      %v804 = vld [vmem:[%s802 + $0x4] sm:$0xf]
      %v805 = vld [vmem:[%s802 + $0x8] sm:$0xf]
      %v806 = vld [vmem:[%s802 + $0xc] sm:$0xf]
      %v807 = vld [vmem:[%s802 + $0x10] sm:$0xf]
      %v808 = vld [vmem:[%s802 + $0x14] sm:$0xf]
      %v809 = vld [vmem:[%s802 + $0x18] sm:$0xf]
      %v810 = vld [vmem:[%s802 + $0x1c] sm:$0xf]
      %v811 = vld [vmem:[%s802 + $0x20] sm:$0xf]
      %v812 = vld [vmem:[%s802 + $0x24] sm:$0xf]
      %v813 = vld [vmem:[%s802 + $0x28] sm:$0xf]
      %v814 = vld [vmem:[%s802 + $0x2c] sm:$0xf]
      %v815 = vld [vmem:[%s802 + $0x30] sm:$0xf]
      %v816 = vld [vmem:[%s802 + $0x34] sm:$0xf]
      %v817 = vld [vmem:[%s802 + $0x38] sm:$0xf]
      %v818 = vld [vmem:[%s802 + $0x3c] sm:$0xf]
      %v819 = vld [vmem:[%s288] sm:$0xf]
      %v820 = vld [vmem:[%s288 + $0x4] sm:$0xf]
      %v821 = vld [vmem:[%s288 + $0x8] sm:$0xf]
      %v822 = vld [vmem:[%s288 + $0xc] sm:$0xf]
      %v823 = vld [vmem:[%s291] sm:$0x1]
      %v825 = vlaneseq
      %v826 = vshrl.u32 %v825, 7
      %v827 = vsub.s32 0, %v826
      %v828 = vrot.slane %v823, %v827
      %v846 = vunpack.c.l.b16 %v803
      %v847 = vunpack.c.l.b16 %v804
      %v848 = vunpack.c.l.b16 %v805
      %v849 = vunpack.c.l.b16 %v806
      %v850 = vunpack.c.l.b16 %v807
      %v851 = vunpack.c.l.b16 %v808
      %v852 = vunpack.c.l.b16 %v809
      %v853 = vunpack.c.l.b16 %v810
      %v854 = vunpack.c.l.b16 %v811
      %v855 = vunpack.c.l.b16 %v812
      %v856 = vunpack.c.l.b16 %v813
      %v857 = vunpack.c.l.b16 %v814
      %v858 = vunpack.c.l.b16 %v815
      %v859 = vunpack.c.l.b16 %v816
      %v860 = vunpack.c.l.b16 %v817
      %v861 = vunpack.c.l.b16 %v818
      %v862 = vpack.c.b16 %v847, %v846
      %v863 = vpack.c.b16 %v849, %v848
      %v864 = vpack.c.b16 %v851, %v850
      %v865 = vpack.c.b16 %v853, %v852
      %v866 = vpack.c.b16 %v855, %v854
      %v867 = vpack.c.b16 %v857, %v856
      %v868 = vpack.c.b16 %v859, %v858
      %v869 = vpack.c.b16 %v861, %v860
      %v874 = vunpack.c.l.b16 %v819
      %v875 = vunpack.c.l.b16 %v820
      %v876 = vunpack.c.l.b16 %v821
      %v877 = vunpack.c.l.b16 %v822
      %v878 = vpack.c.b16 %v875, %v874
      %v879 = vpack.c.b16 %v877, %v876
      %vm882 = vcmask 261120
      %v884 = vsel %vm882, %v862, 0
      %v887 = vsel %vm882, %v863, 0
      %v890 = vsel %vm882, %v864, 0
      %v893 = vsel %vm882, %v865, 0
      %v896 = vsel %vm882, %v866, 0
      %v899 = vsel %vm882, %v867, 0
      %v902 = vsel %vm882, %v868, 0
      %v905 = vsel %vm882, %v869, 0
      %907 = vmatprep.subr.bf16.mxu0 0
      %908 = vmatpush1.bf16.msra.mxu0 0
      %909 = vmatprep.subr.bf16.mxu0 0
      %910 = vmatpush1.bf16.msra.mxu0 0
      %911 = vmatprep.subr.bf16.mxu0 0
      %912 = vmatpush1.bf16.msra.mxu0 0
      %913 = vmatprep.subr.bf16.mxu0 0
      %914 = vmatpush1.bf16.msra.mxu0 0
      %915 = vmatprep.subr.bf16.mxu0 0
      %916 = vmatpush1.bf16.msra.mxu0 0
      %917 = vmatprep.subr.bf16.mxu0 0
      %918 = vmatpush1.bf16.msra.mxu0 0
      %919 = vmatprep.subr.bf16.mxu0 0
      %920 = vmatpush1.bf16.msra.mxu0 %v879
      %921 = vmatprep.subr.bf16.mxu0 0
      %922 = vmatpush1.bf16.msra.mxu0 %v878
      %923 = vmatprep.subr.bf16.mxu0 0
      %924 = vmatpush2.bf16.msra.mxu0 0
      %925 = vmatprep.subr.bf16.mxu0 0
      %926 = vmatpush2.bf16.msra.mxu0 0
      %927 = vmatprep.subr.bf16.mxu0 0
      %928 = vmatpush2.bf16.msra.mxu0 0
      %929 = vmatprep.subr.bf16.mxu0 0
      %930 = vmatpush2.bf16.msra.mxu0 0
      %931 = vmatprep.subr.bf16.mxu0 0
      %932 = vmatpush2.bf16.msra.mxu0 0
      %933 = vmatprep.subr.bf16.mxu0 0
      %934 = vmatpush2.bf16.msra.mxu0 0
      %935 = vmatprep.subr.bf16.mxu0 0
      %936 = vmatpush2.bf16.msra.mxu0 0
      %937 = vmatprep.subr.bf16.mxu0 0
      %938 = vmatpush2.bf16.msra.mxu0 0
      %939 = vmatprep.mubr.bf16.mxu0 0
      %940 = vmatmul.mubr.bf16.gmra.mxu0 %v884
      %v941 = vpop.f32.mrf.mxu0
      %v942 = vadd.f32 %v828, %v941
      %v943 = vpop.f32.mrf.mxu0
      %v944 = vpop.f32.mrf.mxu0
      %v945 = vadd.f32 %v828, %v944
      %v946 = vpop.f32.mrf.mxu0
      %947 = vmatprep.mubr.bf16.mxu0 0
      %948 = vmatmul.mubr.bf16.gmra.mxu0 %v887
      %v949 = vpop.f32.mrf.mxu0
      %v950 = vadd.f32 %v828, %v949
      %v951 = vpop.f32.mrf.mxu0
      %v952 = vpop.f32.mrf.mxu0
      %v953 = vadd.f32 %v828, %v952
      %v954 = vpop.f32.mrf.mxu0
      %955 = vmatprep.mubr.bf16.mxu0 0
      %956 = vmatmul.mubr.bf16.gmra.mxu0 %v890
      %v957 = vpop.f32.mrf.mxu0
      %v958 = vadd.f32 %v828, %v957
      %v959 = vpop.f32.mrf.mxu0
      %v960 = vpop.f32.mrf.mxu0
      %v961 = vadd.f32 %v828, %v960
      %v962 = vpop.f32.mrf.mxu0
      %963 = vmatprep.mubr.bf16.mxu0 0
      %964 = vmatmul.mubr.bf16.gmra.mxu0 %v893
      %v965 = vpop.f32.mrf.mxu0
      %v966 = vadd.f32 %v828, %v965
      %v967 = vpop.f32.mrf.mxu0
      %v968 = vpop.f32.mrf.mxu0
      %v969 = vadd.f32 %v828, %v968
      %v970 = vpop.f32.mrf.mxu0
      %971 = vmatprep.mubr.bf16.mxu0 0
      %972 = vmatmul.mubr.bf16.gmra.mxu0 %v896
      %v973 = vpop.f32.mrf.mxu0
      %v974 = vadd.f32 %v828, %v973
      %v975 = vpop.f32.mrf.mxu0
      %v976 = vpop.f32.mrf.mxu0
      %v977 = vadd.f32 %v828, %v976
      %v978 = vpop.f32.mrf.mxu0
      %979 = vmatprep.mubr.bf16.mxu0 0
      %980 = vmatmul.mubr.bf16.gmra.mxu0 %v899
      %v981 = vpop.f32.mrf.mxu0
      %v982 = vadd.f32 %v828, %v981
      %v983 = vpop.f32.mrf.mxu0
      %v984 = vpop.f32.mrf.mxu0
      %v985 = vadd.f32 %v828, %v984
      %v986 = vpop.f32.mrf.mxu0
      %987 = vmatprep.mubr.bf16.mxu0 0
      %988 = vmatmul.mubr.bf16.gmra.mxu0 %v902
      %v989 = vpop.f32.mrf.mxu0
      %v990 = vadd.f32 %v828, %v989
      %v991 = vpop.f32.mrf.mxu0
      %v992 = vpop.f32.mrf.mxu0
      %v993 = vadd.f32 %v828, %v992
      %v994 = vpop.f32.mrf.mxu0
      %995 = vmatprep.mubr.bf16.mxu0 0
      %996 = vmatmul.mubr.bf16.gmra.mxu0 %v905
      %v997 = vpop.f32.mrf.mxu0
      %v998 = vadd.f32 %v828, %v997
      %v999 = vpop.f32.mrf.mxu0
      %v1000 = vpop.f32.mrf.mxu0
      %v1001 = vadd.f32 %v828, %v1000
      %v1002 = vpop.f32.mrf.mxu0
      %1003 = vdwg.mxu0
      %v1004 = vpack.c.bf16 %v945, %v942
      %v1005 = vpack.c.bf16 %v953, %v950
      %v1006 = vpack.c.bf16 %v961, %v958
      %v1007 = vpack.c.bf16 %v969, %v966
      %v1008 = vpack.c.bf16 %v977, %v974
      %v1009 = vpack.c.bf16 %v985, %v982
      %v1010 = vpack.c.bf16 %v993, %v990
      %v1011 = vpack.c.bf16 %v1001, %v998
      %s1012 = smul.u32 %s23, 16
      %s1013 = smul.addr %s1012, 4
      %s1014 = scalar_lea.vmem [#allocation2], %s1013
      %v1015 = vld [vmem:[%s1014] sm:$0xf]
      %v1016 = vld [vmem:[%s1014 + $0x4] sm:$0xf]
      %v1017 = vld [vmem:[%s1014 + $0x8] sm:$0xf]
      %v1018 = vld [vmem:[%s1014 + $0xc] sm:$0xf]
      %v1019 = vld [vmem:[%s1014 + $0x10] sm:$0xf]
      %v1020 = vld [vmem:[%s1014 + $0x14] sm:$0xf]
      %v1021 = vld [vmem:[%s1014 + $0x18] sm:$0xf]
      %v1022 = vld [vmem:[%s1014 + $0x1c] sm:$0xf]
      %v1023 = vld [vmem:[%s1014 + $0x20] sm:$0xf]
      %v1024 = vld [vmem:[%s1014 + $0x24] sm:$0xf]
      %v1025 = vld [vmem:[%s1014 + $0x28] sm:$0xf]
      %v1026 = vld [vmem:[%s1014 + $0x2c] sm:$0xf]
      %v1027 = vld [vmem:[%s1014 + $0x30] sm:$0xf]
      %v1028 = vld [vmem:[%s1014 + $0x34] sm:$0xf]
      %v1029 = vld [vmem:[%s1014 + $0x38] sm:$0xf]
      %v1030 = vld [vmem:[%s1014 + $0x3c] sm:$0xf]
      %s1031 = smul.addr %s1012, 4
      %s1032 = scalar_lea.vmem [#allocation3], %s1031
      %v1033 = vld [vmem:[%s1032] sm:$0xf]
      %v1034 = vld [vmem:[%s1032 + $0x4] sm:$0xf]
      %v1035 = vld [vmem:[%s1032 + $0x8] sm:$0xf]
      %v1036 = vld [vmem:[%s1032 + $0xc] sm:$0xf]
      %v1037 = vld [vmem:[%s1032 + $0x10] sm:$0xf]
      %v1038 = vld [vmem:[%s1032 + $0x14] sm:$0xf]
      %v1039 = vld [vmem:[%s1032 + $0x18] sm:$0xf]
      %v1040 = vld [vmem:[%s1032 + $0x1c] sm:$0xf]
      %v1041 = vld [vmem:[%s1032 + $0x20] sm:$0xf]
      %v1042 = vld [vmem:[%s1032 + $0x24] sm:$0xf]
      %v1043 = vld [vmem:[%s1032 + $0x28] sm:$0xf]
      %v1044 = vld [vmem:[%s1032 + $0x2c] sm:$0xf]
      %v1045 = vld [vmem:[%s1032 + $0x30] sm:$0xf]
      %v1046 = vld [vmem:[%s1032 + $0x34] sm:$0xf]
      %v1047 = vld [vmem:[%s1032 + $0x38] sm:$0xf]
      %v1048 = vld [vmem:[%s1032 + $0x3c] sm:$0xf]
      %v1049 = vlaneseq
      %v1050 = vand.u32 %v1049, 127
      %vm1051 = vcmp.lt.s32.totalorder %v1050, 16
      %v1068 = vunpack.c.l.b16 %v1015
      %v1069 = vunpack.c.l.b16 %v1016
      %v1070 = vunpack.c.l.b16 %v1017
      %v1071 = vunpack.c.l.b16 %v1018
      %v1072 = vunpack.c.l.b16 %v1019
      %v1073 = vunpack.c.l.b16 %v1020
      %v1074 = vunpack.c.l.b16 %v1021
      %v1075 = vunpack.c.l.b16 %v1022
      %v1076 = vunpack.c.l.b16 %v1023
      %v1077 = vunpack.c.l.b16 %v1024
      %v1078 = vunpack.c.l.b16 %v1025
      %v1079 = vunpack.c.l.b16 %v1026
      %v1080 = vunpack.c.l.b16 %v1027
      %v1081 = vunpack.c.l.b16 %v1028
      %v1082 = vunpack.c.l.b16 %v1029
      %v1083 = vunpack.c.l.b16 %v1030
      %v1084 = vpack.c.b16 %v1069, %v1068
      %v1085 = vpack.c.b16 %v1071, %v1070
      %v1086 = vpack.c.b16 %v1073, %v1072
      %v1087 = vpack.c.b16 %v1075, %v1074
      %v1088 = vpack.c.b16 %v1077, %v1076
      %v1089 = vpack.c.b16 %v1079, %v1078
      %v1090 = vpack.c.b16 %v1081, %v1080
      %v1091 = vpack.c.b16 %v1083, %v1082
      %vm1092 = vcmask 64512
      %v1094 = vsel %vm1092, %v1004, 0
      %v1097 = vsel %vm1092, %v1005, 0
      %v1100 = vsel %vm1092, %v1006, 0
      %v1103 = vsel %vm1092, %v1007, 0
      %v1106 = vsel %vm1092, %v1008, 0
      %v1109 = vsel %vm1092, %v1009, 0
      %v1112 = vsel %vm1092, %v1010, 0
      %v1115 = vsel %vm1092, %v1011, 0
      %v1118 = vsel %vm1092, %v1084, 0
      %v1121 = vsel %vm1092, %v1085, 0
      %v1124 = vsel %vm1092, %v1086, 0
      %v1127 = vsel %vm1092, %v1087, 0
      %v1130 = vsel %vm1092, %v1088, 0
      %v1133 = vsel %vm1092, %v1089, 0
      %v1136 = vsel %vm1092, %v1090, 0
      %v1139 = vsel %vm1092, %v1091, 0
      %1141 = vmatprep.subr.bf16.mxu0 0
      %1142 = vmatpush1.bf16.xpose.msra.mxu0 %v1139
      %1143 = vmatprep.subr.bf16.mxu0 0
      %1144 = vmatpush1.bf16.xpose.msra.mxu0 %v1136
      %1145 = vmatprep.subr.bf16.mxu0 0
      %1146 = vmatpush1.bf16.xpose.msra.mxu0 %v1133
      %1147 = vmatprep.subr.bf16.mxu0 0
      %1148 = vmatpush1.bf16.xpose.msra.mxu0 %v1130
      %1149 = vmatprep.subr.bf16.mxu0 0
      %1150 = vmatpush1.bf16.xpose.msra.mxu0 %v1127
      %1151 = vmatprep.subr.bf16.mxu0 0
      %1152 = vmatpush1.bf16.xpose.msra.mxu0 %v1124
      %1153 = vmatprep.subr.bf16.mxu0 0
      %1154 = vmatpush1.bf16.xpose.msra.mxu0 %v1121
      %1155 = vmatprep.subr.bf16.mxu0 0
      %1156 = vmatpush1.bf16.xpose.msra.mxu0 %v1118
      %1157 = vmatprep.subr.bf16.mxu0 0
      %1158 = vmatpush2.bf16.xpose.msra.mxu0 0
      %1159 = vmatprep.subr.bf16.mxu0 0
      %1160 = vmatpush2.bf16.xpose.msra.mxu0 0
      %1161 = vmatprep.subr.bf16.mxu0 0
      %1162 = vmatpush2.bf16.xpose.msra.mxu0 0
      %1163 = vmatprep.subr.bf16.mxu0 0
      %1164 = vmatpush2.bf16.xpose.msra.mxu0 0
      %1165 = vmatprep.subr.bf16.mxu0 0
      %1166 = vmatpush2.bf16.xpose.msra.mxu0 0
      %1167 = vmatprep.subr.bf16.mxu0 0
      %1168 = vmatpush2.bf16.xpose.msra.mxu0 0
      %1169 = vmatprep.subr.bf16.mxu0 0
      %1170 = vmatpush2.bf16.xpose.msra.mxu0 0
      %1171 = vmatprep.subr.bf16.mxu0 0
      %1172 = vmatpush2.bf16.xpose.msra.mxu0 0
      %1173 = vmatprep.mubr.bf16.mxu0 0
      %1174 = vmatmul.mubr.bf16.gmra.mxu0 %v1094
      %v1175 = vpop.f32.mrf.mxu0
      %v1176 = vadd.f32 0.0, %v1175
      %v1177 = vpop.f32.mrf.mxu0
      %v1178 = vpop.f32.mrf.mxu0
      %v1179 = vadd.f32 0.0, %v1178
      %v1180 = vpop.f32.mrf.mxu0
      %1181 = vmatprep.mubr.bf16.mxu0 0
      %1182 = vmatmul.mubr.bf16.gmra.mxu0 %v1097
      %v1183 = vpop.f32.mrf.mxu0
      %v1184 = vadd.f32 0.0, %v1183
      %v1185 = vpop.f32.mrf.mxu0
      %v1186 = vpop.f32.mrf.mxu0
      %v1187 = vadd.f32 0.0, %v1186
      %v1188 = vpop.f32.mrf.mxu0
      %1189 = vmatprep.mubr.bf16.mxu0 0
      %1190 = vmatmul.mubr.bf16.gmra.mxu0 %v1100
      %v1191 = vpop.f32.mrf.mxu0
      %v1192 = vadd.f32 0.0, %v1191
      %v1193 = vpop.f32.mrf.mxu0
      %v1194 = vpop.f32.mrf.mxu0
      %v1195 = vadd.f32 0.0, %v1194
      %v1196 = vpop.f32.mrf.mxu0
      %1197 = vmatprep.mubr.bf16.mxu0 0
      %1198 = vmatmul.mubr.bf16.gmra.mxu0 %v1103
      %v1199 = vpop.f32.mrf.mxu0
      %v1200 = vadd.f32 0.0, %v1199
      %v1201 = vpop.f32.mrf.mxu0
      %v1202 = vpop.f32.mrf.mxu0
      %v1203 = vadd.f32 0.0, %v1202
      %v1204 = vpop.f32.mrf.mxu0
      %1205 = vmatprep.mubr.bf16.mxu0 0
      %1206 = vmatmul.mubr.bf16.gmra.mxu0 %v1106
      %v1207 = vpop.f32.mrf.mxu0
      %v1208 = vadd.f32 0.0, %v1207
      %v1209 = vpop.f32.mrf.mxu0
      %v1210 = vpop.f32.mrf.mxu0
      %v1211 = vadd.f32 0.0, %v1210
      %v1212 = vpop.f32.mrf.mxu0
      %1213 = vmatprep.mubr.bf16.mxu0 0
      %1214 = vmatmul.mubr.bf16.gmra.mxu0 %v1109
      %v1215 = vpop.f32.mrf.mxu0
      %v1216 = vadd.f32 0.0, %v1215
      %v1217 = vpop.f32.mrf.mxu0
      %v1218 = vpop.f32.mrf.mxu0
      %v1219 = vadd.f32 0.0, %v1218
      %v1220 = vpop.f32.mrf.mxu0
      %1221 = vmatprep.mubr.bf16.mxu0 0
      %1222 = vmatmul.mubr.bf16.gmra.mxu0 %v1112
      %v1223 = vpop.f32.mrf.mxu0
      %v1224 = vadd.f32 0.0, %v1223
      %v1225 = vpop.f32.mrf.mxu0
      %v1226 = vpop.f32.mrf.mxu0
      %v1227 = vadd.f32 0.0, %v1226
      %v1228 = vpop.f32.mrf.mxu0
      %1229 = vmatprep.mubr.bf16.mxu0 0
      %1230 = vmatmul.mubr.bf16.gmra.mxu0 %v1115
      %v1231 = vpop.f32.mrf.mxu0
      %v1232 = vadd.f32 0.0, %v1231
      %v1233 = vpop.f32.mrf.mxu0
      %v1234 = vpop.f32.mrf.mxu0
      %v1235 = vadd.f32 0.0, %v1234
      %v1236 = vpop.f32.mrf.mxu0
      %1237 = vdwg.mxu0
      %v1238 = vmul.f32 %v1176, 0.35355338
      %v1239 = vmul.f32 %v1179, 0.35355338
      %v1240 = vmul.f32 %v1184, 0.35355338
      %v1241 = vmul.f32 %v1187, 0.35355338
      %v1242 = vmul.f32 %v1192, 0.35355338
      %v1243 = vmul.f32 %v1195, 0.35355338
      %v1244 = vmul.f32 %v1200, 0.35355338
      %v1245 = vmul.f32 %v1203, 0.35355338
      %v1246 = vmul.f32 %v1208, 0.35355338
      %v1247 = vmul.f32 %v1211, 0.35355338
      %v1248 = vmul.f32 %v1216, 0.35355338
      %v1249 = vmul.f32 %v1219, 0.35355338
      %v1250 = vmul.f32 %v1224, 0.35355338
      %v1251 = vmul.f32 %v1227, 0.35355338
      %v1252 = vmul.f32 %v1232, 0.35355338
      %v1253 = vmul.f32 %v1235, 0.35355338
      %v1254 = vsel %vm1051, 1, 0
      %vm1255 = vcmp.eq.s32.totalorder %v1254, 1
      %v1256 = vsel %vm1255, %v1238, -1e+30
      %v1257 = vsel %vm1255, %v1239, -1e+30
      %v1258 = vsel %vm1255, %v1240, -1e+30
      %v1259 = vsel %vm1255, %v1241, -1e+30
      %v1260 = vsel %vm1255, %v1242, -1e+30
      %v1261 = vsel %vm1255, %v1243, -1e+30
      %v1262 = vsel %vm1255, %v1244, -1e+30
      %v1263 = vsel %vm1255, %v1245, -1e+30
      %v1264 = vsel %vm1255, %v1246, -1e+30
      %v1265 = vsel %vm1255, %v1247, -1e+30
      %v1266 = vsel %vm1255, %v1248, -1e+30
      %v1267 = vsel %vm1255, %v1249, -1e+30
      %v1268 = vsel %vm1255, %v1250, -1e+30
      %v1269 = vsel %vm1255, %v1251, -1e+30
      %v1270 = vsel %vm1255, %v1252, -1e+30
      %v1271 = vsel %vm1255, %v1253, -1e+30
      %1272 = vmax.xlane.f32.xlu0 %v1256
      %v1273 = vpop.xlane.xlu0 %1272
      %1274 = vmax.xlane.f32.xlu0 %v1257
      %v1275 = vpop.xlane.xlu0 %1274
      %1276 = vmax.xlane.f32.xlu0 %v1258
      %v1277 = vpop.xlane.xlu0 %1276
      %1278 = vmax.xlane.f32.xlu0 %v1259
      %v1279 = vpop.xlane.xlu0 %1278
      %1280 = vmax.xlane.f32.xlu0 %v1260
      %v1281 = vpop.xlane.xlu0 %1280
      %1282 = vmax.xlane.f32.xlu0 %v1261
      %v1283 = vpop.xlane.xlu0 %1282
      %1284 = vmax.xlane.f32.xlu0 %v1262
      %v1285 = vpop.xlane.xlu0 %1284
      %1286 = vmax.xlane.f32.xlu0 %v1263
      %v1287 = vpop.xlane.xlu0 %1286
      %1288 = vmax.xlane.f32.xlu0 %v1264
      %v1289 = vpop.xlane.xlu0 %1288
      %1290 = vmax.xlane.f32.xlu0 %v1265
      %v1291 = vpop.xlane.xlu0 %1290
      %1292 = vmax.xlane.f32.xlu0 %v1266
      %v1293 = vpop.xlane.xlu0 %1292
      %1294 = vmax.xlane.f32.xlu0 %v1267
      %v1295 = vpop.xlane.xlu0 %1294
      %1296 = vmax.xlane.f32.xlu0 %v1268
      %v1297 = vpop.xlane.xlu0 %1296
      %1298 = vmax.xlane.f32.xlu0 %v1269
      %v1299 = vpop.xlane.xlu0 %1298
      %1300 = vmax.xlane.f32.xlu0 %v1270
      %v1301 = vpop.xlane.xlu0 %1300
      %1302 = vmax.xlane.f32.xlu0 %v1271
      %v1303 = vpop.xlane.xlu0 %1302
      %v1304 = vsub.f32 %v1256, %v1273
      %v1305 = vsub.f32 %v1257, %v1275
      %v1306 = vsub.f32 %v1258, %v1277
      %v1307 = vsub.f32 %v1259, %v1279
      %v1308 = vsub.f32 %v1260, %v1281
      %v1309 = vsub.f32 %v1261, %v1283
      %v1310 = vsub.f32 %v1262, %v1285
      %v1311 = vsub.f32 %v1263, %v1287
      %v1312 = vsub.f32 %v1264, %v1289
      %v1313 = vsub.f32 %v1265, %v1291
      %v1314 = vsub.f32 %v1266, %v1293
      %v1315 = vsub.f32 %v1267, %v1295
      %v1316 = vsub.f32 %v1268, %v1297
      %v1317 = vsub.f32 %v1269, %v1299
      %v1318 = vsub.f32 %v1270, %v1301
      %v1319 = vsub.f32 %v1271, %v1303
      %v1320 = vmul.f32 %v1304, 1.442695
      %v1321 = vpow.pop %v1320
      %v1322 = vmul.f32 %v1305, 1.442695
      %v1323 = vpow.pop %v1322
      %v1324 = vmul.f32 %v1306, 1.442695
      %v1325 = vpow.pop %v1324
      %v1326 = vmul.f32 %v1307, 1.442695
      %v1327 = vpow.pop %v1326
      %v1328 = vmul.f32 %v1308, 1.442695
      %v1329 = vpow.pop %v1328
      %v1330 = vmul.f32 %v1309, 1.442695
      %v1331 = vpow.pop %v1330
      %v1332 = vmul.f32 %v1310, 1.442695
      %v1333 = vpow.pop %v1332
      %v1334 = vmul.f32 %v1311, 1.442695
      %v1335 = vpow.pop %v1334
      %v1336 = vmul.f32 %v1312, 1.442695
      %v1337 = vpow.pop %v1336
      %v1338 = vmul.f32 %v1313, 1.442695
      %v1339 = vpow.pop %v1338
      %v1340 = vmul.f32 %v1314, 1.442695
      %v1341 = vpow.pop %v1340
      %v1342 = vmul.f32 %v1315, 1.442695
      %v1343 = vpow.pop %v1342
      %v1344 = vmul.f32 %v1316, 1.442695
      %v1345 = vpow.pop %v1344
      %v1346 = vmul.f32 %v1317, 1.442695
      %v1347 = vpow.pop %v1346
      %v1348 = vmul.f32 %v1318, 1.442695
      %v1349 = vpow.pop %v1348
      %v1350 = vmul.f32 %v1319, 1.442695
      %v1351 = vpow.pop %v1350
      %1352 = vadd.xlane.f32.xlu0 %v1321
      %v1353 = vpop.xlane.xlu0 %1352
      %1354 = vadd.xlane.f32.xlu0 %v1323
      %v1355 = vpop.xlane.xlu0 %1354
      %1356 = vadd.xlane.f32.xlu0 %v1325
      %v1357 = vpop.xlane.xlu0 %1356
      %1358 = vadd.xlane.f32.xlu0 %v1327
      %v1359 = vpop.xlane.xlu0 %1358
      %1360 = vadd.xlane.f32.xlu0 %v1329
      %v1361 = vpop.xlane.xlu0 %1360
      %1362 = vadd.xlane.f32.xlu0 %v1331
      %v1363 = vpop.xlane.xlu0 %1362
      %1364 = vadd.xlane.f32.xlu0 %v1333
      %v1365 = vpop.xlane.xlu0 %1364
      %1366 = vadd.xlane.f32.xlu0 %v1335
      %v1367 = vpop.xlane.xlu0 %1366
      %1368 = vadd.xlane.f32.xlu0 %v1337
      %v1369 = vpop.xlane.xlu0 %1368
      %1370 = vadd.xlane.f32.xlu0 %v1339
      %v1371 = vpop.xlane.xlu0 %1370
      %1372 = vadd.xlane.f32.xlu0 %v1341
      %v1373 = vpop.xlane.xlu0 %1372
      %1374 = vadd.xlane.f32.xlu0 %v1343
      %v1375 = vpop.xlane.xlu0 %1374
      %1376 = vadd.xlane.f32.xlu0 %v1345
      %v1377 = vpop.xlane.xlu0 %1376
      %1378 = vadd.xlane.f32.xlu0 %v1347
      %v1379 = vpop.xlane.xlu0 %1378
      %1380 = vadd.xlane.f32.xlu0 %v1349
      %v1381 = vpop.xlane.xlu0 %1380
      %1382 = vadd.xlane.f32.xlu0 %v1351
      %v1383 = vpop.xlane.xlu0 %1382
      %v1384 = vpack.c.bf16 %v1323, %v1321
      %v1385 = vpack.c.bf16 %v1327, %v1325
      %v1386 = vpack.c.bf16 %v1331, %v1329
      %v1387 = vpack.c.bf16 %v1335, %v1333
      %v1388 = vpack.c.bf16 %v1339, %v1337
      %v1389 = vpack.c.bf16 %v1343, %v1341
      %v1390 = vpack.c.bf16 %v1347, %v1345
      %v1391 = vpack.c.bf16 %v1351, %v1349
      %v1408 = vunpack.c.l.b16 %v1033
      %v1409 = vunpack.c.l.b16 %v1034
      %v1410 = vunpack.c.l.b16 %v1035
      %v1411 = vunpack.c.l.b16 %v1036
      %v1412 = vunpack.c.l.b16 %v1037
      %v1413 = vunpack.c.l.b16 %v1038
      %v1414 = vunpack.c.l.b16 %v1039
      %v1415 = vunpack.c.l.b16 %v1040
      %v1416 = vunpack.c.l.b16 %v1041
      %v1417 = vunpack.c.l.b16 %v1042
      %v1418 = vunpack.c.l.b16 %v1043
      %v1419 = vunpack.c.l.b16 %v1044
      %v1420 = vunpack.c.l.b16 %v1045
      %v1421 = vunpack.c.l.b16 %v1046
      %v1422 = vunpack.c.l.b16 %v1047
      %v1423 = vunpack.c.l.b16 %v1048
      %v1424 = vpack.c.b16 %v1409, %v1408
      %v1425 = vpack.c.b16 %v1411, %v1410
      %v1426 = vpack.c.b16 %v1413, %v1412
      %v1427 = vpack.c.b16 %v1415, %v1414
      %v1428 = vpack.c.b16 %v1417, %v1416
      %v1429 = vpack.c.b16 %v1419, %v1418
      %v1430 = vpack.c.b16 %v1421, %v1420
      %v1431 = vpack.c.b16 %v1423, %v1422
      %1440 = vmatprep.subr.bf16.mxu0 0
      %1441 = vmatpush1.bf16.msra.mxu0 %v1431
      %1442 = vmatprep.subr.bf16.mxu0 0
      %1443 = vmatpush1.bf16.msra.mxu0 %v1430
      %1444 = vmatprep.subr.bf16.mxu0 0
      %1445 = vmatpush1.bf16.msra.mxu0 %v1429
      %1446 = vmatprep.subr.bf16.mxu0 0
      %1447 = vmatpush1.bf16.msra.mxu0 %v1428
      %1448 = vmatprep.subr.bf16.mxu0 0
      %1449 = vmatpush1.bf16.msra.mxu0 %v1427
      %1450 = vmatprep.subr.bf16.mxu0 0
      %1451 = vmatpush1.bf16.msra.mxu0 %v1426
      %1452 = vmatprep.subr.bf16.mxu0 0
      %1453 = vmatpush1.bf16.msra.mxu0 %v1425
      %1454 = vmatprep.subr.bf16.mxu0 0
      %1455 = vmatpush1.bf16.msra.mxu0 %v1424
      %1456 = vmatprep.subr.bf16.mxu0 0
      %1457 = vmatpush2.bf16.msra.mxu0 0
      %1458 = vmatprep.subr.bf16.mxu0 0
      %1459 = vmatpush2.bf16.msra.mxu0 0
      %1460 = vmatprep.subr.bf16.mxu0 0
      %1461 = vmatpush2.bf16.msra.mxu0 0
      %1462 = vmatprep.subr.bf16.mxu0 0
      %1463 = vmatpush2.bf16.msra.mxu0 0
      %1464 = vmatprep.subr.bf16.mxu0 0
      %1465 = vmatpush2.bf16.msra.mxu0 0
      %1466 = vmatprep.subr.bf16.mxu0 0
      %1467 = vmatpush2.bf16.msra.mxu0 0
      %1468 = vmatprep.subr.bf16.mxu0 0
      %1469 = vmatpush2.bf16.msra.mxu0 0
      %1470 = vmatprep.subr.bf16.mxu0 0
      %1471 = vmatpush2.bf16.msra.mxu0 0
      %1472 = vmatprep.mubr.bf16.mxu0 0
      %1473 = vmatmul.mubr.bf16.gmra.mxu0 %v1384
      %v1474 = vpop.f32.mrf.mxu0
      %v1475 = vadd.f32 0.0, %v1474
      %v1476 = vpop.f32.mrf.mxu0
      %v1477 = vpop.f32.mrf.mxu0
      %v1478 = vadd.f32 0.0, %v1477
      %v1479 = vpop.f32.mrf.mxu0
      %1480 = vmatprep.mubr.bf16.mxu0 0
      %1481 = vmatmul.mubr.bf16.gmra.mxu0 %v1385
      %v1482 = vpop.f32.mrf.mxu0
      %v1483 = vadd.f32 0.0, %v1482
      %v1484 = vpop.f32.mrf.mxu0
      %v1485 = vpop.f32.mrf.mxu0
      %v1486 = vadd.f32 0.0, %v1485
      %v1487 = vpop.f32.mrf.mxu0
      %1488 = vmatprep.mubr.bf16.mxu0 0
      %1489 = vmatmul.mubr.bf16.gmra.mxu0 %v1386
      %v1490 = vpop.f32.mrf.mxu0
      %v1491 = vadd.f32 0.0, %v1490
      %v1492 = vpop.f32.mrf.mxu0
      %v1493 = vpop.f32.mrf.mxu0
      %v1494 = vadd.f32 0.0, %v1493
      %v1495 = vpop.f32.mrf.mxu0
      %1496 = vmatprep.mubr.bf16.mxu0 0
      %1497 = vmatmul.mubr.bf16.gmra.mxu0 %v1387
      %v1498 = vpop.f32.mrf.mxu0
      %v1499 = vadd.f32 0.0, %v1498
      %v1500 = vpop.f32.mrf.mxu0
      %v1501 = vpop.f32.mrf.mxu0
      %v1502 = vadd.f32 0.0, %v1501
      %v1503 = vpop.f32.mrf.mxu0
      %1504 = vmatprep.mubr.bf16.mxu0 0
      %1505 = vmatmul.mubr.bf16.gmra.mxu0 %v1388
      %v1506 = vpop.f32.mrf.mxu0
      %v1507 = vadd.f32 0.0, %v1506
      %v1508 = vpop.f32.mrf.mxu0
      %v1509 = vpop.f32.mrf.mxu0
      %v1510 = vadd.f32 0.0, %v1509
      %v1511 = vpop.f32.mrf.mxu0
      %1512 = vmatprep.mubr.bf16.mxu0 0
      %1513 = vmatmul.mubr.bf16.gmra.mxu0 %v1389
      %v1514 = vpop.f32.mrf.mxu0
      %v1515 = vadd.f32 0.0, %v1514
      %v1516 = vpop.f32.mrf.mxu0
      %v1517 = vpop.f32.mrf.mxu0
      %v1518 = vadd.f32 0.0, %v1517
      %v1519 = vpop.f32.mrf.mxu0
      %1520 = vmatprep.mubr.bf16.mxu0 0
      %1521 = vmatmul.mubr.bf16.gmra.mxu0 %v1390
      %v1522 = vpop.f32.mrf.mxu0
      %v1523 = vadd.f32 0.0, %v1522
      %v1524 = vpop.f32.mrf.mxu0
      %v1525 = vpop.f32.mrf.mxu0
      %v1526 = vadd.f32 0.0, %v1525
      %v1527 = vpop.f32.mrf.mxu0
      %1528 = vmatprep.mubr.bf16.mxu0 0
      %1529 = vmatmul.mubr.bf16.gmra.mxu0 %v1391
      %v1530 = vpop.f32.mrf.mxu0
      %v1531 = vadd.f32 0.0, %v1530
      %v1532 = vpop.f32.mrf.mxu0
      %v1533 = vpop.f32.mrf.mxu0
      %v1534 = vadd.f32 0.0, %v1533
      %v1535 = vpop.f32.mrf.mxu0
      %1536 = vdwg.mxu0
      %v1537 = vrcp.pop %v1353
      %v1538 = vrcp.pop %v1355
      %v1539 = vrcp.pop %v1357
      %v1540 = vrcp.pop %v1359
      %v1541 = vrcp.pop %v1361
      %v1542 = vrcp.pop %v1363
      %v1543 = vrcp.pop %v1365
      %v1544 = vrcp.pop %v1367
      %v1545 = vrcp.pop %v1369
      %v1546 = vrcp.pop %v1371
      %v1547 = vrcp.pop %v1373
      %v1548 = vrcp.pop %v1375
      %v1549 = vrcp.pop %v1377
      %v1550 = vrcp.pop %v1379
      %v1551 = vrcp.pop %v1381
      %v1552 = vrcp.pop %v1383
      %v1553 = vmul.f32 %v1475, %v1537
      %v1554 = vmul.f32 %v1478, %v1538
      %v1555 = vmul.f32 %v1483, %v1539
      %v1556 = vmul.f32 %v1486, %v1540
      %v1557 = vmul.f32 %v1491, %v1541
      %v1558 = vmul.f32 %v1494, %v1542
      %v1559 = vmul.f32 %v1499, %v1543
      %v1560 = vmul.f32 %v1502, %v1544
      %v1561 = vmul.f32 %v1507, %v1545
      %v1562 = vmul.f32 %v1510, %v1546
      %v1563 = vmul.f32 %v1515, %v1547
      %v1564 = vmul.f32 %v1518, %v1548
      %v1565 = vmul.f32 %v1523, %v1549
      %v1566 = vmul.f32 %v1526, %v1550
      %v1567 = vmul.f32 %v1531, %v1551
      %v1568 = vmul.f32 %v1534, %v1552
      %v1569 = vpack.c.bf16 %v1554, %v1553
      %v1570 = vpack.c.bf16 %v1556, %v1555
      %v1571 = vpack.c.bf16 %v1558, %v1557
      %v1572 = vpack.c.bf16 %v1560, %v1559
      %v1573 = vpack.c.bf16 %v1562, %v1561
      %v1574 = vpack.c.bf16 %v1564, %v1563
      %v1575 = vpack.c.bf16 %v1566, %v1565
      %v1576 = vpack.c.bf16 %v1568, %v1567
      %v1585 = vunpack.c.l.b16 %v1569
      %v1586 = vunpack.c.h.b16 %v1569
      %v1587 = vunpack.c.l.b16 %v1570
      %v1588 = vunpack.c.h.b16 %v1570
      %v1589 = vunpack.c.l.b16 %v1571
      %v1590 = vunpack.c.h.b16 %v1571
      %v1591 = vunpack.c.l.b16 %v1572
      %v1592 = vunpack.c.h.b16 %v1572
      %v1593 = vunpack.c.l.b16 %v1573
      %v1594 = vunpack.c.h.b16 %v1573
      %v1595 = vunpack.c.l.b16 %v1574
      %v1596 = vunpack.c.h.b16 %v1574
      %v1597 = vunpack.c.l.b16 %v1575
      %v1598 = vunpack.c.h.b16 %v1575
      %v1599 = vunpack.c.l.b16 %v1576
      %v1600 = vunpack.c.h.b16 %v1576
      %v1601 = vpack.c.b16 %v1585, %v1585
      %v1602 = vpack.c.b16 %v1586, %v1586
      %v1603 = vpack.c.b16 %v1587, %v1587
      %v1604 = vpack.c.b16 %v1588, %v1588
      %v1605 = vpack.c.b16 %v1589, %v1589
      %v1606 = vpack.c.b16 %v1590, %v1590
      %v1607 = vpack.c.b16 %v1591, %v1591
      %v1608 = vpack.c.b16 %v1592, %v1592
      %v1609 = vpack.c.b16 %v1593, %v1593
      %v1610 = vpack.c.b16 %v1594, %v1594
      %v1611 = vpack.c.b16 %v1595, %v1595
      %v1612 = vpack.c.b16 %v1596, %v1596
      %v1613 = vpack.c.b16 %v1597, %v1597
      %v1614 = vpack.c.b16 %v1598, %v1598
      %v1615 = vpack.c.b16 %v1599, %v1599
      %v1616 = vpack.c.b16 %v1600, %v1600
      %vm1633 = vcmask 60416
      %1634 = vst.msk [vmem:[#allocation4] sm:$0xf] %vm1633, %v1601
      %1635 = vst.msk [vmem:[#allocation4 + $0x4] sm:$0xf] %vm1633, %v1602
      %1636 = vst.msk [vmem:[#allocation4 + $0x8] sm:$0xf] %vm1633, %v1603
      %1637 = vst.msk [vmem:[#allocation4 + $0xc] sm:$0xf] %vm1633, %v1604
      %1638 = vst.msk [vmem:[#allocation4 + $0x10] sm:$0xf] %vm1633, %v1605
      %1639 = vst.msk [vmem:[#allocation4 + $0x14] sm:$0xf] %vm1633, %v1606
      %1640 = vst.msk [vmem:[#allocation4 + $0x18] sm:$0xf] %vm1633, %v1607
      %1641 = vst.msk [vmem:[#allocation4 + $0x1c] sm:$0xf] %vm1633, %v1608
      %1642 = vst.msk [vmem:[#allocation4 + $0x20] sm:$0xf] %vm1633, %v1609
      %1643 = vst.msk [vmem:[#allocation4 + $0x24] sm:$0xf] %vm1633, %v1610
      %1644 = vst.msk [vmem:[#allocation4 + $0x28] sm:$0xf] %vm1633, %v1611
      %1645 = vst.msk [vmem:[#allocation4 + $0x2c] sm:$0xf] %vm1633, %v1612
      %1646 = vst.msk [vmem:[#allocation4 + $0x30] sm:$0xf] %vm1633, %v1613
      %1647 = vst.msk [vmem:[#allocation4 + $0x34] sm:$0xf] %vm1633, %v1614
      %1648 = vst.msk [vmem:[#allocation4 + $0x38] sm:$0xf] %vm1633, %v1615
      %1649 = vst.msk [vmem:[#allocation4 + $0x3c] sm:$0xf] %vm1633, %v1616
      %1658 = vrot.lane.b32.xlu0 %v1004, 120
      %v1659 = vpop.permute.xlu0 %1658
      %1660 = vrot.lane.b32.xlu0 %v1005, 120
      %v1661 = vpop.permute.xlu0 %1660
      %1662 = vrot.lane.b32.xlu0 %v1006, 120
      %v1663 = vpop.permute.xlu0 %1662
      %1664 = vrot.lane.b32.xlu0 %v1007, 120
      %v1665 = vpop.permute.xlu0 %1664
      %1666 = vrot.lane.b32.xlu0 %v1008, 120
      %v1667 = vpop.permute.xlu0 %1666
      %1668 = vrot.lane.b32.xlu0 %v1009, 120
      %v1669 = vpop.permute.xlu0 %1668
      %1670 = vrot.lane.b32.xlu0 %v1010, 120
      %v1671 = vpop.permute.xlu0 %1670
      %1672 = vrot.lane.b32.xlu0 %v1011, 120
      %v1673 = vpop.permute.xlu0 %1672
      %1674 = vrot.lane.b32.xlu0 %v1084, 120
      %v1675 = vpop.permute.xlu0 %1674
      %1676 = vrot.lane.b32.xlu0 %v1085, 120
      %v1677 = vpop.permute.xlu0 %1676
      %1678 = vrot.lane.b32.xlu0 %v1086, 120
      %v1679 = vpop.permute.xlu0 %1678
      %1680 = vrot.lane.b32.xlu0 %v1087, 120
      %v1681 = vpop.permute.xlu0 %1680
      %1682 = vrot.lane.b32.xlu0 %v1088, 120
      %v1683 = vpop.permute.xlu0 %1682
      %1684 = vrot.lane.b32.xlu0 %v1089, 120
      %v1685 = vpop.permute.xlu0 %1684
      %1686 = vrot.lane.b32.xlu0 %v1090, 120
      %v1687 = vpop.permute.xlu0 %1686
      %1688 = vrot.lane.b32.xlu0 %v1091, 120
      %v1689 = vpop.permute.xlu0 %1688
      %v1691 = vsel %vm1092, %v1659, 0
      %v1694 = vsel %vm1092, %v1661, 0
      %v1697 = vsel %vm1092, %v1663, 0
      %v1700 = vsel %vm1092, %v1665, 0
      %v1703 = vsel %vm1092, %v1667, 0
      %v1706 = vsel %vm1092, %v1669, 0
      %v1709 = vsel %vm1092, %v1671, 0
      %v1712 = vsel %vm1092, %v1673, 0
      %v1715 = vsel %vm1092, %v1675, 0
      %v1718 = vsel %vm1092, %v1677, 0
      %v1721 = vsel %vm1092, %v1679, 0
      %v1724 = vsel %vm1092, %v1681, 0
      %v1727 = vsel %vm1092, %v1683, 0
      %v1730 = vsel %vm1092, %v1685, 0
      %v1733 = vsel %vm1092, %v1687, 0
      %v1736 = vsel %vm1092, %v1689, 0
      %1738 = vmatprep.subr.bf16.mxu0 0
      %1739 = vmatpush1.bf16.xpose.msra.mxu0 %v1736
      %1740 = vmatprep.subr.bf16.mxu0 0
      %1741 = vmatpush1.bf16.xpose.msra.mxu0 %v1733
      %1742 = vmatprep.subr.bf16.mxu0 0
      %1743 = vmatpush1.bf16.xpose.msra.mxu0 %v1730
      %1744 = vmatprep.subr.bf16.mxu0 0
      %1745 = vmatpush1.bf16.xpose.msra.mxu0 %v1727
      %1746 = vmatprep.subr.bf16.mxu0 0
      %1747 = vmatpush1.bf16.xpose.msra.mxu0 %v1724
      %1748 = vmatprep.subr.bf16.mxu0 0
      %1749 = vmatpush1.bf16.xpose.msra.mxu0 %v1721
      %1750 = vmatprep.subr.bf16.mxu0 0
      %1751 = vmatpush1.bf16.xpose.msra.mxu0 %v1718
      %1752 = vmatprep.subr.bf16.mxu0 0
      %1753 = vmatpush1.bf16.xpose.msra.mxu0 %v1715
      %1754 = vmatprep.subr.bf16.mxu0 0
      %1755 = vmatpush2.bf16.xpose.msra.mxu0 0
      %1756 = vmatprep.subr.bf16.mxu0 0
      %1757 = vmatpush2.bf16.xpose.msra.mxu0 0
      %1758 = vmatprep.subr.bf16.mxu0 0
      %1759 = vmatpush2.bf16.xpose.msra.mxu0 0
      %1760 = vmatprep.subr.bf16.mxu0 0
      %1761 = vmatpush2.bf16.xpose.msra.mxu0 0
      %1762 = vmatprep.subr.bf16.mxu0 0
      %1763 = vmatpush2.bf16.xpose.msra.mxu0 0
      %1764 = vmatprep.subr.bf16.mxu0 0
      %1765 = vmatpush2.bf16.xpose.msra.mxu0 0
      %1766 = vmatprep.subr.bf16.mxu0 0
      %1767 = vmatpush2.bf16.xpose.msra.mxu0 0
      %1768 = vmatprep.subr.bf16.mxu0 0
      %1769 = vmatpush2.bf16.xpose.msra.mxu0 0
      %1770 = vmatprep.mubr.bf16.mxu0 0
      %1771 = vmatmul.mubr.bf16.gmra.mxu0 %v1691
      %v1772 = vpop.f32.mrf.mxu0
      %v1773 = vadd.f32 0.0, %v1772
      %v1774 = vpop.f32.mrf.mxu0
      %v1775 = vpop.f32.mrf.mxu0
      %v1776 = vadd.f32 0.0, %v1775
      %v1777 = vpop.f32.mrf.mxu0
      %1778 = vmatprep.mubr.bf16.mxu0 0
      %1779 = vmatmul.mubr.bf16.gmra.mxu0 %v1694
      %v1780 = vpop.f32.mrf.mxu0
      %v1781 = vadd.f32 0.0, %v1780
      %v1782 = vpop.f32.mrf.mxu0
      %v1783 = vpop.f32.mrf.mxu0
      %v1784 = vadd.f32 0.0, %v1783
      %v1785 = vpop.f32.mrf.mxu0
      %1786 = vmatprep.mubr.bf16.mxu0 0
      %1787 = vmatmul.mubr.bf16.gmra.mxu0 %v1697
      %v1788 = vpop.f32.mrf.mxu0
      %v1789 = vadd.f32 0.0, %v1788
      %v1790 = vpop.f32.mrf.mxu0
      %v1791 = vpop.f32.mrf.mxu0
      %v1792 = vadd.f32 0.0, %v1791
      %v1793 = vpop.f32.mrf.mxu0
      %1794 = vmatprep.mubr.bf16.mxu0 0
      %1795 = vmatmul.mubr.bf16.gmra.mxu0 %v1700
      %v1796 = vpop.f32.mrf.mxu0
      %v1797 = vadd.f32 0.0, %v1796
      %v1798 = vpop.f32.mrf.mxu0
      %v1799 = vpop.f32.mrf.mxu0
      %v1800 = vadd.f32 0.0, %v1799
      %v1801 = vpop.f32.mrf.mxu0
      %1802 = vmatprep.mubr.bf16.mxu0 0
      %1803 = vmatmul.mubr.bf16.gmra.mxu0 %v1703
      %v1804 = vpop.f32.mrf.mxu0
      %v1805 = vadd.f32 0.0, %v1804
      %v1806 = vpop.f32.mrf.mxu0
      %v1807 = vpop.f32.mrf.mxu0
      %v1808 = vadd.f32 0.0, %v1807
      %v1809 = vpop.f32.mrf.mxu0
      %1810 = vmatprep.mubr.bf16.mxu0 0
      %1811 = vmatmul.mubr.bf16.gmra.mxu0 %v1706
      %v1812 = vpop.f32.mrf.mxu0
      %v1813 = vadd.f32 0.0, %v1812
      %v1814 = vpop.f32.mrf.mxu0
      %v1815 = vpop.f32.mrf.mxu0
      %v1816 = vadd.f32 0.0, %v1815
      %v1817 = vpop.f32.mrf.mxu0
      %1818 = vmatprep.mubr.bf16.mxu0 0
      %1819 = vmatmul.mubr.bf16.gmra.mxu0 %v1709
      %v1820 = vpop.f32.mrf.mxu0
      %v1821 = vadd.f32 0.0, %v1820
      %v1822 = vpop.f32.mrf.mxu0
      %v1823 = vpop.f32.mrf.mxu0
      %v1824 = vadd.f32 0.0, %v1823
      %v1825 = vpop.f32.mrf.mxu0
      %1826 = vmatprep.mubr.bf16.mxu0 0
      %1827 = vmatmul.mubr.bf16.gmra.mxu0 %v1712
      %v1828 = vpop.f32.mrf.mxu0
      %v1829 = vadd.f32 0.0, %v1828
      %v1830 = vpop.f32.mrf.mxu0
      %v1831 = vpop.f32.mrf.mxu0
      %v1832 = vadd.f32 0.0, %v1831
      %v1833 = vpop.f32.mrf.mxu0
      %1834 = vdwg.mxu0
      %v1835 = vmul.f32 %v1773, 0.35355338
      %v1836 = vmul.f32 %v1776, 0.35355338
      %v1837 = vmul.f32 %v1781, 0.35355338
      %v1838 = vmul.f32 %v1784, 0.35355338
      %v1839 = vmul.f32 %v1789, 0.35355338
      %v1840 = vmul.f32 %v1792, 0.35355338
      %v1841 = vmul.f32 %v1797, 0.35355338
      %v1842 = vmul.f32 %v1800, 0.35355338
      %v1843 = vmul.f32 %v1805, 0.35355338
      %v1844 = vmul.f32 %v1808, 0.35355338
      %v1845 = vmul.f32 %v1813, 0.35355338
      %v1846 = vmul.f32 %v1816, 0.35355338
      %v1847 = vmul.f32 %v1821, 0.35355338
      %v1848 = vmul.f32 %v1824, 0.35355338
      %v1849 = vmul.f32 %v1829, 0.35355338
      %v1850 = vmul.f32 %v1832, 0.35355338
      %v1851 = vsel %vm1255, %v1835, -1e+30
      %v1852 = vsel %vm1255, %v1836, -1e+30
      %v1853 = vsel %vm1255, %v1837, -1e+30
      %v1854 = vsel %vm1255, %v1838, -1e+30
      %v1855 = vsel %vm1255, %v1839, -1e+30
      %v1856 = vsel %vm1255, %v1840, -1e+30
      %v1857 = vsel %vm1255, %v1841, -1e+30
      %v1858 = vsel %vm1255, %v1842, -1e+30
      %v1859 = vsel %vm1255, %v1843, -1e+30
      %v1860 = vsel %vm1255, %v1844, -1e+30
      %v1861 = vsel %vm1255, %v1845, -1e+30
      %v1862 = vsel %vm1255, %v1846, -1e+30
      %v1863 = vsel %vm1255, %v1847, -1e+30
      %v1864 = vsel %vm1255, %v1848, -1e+30
      %v1865 = vsel %vm1255, %v1849, -1e+30
      %v1866 = vsel %vm1255, %v1850, -1e+30
      %1867 = vmax.xlane.f32.xlu0 %v1851
      %v1868 = vpop.xlane.xlu0 %1867
      %1869 = vmax.xlane.f32.xlu0 %v1852
      %v1870 = vpop.xlane.xlu0 %1869
      %1871 = vmax.xlane.f32.xlu0 %v1853
      %v1872 = vpop.xlane.xlu0 %1871
      %1873 = vmax.xlane.f32.xlu0 %v1854
      %v1874 = vpop.xlane.xlu0 %1873
      %1875 = vmax.xlane.f32.xlu0 %v1855
      %v1876 = vpop.xlane.xlu0 %1875
      %1877 = vmax.xlane.f32.xlu0 %v1856
      %v1878 = vpop.xlane.xlu0 %1877
      %1879 = vmax.xlane.f32.xlu0 %v1857
      %v1880 = vpop.xlane.xlu0 %1879
      %1881 = vmax.xlane.f32.xlu0 %v1858
      %v1882 = vpop.xlane.xlu0 %1881
      %1883 = vmax.xlane.f32.xlu0 %v1859
      %v1884 = vpop.xlane.xlu0 %1883
      %1885 = vmax.xlane.f32.xlu0 %v1860
      %v1886 = vpop.xlane.xlu0 %1885
      %1887 = vmax.xlane.f32.xlu0 %v1861
      %v1888 = vpop.xlane.xlu0 %1887
      %1889 = vmax.xlane.f32.xlu0 %v1862
      %v1890 = vpop.xlane.xlu0 %1889
      %1891 = vmax.xlane.f32.xlu0 %v1863
      %v1892 = vpop.xlane.xlu0 %1891
      %1893 = vmax.xlane.f32.xlu0 %v1864
      %v1894 = vpop.xlane.xlu0 %1893
      %1895 = vmax.xlane.f32.xlu0 %v1865
      %v1896 = vpop.xlane.xlu0 %1895
      %1897 = vmax.xlane.f32.xlu0 %v1866
      %v1898 = vpop.xlane.xlu0 %1897
      %v1899 = vsub.f32 %v1851, %v1868
      %v1900 = vsub.f32 %v1852, %v1870
      %v1901 = vsub.f32 %v1853, %v1872
      %v1902 = vsub.f32 %v1854, %v1874
      %v1903 = vsub.f32 %v1855, %v1876
      %v1904 = vsub.f32 %v1856, %v1878
      %v1905 = vsub.f32 %v1857, %v1880
      %v1906 = vsub.f32 %v1858, %v1882
      %v1907 = vsub.f32 %v1859, %v1884
      %v1908 = vsub.f32 %v1860, %v1886
      %v1909 = vsub.f32 %v1861, %v1888
      %v1910 = vsub.f32 %v1862, %v1890
      %v1911 = vsub.f32 %v1863, %v1892
      %v1912 = vsub.f32 %v1864, %v1894
      %v1913 = vsub.f32 %v1865, %v1896
      %v1914 = vsub.f32 %v1866, %v1898
      %v1915 = vmul.f32 %v1899, 1.442695
      %v1916 = vpow.pop %v1915
      %v1917 = vmul.f32 %v1900, 1.442695
      %v1918 = vpow.pop %v1917
      %v1919 = vmul.f32 %v1901, 1.442695
      %v1920 = vpow.pop %v1919
      %v1921 = vmul.f32 %v1902, 1.442695
      %v1922 = vpow.pop %v1921
      %v1923 = vmul.f32 %v1903, 1.442695
      %v1924 = vpow.pop %v1923
      %v1925 = vmul.f32 %v1904, 1.442695
      %v1926 = vpow.pop %v1925
      %v1927 = vmul.f32 %v1905, 1.442695
      %v1928 = vpow.pop %v1927
      %v1929 = vmul.f32 %v1906, 1.442695
      %v1930 = vpow.pop %v1929
      %v1931 = vmul.f32 %v1907, 1.442695
      %v1932 = vpow.pop %v1931
      %v1933 = vmul.f32 %v1908, 1.442695
      %v1934 = vpow.pop %v1933
      %v1935 = vmul.f32 %v1909, 1.442695
      %v1936 = vpow.pop %v1935
      %v1937 = vmul.f32 %v1910, 1.442695
      %v1938 = vpow.pop %v1937
      %v1939 = vmul.f32 %v1911, 1.442695
      %v1940 = vpow.pop %v1939
      %v1941 = vmul.f32 %v1912, 1.442695
      %v1942 = vpow.pop %v1941
      %v1943 = vmul.f32 %v1913, 1.442695
      %v1944 = vpow.pop %v1943
      %v1945 = vmul.f32 %v1914, 1.442695
      %v1946 = vpow.pop %v1945
      %1947 = vadd.xlane.f32.xlu0 %v1916
      %v1948 = vpop.xlane.xlu0 %1947
      %1949 = vadd.xlane.f32.xlu0 %v1918
      %v1950 = vpop.xlane.xlu0 %1949
      %1951 = vadd.xlane.f32.xlu0 %v1920
      %v1952 = vpop.xlane.xlu0 %1951
      %1953 = vadd.xlane.f32.xlu0 %v1922
      %v1954 = vpop.xlane.xlu0 %1953
      %1955 = vadd.xlane.f32.xlu0 %v1924
      %v1956 = vpop.xlane.xlu0 %1955
      %1957 = vadd.xlane.f32.xlu0 %v1926
      %v1958 = vpop.xlane.xlu0 %1957
      %1959 = vadd.xlane.f32.xlu0 %v1928
      %v1960 = vpop.xlane.xlu0 %1959
      %1961 = vadd.xlane.f32.xlu0 %v1930
      %v1962 = vpop.xlane.xlu0 %1961
      %1963 = vadd.xlane.f32.xlu0 %v1932
      %v1964 = vpop.xlane.xlu0 %1963
      %1965 = vadd.xlane.f32.xlu0 %v1934
      %v1966 = vpop.xlane.xlu0 %1965
      %1967 = vadd.xlane.f32.xlu0 %v1936
      %v1968 = vpop.xlane.xlu0 %1967
      %1969 = vadd.xlane.f32.xlu0 %v1938
      %v1970 = vpop.xlane.xlu0 %1969
      %1971 = vadd.xlane.f32.xlu0 %v1940
      %v1972 = vpop.xlane.xlu0 %1971
      %1973 = vadd.xlane.f32.xlu0 %v1942
      %v1974 = vpop.xlane.xlu0 %1973
      %1975 = vadd.xlane.f32.xlu0 %v1944
      %v1976 = vpop.xlane.xlu0 %1975
      %1977 = vadd.xlane.f32.xlu0 %v1946
      %v1978 = vpop.xlane.xlu0 %1977
      %v1979 = vpack.c.bf16 %v1918, %v1916
      %v1980 = vpack.c.bf16 %v1922, %v1920
      %v1981 = vpack.c.bf16 %v1926, %v1924
      %v1982 = vpack.c.bf16 %v1930, %v1928
      %v1983 = vpack.c.bf16 %v1934, %v1932
      %v1984 = vpack.c.bf16 %v1938, %v1936
      %v1985 = vpack.c.bf16 %v1942, %v1940
      %v1986 = vpack.c.bf16 %v1946, %v1944
      %1987 = vrot.lane.b32.xlu0 %v1424, 120
      %v1988 = vpop.permute.xlu0 %1987
      %1989 = vrot.lane.b32.xlu0 %v1425, 120
      %v1990 = vpop.permute.xlu0 %1989
      %1991 = vrot.lane.b32.xlu0 %v1426, 120
      %v1992 = vpop.permute.xlu0 %1991
      %1993 = vrot.lane.b32.xlu0 %v1427, 120
      %v1994 = vpop.permute.xlu0 %1993
      %1995 = vrot.lane.b32.xlu0 %v1428, 120
      %v1996 = vpop.permute.xlu0 %1995
      %1997 = vrot.lane.b32.xlu0 %v1429, 120
      %v1998 = vpop.permute.xlu0 %1997
      %1999 = vrot.lane.b32.xlu0 %v1430, 120
      %v2000 = vpop.permute.xlu0 %1999
      %2001 = vrot.lane.b32.xlu0 %v1431, 120
      %v2002 = vpop.permute.xlu0 %2001
      %2011 = vmatprep.subr.bf16.mxu0 0
      %2012 = vmatpush1.bf16.msra.mxu0 %v2002
      %2013 = vmatprep.subr.bf16.mxu0 0
      %2014 = vmatpush1.bf16.msra.mxu0 %v2000
      %2015 = vmatprep.subr.bf16.mxu0 0
      %2016 = vmatpush1.bf16.msra.mxu0 %v1998
      %2017 = vmatprep.subr.bf16.mxu0 0
      %2018 = vmatpush1.bf16.msra.mxu0 %v1996
      %2019 = vmatprep.subr.bf16.mxu0 0
      %2020 = vmatpush1.bf16.msra.mxu0 %v1994
      %2021 = vmatprep.subr.bf16.mxu0 0
      %2022 = vmatpush1.bf16.msra.mxu0 %v1992
      %2023 = vmatprep.subr.bf16.mxu0 0
      %2024 = vmatpush1.bf16.msra.mxu0 %v1990
      %2025 = vmatprep.subr.bf16.mxu0 0
      %2026 = vmatpush1.bf16.msra.mxu0 %v1988
      %2027 = vmatprep.subr.bf16.mxu0 0
      %2028 = vmatpush2.bf16.msra.mxu0 0
      %2029 = vmatprep.subr.bf16.mxu0 0
      %2030 = vmatpush2.bf16.msra.mxu0 0
      %2031 = vmatprep.subr.bf16.mxu0 0
      %2032 = vmatpush2.bf16.msra.mxu0 0
      %2033 = vmatprep.subr.bf16.mxu0 0
      %2034 = vmatpush2.bf16.msra.mxu0 0
      %2035 = vmatprep.subr.bf16.mxu0 0
      %2036 = vmatpush2.bf16.msra.mxu0 0
      %2037 = vmatprep.subr.bf16.mxu0 0
      %2038 = vmatpush2.bf16.msra.mxu0 0
      %2039 = vmatprep.subr.bf16.mxu0 0
      %2040 = vmatpush2.bf16.msra.mxu0 0
      %2041 = vmatprep.subr.bf16.mxu0 0
      %2042 = vmatpush2.bf16.msra.mxu0 0
      %2043 = vmatprep.mubr.bf16.mxu0 0
      %2044 = vmatmul.mubr.bf16.gmra.mxu0 %v1979
      %v2045 = vpop.f32.mrf.mxu0
      %v2046 = vadd.f32 0.0, %v2045
      %v2047 = vpop.f32.mrf.mxu0
      %v2048 = vpop.f32.mrf.mxu0
      %v2049 = vadd.f32 0.0, %v2048
      %v2050 = vpop.f32.mrf.mxu0
      %2051 = vmatprep.mubr.bf16.mxu0 0
      %2052 = vmatmul.mubr.bf16.gmra.mxu0 %v1980
      %v2053 = vpop.f32.mrf.mxu0
      %v2054 = vadd.f32 0.0, %v2053
      %v2055 = vpop.f32.mrf.mxu0
      %v2056 = vpop.f32.mrf.mxu0
      %v2057 = vadd.f32 0.0, %v2056
      %v2058 = vpop.f32.mrf.mxu0
      %2059 = vmatprep.mubr.bf16.mxu0 0
      %2060 = vmatmul.mubr.bf16.gmra.mxu0 %v1981
      %v2061 = vpop.f32.mrf.mxu0
      %v2062 = vadd.f32 0.0, %v2061
      %v2063 = vpop.f32.mrf.mxu0
      %v2064 = vpop.f32.mrf.mxu0
      %v2065 = vadd.f32 0.0, %v2064
      %v2066 = vpop.f32.mrf.mxu0
      %2067 = vmatprep.mubr.bf16.mxu0 0
      %2068 = vmatmul.mubr.bf16.gmra.mxu0 %v1982
      %v2069 = vpop.f32.mrf.mxu0
      %v2070 = vadd.f32 0.0, %v2069
      %v2071 = vpop.f32.mrf.mxu0
      %v2072 = vpop.f32.mrf.mxu0
      %v2073 = vadd.f32 0.0, %v2072
      %v2074 = vpop.f32.mrf.mxu0
      %2075 = vmatprep.mubr.bf16.mxu0 0
      %2076 = vmatmul.mubr.bf16.gmra.mxu0 %v1983
      %v2077 = vpop.f32.mrf.mxu0
      %v2078 = vadd.f32 0.0, %v2077
      %v2079 = vpop.f32.mrf.mxu0
      %v2080 = vpop.f32.mrf.mxu0
      %v2081 = vadd.f32 0.0, %v2080
      %v2082 = vpop.f32.mrf.mxu0
      %2083 = vmatprep.mubr.bf16.mxu0 0
      %2084 = vmatmul.mubr.bf16.gmra.mxu0 %v1984
      %v2085 = vpop.f32.mrf.mxu0
      %v2086 = vadd.f32 0.0, %v2085
      %v2087 = vpop.f32.mrf.mxu0
      %v2088 = vpop.f32.mrf.mxu0
      %v2089 = vadd.f32 0.0, %v2088
      %v2090 = vpop.f32.mrf.mxu0
      %2091 = vmatprep.mubr.bf16.mxu0 0
      %2092 = vmatmul.mubr.bf16.gmra.mxu0 %v1985
      %v2093 = vpop.f32.mrf.mxu0
      %v2094 = vadd.f32 0.0, %v2093
      %v2095 = vpop.f32.mrf.mxu0
      %v2096 = vpop.f32.mrf.mxu0
      %v2097 = vadd.f32 0.0, %v2096
      %v2098 = vpop.f32.mrf.mxu0
      %2099 = vmatprep.mubr.bf16.mxu0 0
      %2100 = vmatmul.mubr.bf16.gmra.mxu0 %v1986
      %v2101 = vpop.f32.mrf.mxu0
      %v2102 = vadd.f32 0.0, %v2101
      %v2103 = vpop.f32.mrf.mxu0
      %v2104 = vpop.f32.mrf.mxu0
      %v2105 = vadd.f32 0.0, %v2104
      %v2106 = vpop.f32.mrf.mxu0
      %2107 = vdwg.mxu0
      %v2108 = vrcp.pop %v1948
      %v2109 = vrcp.pop %v1950
      %v2110 = vrcp.pop %v1952
      %v2111 = vrcp.pop %v1954
      %v2112 = vrcp.pop %v1956
      %v2113 = vrcp.pop %v1958
      %v2114 = vrcp.pop %v1960
      %v2115 = vrcp.pop %v1962
      %v2116 = vrcp.pop %v1964
      %v2117 = vrcp.pop %v1966
      %v2118 = vrcp.pop %v1968
      %v2119 = vrcp.pop %v1970
      %v2120 = vrcp.pop %v1972
      %v2121 = vrcp.pop %v1974
      %v2122 = vrcp.pop %v1976
      %v2123 = vrcp.pop %v1978
      %v2124 = vmul.f32 %v2046, %v2108
      %v2125 = vmul.f32 %v2049, %v2109
      %v2126 = vmul.f32 %v2054, %v2110
      %v2127 = vmul.f32 %v2057, %v2111
      %v2128 = vmul.f32 %v2062, %v2112
      %v2129 = vmul.f32 %v2065, %v2113
      %v2130 = vmul.f32 %v2070, %v2114
      %v2131 = vmul.f32 %v2073, %v2115
      %v2132 = vmul.f32 %v2078, %v2116
      %v2133 = vmul.f32 %v2081, %v2117
      %v2134 = vmul.f32 %v2086, %v2118
      %v2135 = vmul.f32 %v2089, %v2119
      %v2136 = vmul.f32 %v2094, %v2120
      %v2137 = vmul.f32 %v2097, %v2121
      %v2138 = vmul.f32 %v2102, %v2122
      %v2139 = vmul.f32 %v2105, %v2123
      %v2140 = vpack.c.bf16 %v2125, %v2124
      %v2141 = vpack.c.bf16 %v2127, %v2126
      %v2142 = vpack.c.bf16 %v2129, %v2128
      %v2143 = vpack.c.bf16 %v2131, %v2130
      %v2144 = vpack.c.bf16 %v2133, %v2132
      %v2145 = vpack.c.bf16 %v2135, %v2134
      %v2146 = vpack.c.bf16 %v2137, %v2136
      %v2147 = vpack.c.bf16 %v2139, %v2138
      %v2156 = vunpack.c.l.b16 %v2140
      %v2157 = vunpack.c.h.b16 %v2140
      %v2158 = vunpack.c.l.b16 %v2141
      %v2159 = vunpack.c.h.b16 %v2141
      %v2160 = vunpack.c.l.b16 %v2142
      %v2161 = vunpack.c.h.b16 %v2142
      %v2162 = vunpack.c.l.b16 %v2143
      %v2163 = vunpack.c.h.b16 %v2143
      %v2164 = vunpack.c.l.b16 %v2144
      %v2165 = vunpack.c.h.b16 %v2144
      %v2166 = vunpack.c.l.b16 %v2145
      %v2167 = vunpack.c.h.b16 %v2145
      %v2168 = vunpack.c.l.b16 %v2146
      %v2169 = vunpack.c.h.b16 %v2146
      %v2170 = vunpack.c.l.b16 %v2147
      %v2171 = vunpack.c.h.b16 %v2147
      %v2172 = vpack.c.b16 %v2156, %v2156
      %v2173 = vpack.c.b16 %v2157, %v2157
      %v2174 = vpack.c.b16 %v2158, %v2158
      %v2175 = vpack.c.b16 %v2159, %v2159
      %v2176 = vpack.c.b16 %v2160, %v2160
      %v2177 = vpack.c.b16 %v2161, %v2161
      %v2178 = vpack.c.b16 %v2162, %v2162
      %v2179 = vpack.c.b16 %v2163, %v2163
      %v2180 = vpack.c.b16 %v2164, %v2164
      %v2181 = vpack.c.b16 %v2165, %v2165
      %v2182 = vpack.c.b16 %v2166, %v2166
      %v2183 = vpack.c.b16 %v2167, %v2167
      %v2184 = vpack.c.b16 %v2168, %v2168
      %v2185 = vpack.c.b16 %v2169, %v2169
      %v2186 = vpack.c.b16 %v2170, %v2170
      %v2187 = vpack.c.b16 %v2171, %v2171
      %2188 = vrot.lane.b32.xlu0 %v2172, 8
      %v2189 = vpop.permute.xlu0 %2188
      %2190 = vrot.lane.b32.xlu0 %v2173, 8
      %v2191 = vpop.permute.xlu0 %2190
      %2192 = vrot.lane.b32.xlu0 %v2174, 8
      %v2193 = vpop.permute.xlu0 %2192
      %2194 = vrot.lane.b32.xlu0 %v2175, 8
      %v2195 = vpop.permute.xlu0 %2194
      %2196 = vrot.lane.b32.xlu0 %v2176, 8
      %v2197 = vpop.permute.xlu0 %2196
      %2198 = vrot.lane.b32.xlu0 %v2177, 8
      %v2199 = vpop.permute.xlu0 %2198
      %2200 = vrot.lane.b32.xlu0 %v2178, 8
      %v2201 = vpop.permute.xlu0 %2200
      %2202 = vrot.lane.b32.xlu0 %v2179, 8
      %v2203 = vpop.permute.xlu0 %2202
      %2204 = vrot.lane.b32.xlu0 %v2180, 8
      %v2205 = vpop.permute.xlu0 %2204
      %2206 = vrot.lane.b32.xlu0 %v2181, 8
      %v2207 = vpop.permute.xlu0 %2206
      %2208 = vrot.lane.b32.xlu0 %v2182, 8
      %v2209 = vpop.permute.xlu0 %2208
      %2210 = vrot.lane.b32.xlu0 %v2183, 8
      %v2211 = vpop.permute.xlu0 %2210
      %2212 = vrot.lane.b32.xlu0 %v2184, 8
      %v2213 = vpop.permute.xlu0 %2212
      %2214 = vrot.lane.b32.xlu0 %v2185, 8
      %v2215 = vpop.permute.xlu0 %2214
      %2216 = vrot.lane.b32.xlu0 %v2186, 8
      %v2217 = vpop.permute.xlu0 %2216
      %2218 = vrot.lane.b32.xlu0 %v2187, 8
      %v2219 = vpop.permute.xlu0 %2218
      %vm2236 = vcmask 126016
      %2237 = vst.msk [vmem:[#allocation4] sm:$0xf] %vm2236, %v2189
      %2238 = vst.msk [vmem:[#allocation4 + $0x4] sm:$0xf] %vm2236, %v2191
      %2239 = vst.msk [vmem:[#allocation4 + $0x8] sm:$0xf] %vm2236, %v2193
      %2240 = vst.msk [vmem:[#allocation4 + $0xc] sm:$0xf] %vm2236, %v2195
      %2241 = vst.msk [vmem:[#allocation4 + $0x10] sm:$0xf] %vm2236, %v2197
      %2242 = vst.msk [vmem:[#allocation4 + $0x14] sm:$0xf] %vm2236, %v2199
      %2243 = vst.msk [vmem:[#allocation4 + $0x18] sm:$0xf] %vm2236, %v2201
      %2244 = vst.msk [vmem:[#allocation4 + $0x1c] sm:$0xf] %vm2236, %v2203
      %2245 = vst.msk [vmem:[#allocation4 + $0x20] sm:$0xf] %vm2236, %v2205
      %2246 = vst.msk [vmem:[#allocation4 + $0x24] sm:$0xf] %vm2236, %v2207
      %2247 = vst.msk [vmem:[#allocation4 + $0x28] sm:$0xf] %vm2236, %v2209
      %2248 = vst.msk [vmem:[#allocation4 + $0x2c] sm:$0xf] %vm2236, %v2211
      %2249 = vst.msk [vmem:[#allocation4 + $0x30] sm:$0xf] %vm2236, %v2213
      %2250 = vst.msk [vmem:[#allocation4 + $0x34] sm:$0xf] %vm2236, %v2215
      %2251 = vst.msk [vmem:[#allocation4 + $0x38] sm:$0xf] %vm2236, %v2217
      %2252 = vst.msk [vmem:[#allocation4 + $0x3c] sm:$0xf] %vm2236, %v2219
      %2253 = vrot.lane.b32.xlu0 %v1004, 112
      %v2254 = vpop.permute.xlu0 %2253
      %2255 = vrot.lane.b32.xlu0 %v1005, 112
      %v2256 = vpop.permute.xlu0 %2255
      %2257 = vrot.lane.b32.xlu0 %v1006, 112
      %v2258 = vpop.permute.xlu0 %2257
      %2259 = vrot.lane.b32.xlu0 %v1007, 112
      %v2260 = vpop.permute.xlu0 %2259
      %2261 = vrot.lane.b32.xlu0 %v1008, 112
      %v2262 = vpop.permute.xlu0 %2261
      %2263 = vrot.lane.b32.xlu0 %v1009, 112
      %v2264 = vpop.permute.xlu0 %2263
      %2265 = vrot.lane.b32.xlu0 %v1010, 112
      %v2266 = vpop.permute.xlu0 %2265
      %2267 = vrot.lane.b32.xlu0 %v1011, 112
      %v2268 = vpop.permute.xlu0 %2267
      %2269 = vrot.lane.b32.xlu0 %v1084, 112
      %v2270 = vpop.permute.xlu0 %2269
      %2271 = vrot.lane.b32.xlu0 %v1085, 112
      %v2272 = vpop.permute.xlu0 %2271
      %2273 = vrot.lane.b32.xlu0 %v1086, 112
      %v2274 = vpop.permute.xlu0 %2273
      %2275 = vrot.lane.b32.xlu0 %v1087, 112
      %v2276 = vpop.permute.xlu0 %2275
      %2277 = vrot.lane.b32.xlu0 %v1088, 112
      %v2278 = vpop.permute.xlu0 %2277
      %2279 = vrot.lane.b32.xlu0 %v1089, 112
      %v2280 = vpop.permute.xlu0 %2279
      %2281 = vrot.lane.b32.xlu0 %v1090, 112
      %v2282 = vpop.permute.xlu0 %2281
      %2283 = vrot.lane.b32.xlu0 %v1091, 112
      %v2284 = vpop.permute.xlu0 %2283
      %v2286 = vsel %vm1092, %v2254, 0
      %v2289 = vsel %vm1092, %v2256, 0
      %v2292 = vsel %vm1092, %v2258, 0
      %v2295 = vsel %vm1092, %v2260, 0
      %v2298 = vsel %vm1092, %v2262, 0
      %v2301 = vsel %vm1092, %v2264, 0
      %v2304 = vsel %vm1092, %v2266, 0
      %v2307 = vsel %vm1092, %v2268, 0
      %v2310 = vsel %vm1092, %v2270, 0
      %v2313 = vsel %vm1092, %v2272, 0
      %v2316 = vsel %vm1092, %v2274, 0
      %v2319 = vsel %vm1092, %v2276, 0
      %v2322 = vsel %vm1092, %v2278, 0
      %v2325 = vsel %vm1092, %v2280, 0
      %v2328 = vsel %vm1092, %v2282, 0
      %v2331 = vsel %vm1092, %v2284, 0
      %2333 = vmatprep.subr.bf16.mxu0 0
      %2334 = vmatpush1.bf16.xpose.msra.mxu0 %v2331
      %2335 = vmatprep.subr.bf16.mxu0 0
      %2336 = vmatpush1.bf16.xpose.msra.mxu0 %v2328
      %2337 = vmatprep.subr.bf16.mxu0 0
      %2338 = vmatpush1.bf16.xpose.msra.mxu0 %v2325
      %2339 = vmatprep.subr.bf16.mxu0 0
      %2340 = vmatpush1.bf16.xpose.msra.mxu0 %v2322
      %2341 = vmatprep.subr.bf16.mxu0 0
      %2342 = vmatpush1.bf16.xpose.msra.mxu0 %v2319
      %2343 = vmatprep.subr.bf16.mxu0 0
      %2344 = vmatpush1.bf16.xpose.msra.mxu0 %v2316
      %2345 = vmatprep.subr.bf16.mxu0 0
      %2346 = vmatpush1.bf16.xpose.msra.mxu0 %v2313
      %2347 = vmatprep.subr.bf16.mxu0 0
      %2348 = vmatpush1.bf16.xpose.msra.mxu0 %v2310
      %2349 = vmatprep.subr.bf16.mxu0 0
      %2350 = vmatpush2.bf16.xpose.msra.mxu0 0
      %2351 = vmatprep.subr.bf16.mxu0 0
      %2352 = vmatpush2.bf16.xpose.msra.mxu0 0
      %2353 = vmatprep.subr.bf16.mxu0 0
      %2354 = vmatpush2.bf16.xpose.msra.mxu0 0
      %2355 = vmatprep.subr.bf16.mxu0 0
      %2356 = vmatpush2.bf16.xpose.msra.mxu0 0
      %2357 = vmatprep.subr.bf16.mxu0 0
      %2358 = vmatpush2.bf16.xpose.msra.mxu0 0
      %2359 = vmatprep.subr.bf16.mxu0 0
      %2360 = vmatpush2.bf16.xpose.msra.mxu0 0
      %2361 = vmatprep.subr.bf16.mxu0 0
      %2362 = vmatpush2.bf16.xpose.msra.mxu0 0
      %2363 = vmatprep.subr.bf16.mxu0 0
      %2364 = vmatpush2.bf16.xpose.msra.mxu0 0
      %2365 = vmatprep.mubr.bf16.mxu0 0
      %2366 = vmatmul.mubr.bf16.gmra.mxu0 %v2286
      %v2367 = vpop.f32.mrf.mxu0
      %v2368 = vadd.f32 0.0, %v2367
      %v2369 = vpop.f32.mrf.mxu0
      %v2370 = vpop.f32.mrf.mxu0
      %v2371 = vadd.f32 0.0, %v2370
      %v2372 = vpop.f32.mrf.mxu0
      %2373 = vmatprep.mubr.bf16.mxu0 0
      %2374 = vmatmul.mubr.bf16.gmra.mxu0 %v2289
      %v2375 = vpop.f32.mrf.mxu0
      %v2376 = vadd.f32 0.0, %v2375
      %v2377 = vpop.f32.mrf.mxu0
      %v2378 = vpop.f32.mrf.mxu0
      %v2379 = vadd.f32 0.0, %v2378
      %v2380 = vpop.f32.mrf.mxu0
      %2381 = vmatprep.mubr.bf16.mxu0 0
      %2382 = vmatmul.mubr.bf16.gmra.mxu0 %v2292
      %v2383 = vpop.f32.mrf.mxu0
      %v2384 = vadd.f32 0.0, %v2383
      %v2385 = vpop.f32.mrf.mxu0
      %v2386 = vpop.f32.mrf.mxu0
      %v2387 = vadd.f32 0.0, %v2386
      %v2388 = vpop.f32.mrf.mxu0
      %2389 = vmatprep.mubr.bf16.mxu0 0
      %2390 = vmatmul.mubr.bf16.gmra.mxu0 %v2295
      %v2391 = vpop.f32.mrf.mxu0
      %v2392 = vadd.f32 0.0, %v2391
      %v2393 = vpop.f32.mrf.mxu0
      %v2394 = vpop.f32.mrf.mxu0
      %v2395 = vadd.f32 0.0, %v2394
      %v2396 = vpop.f32.mrf.mxu0
      %2397 = vmatprep.mubr.bf16.mxu0 0
      %2398 = vmatmul.mubr.bf16.gmra.mxu0 %v2298
      %v2399 = vpop.f32.mrf.mxu0
      %v2400 = vadd.f32 0.0, %v2399
      %v2401 = vpop.f32.mrf.mxu0
      %v2402 = vpop.f32.mrf.mxu0
      %v2403 = vadd.f32 0.0, %v2402
      %v2404 = vpop.f32.mrf.mxu0
      %2405 = vmatprep.mubr.bf16.mxu0 0
      %2406 = vmatmul.mubr.bf16.gmra.mxu0 %v2301
      %v2407 = vpop.f32.mrf.mxu0
      %v2408 = vadd.f32 0.0, %v2407
      %v2409 = vpop.f32.mrf.mxu0
      %v2410 = vpop.f32.mrf.mxu0
      %v2411 = vadd.f32 0.0, %v2410
      %v2412 = vpop.f32.mrf.mxu0
      %2413 = vmatprep.mubr.bf16.mxu0 0
      %2414 = vmatmul.mubr.bf16.gmra.mxu0 %v2304
      %v2415 = vpop.f32.mrf.mxu0
      %v2416 = vadd.f32 0.0, %v2415
      %v2417 = vpop.f32.mrf.mxu0
      %v2418 = vpop.f32.mrf.mxu0
      %v2419 = vadd.f32 0.0, %v2418
      %v2420 = vpop.f32.mrf.mxu0
      %2421 = vmatprep.mubr.bf16.mxu0 0
      %2422 = vmatmul.mubr.bf16.gmra.mxu0 %v2307
      %v2423 = vpop.f32.mrf.mxu0
      %v2424 = vadd.f32 0.0, %v2423
      %v2425 = vpop.f32.mrf.mxu0
      %v2426 = vpop.f32.mrf.mxu0
      %v2427 = vadd.f32 0.0, %v2426
      %v2428 = vpop.f32.mrf.mxu0
      %2429 = vdwg.mxu0
      %v2430 = vmul.f32 %v2368, 0.35355338
      %v2431 = vmul.f32 %v2371, 0.35355338
      %v2432 = vmul.f32 %v2376, 0.35355338
      %v2433 = vmul.f32 %v2379, 0.35355338
      %v2434 = vmul.f32 %v2384, 0.35355338
      %v2435 = vmul.f32 %v2387, 0.35355338
      %v2436 = vmul.f32 %v2392, 0.35355338
      %v2437 = vmul.f32 %v2395, 0.35355338
      %v2438 = vmul.f32 %v2400, 0.35355338
      %v2439 = vmul.f32 %v2403, 0.35355338
      %v2440 = vmul.f32 %v2408, 0.35355338
      %v2441 = vmul.f32 %v2411, 0.35355338
      %v2442 = vmul.f32 %v2416, 0.35355338
      %v2443 = vmul.f32 %v2419, 0.35355338
      %v2444 = vmul.f32 %v2424, 0.35355338
      %v2445 = vmul.f32 %v2427, 0.35355338
      %v2446 = vsel %vm1255, %v2430, -1e+30
      %v2447 = vsel %vm1255, %v2431, -1e+30
      %v2448 = vsel %vm1255, %v2432, -1e+30
      %v2449 = vsel %vm1255, %v2433, -1e+30
      %v2450 = vsel %vm1255, %v2434, -1e+30
      %v2451 = vsel %vm1255, %v2435, -1e+30
      %v2452 = vsel %vm1255, %v2436, -1e+30
      %v2453 = vsel %vm1255, %v2437, -1e+30
      %v2454 = vsel %vm1255, %v2438, -1e+30
      %v2455 = vsel %vm1255, %v2439, -1e+30
      %v2456 = vsel %vm1255, %v2440, -1e+30
      %v2457 = vsel %vm1255, %v2441, -1e+30
      %v2458 = vsel %vm1255, %v2442, -1e+30
      %v2459 = vsel %vm1255, %v2443, -1e+30
      %v2460 = vsel %vm1255, %v2444, -1e+30
      %v2461 = vsel %vm1255, %v2445, -1e+30
      %2462 = vmax.xlane.f32.xlu0 %v2446
      %v2463 = vpop.xlane.xlu0 %2462
      %2464 = vmax.xlane.f32.xlu0 %v2447
      %v2465 = vpop.xlane.xlu0 %2464
      %2466 = vmax.xlane.f32.xlu0 %v2448
      %v2467 = vpop.xlane.xlu0 %2466
      %2468 = vmax.xlane.f32.xlu0 %v2449
      %v2469 = vpop.xlane.xlu0 %2468
      %2470 = vmax.xlane.f32.xlu0 %v2450
      %v2471 = vpop.xlane.xlu0 %2470
      %2472 = vmax.xlane.f32.xlu0 %v2451
      %v2473 = vpop.xlane.xlu0 %2472
      %2474 = vmax.xlane.f32.xlu0 %v2452
      %v2475 = vpop.xlane.xlu0 %2474
      %2476 = vmax.xlane.f32.xlu0 %v2453
      %v2477 = vpop.xlane.xlu0 %2476
      %2478 = vmax.xlane.f32.xlu0 %v2454
      %v2479 = vpop.xlane.xlu0 %2478
      %2480 = vmax.xlane.f32.xlu0 %v2455
      %v2481 = vpop.xlane.xlu0 %2480
      %2482 = vmax.xlane.f32.xlu0 %v2456
      %v2483 = vpop.xlane.xlu0 %2482
      %2484 = vmax.xlane.f32.xlu0 %v2457
      %v2485 = vpop.xlane.xlu0 %2484
      %2486 = vmax.xlane.f32.xlu0 %v2458
      %v2487 = vpop.xlane.xlu0 %2486
      %2488 = vmax.xlane.f32.xlu0 %v2459
      %v2489 = vpop.xlane.xlu0 %2488
      %2490 = vmax.xlane.f32.xlu0 %v2460
      %v2491 = vpop.xlane.xlu0 %2490
      %2492 = vmax.xlane.f32.xlu0 %v2461
      %v2493 = vpop.xlane.xlu0 %2492
      %v2494 = vsub.f32 %v2446, %v2463
      %v2495 = vsub.f32 %v2447, %v2465
      %v2496 = vsub.f32 %v2448, %v2467
      %v2497 = vsub.f32 %v2449, %v2469
      %v2498 = vsub.f32 %v2450, %v2471
      %v2499 = vsub.f32 %v2451, %v2473
      %v2500 = vsub.f32 %v2452, %v2475
      %v2501 = vsub.f32 %v2453, %v2477
      %v2502 = vsub.f32 %v2454, %v2479
      %v2503 = vsub.f32 %v2455, %v2481
      %v2504 = vsub.f32 %v2456, %v2483
      %v2505 = vsub.f32 %v2457, %v2485
      %v2506 = vsub.f32 %v2458, %v2487
      %v2507 = vsub.f32 %v2459, %v2489
      %v2508 = vsub.f32 %v2460, %v2491
      %v2509 = vsub.f32 %v2461, %v2493
      %v2510 = vmul.f32 %v2494, 1.442695
      %v2511 = vpow.pop %v2510
      %v2512 = vmul.f32 %v2495, 1.442695
      %v2513 = vpow.pop %v2512
      %v2514 = vmul.f32 %v2496, 1.442695
      %v2515 = vpow.pop %v2514
      %v2516 = vmul.f32 %v2497, 1.442695
      %v2517 = vpow.pop %v2516
      %v2518 = vmul.f32 %v2498, 1.442695
      %v2519 = vpow.pop %v2518
      %v2520 = vmul.f32 %v2499, 1.442695
      %v2521 = vpow.pop %v2520
      %v2522 = vmul.f32 %v2500, 1.442695
      %v2523 = vpow.pop %v2522
      %v2524 = vmul.f32 %v2501, 1.442695
      %v2525 = vpow.pop %v2524
      %v2526 = vmul.f32 %v2502, 1.442695
      %v2527 = vpow.pop %v2526
      %v2528 = vmul.f32 %v2503, 1.442695
      %v2529 = vpow.pop %v2528
      %v2530 = vmul.f32 %v2504, 1.442695
      %v2531 = vpow.pop %v2530
      %v2532 = vmul.f32 %v2505, 1.442695
      %v2533 = vpow.pop %v2532
      %v2534 = vmul.f32 %v2506, 1.442695
      %v2535 = vpow.pop %v2534
      %v2536 = vmul.f32 %v2507, 1.442695
      %v2537 = vpow.pop %v2536
      %v2538 = vmul.f32 %v2508, 1.442695
      %v2539 = vpow.pop %v2538
      %v2540 = vmul.f32 %v2509, 1.442695
      %v2541 = vpow.pop %v2540
      %2542 = vadd.xlane.f32.xlu0 %v2511
      %v2543 = vpop.xlane.xlu0 %2542
      %2544 = vadd.xlane.f32.xlu0 %v2513
      %v2545 = vpop.xlane.xlu0 %2544
      %2546 = vadd.xlane.f32.xlu0 %v2515
      %v2547 = vpop.xlane.xlu0 %2546
      %2548 = vadd.xlane.f32.xlu0 %v2517
      %v2549 = vpop.xlane.xlu0 %2548
      %2550 = vadd.xlane.f32.xlu0 %v2519
      %v2551 = vpop.xlane.xlu0 %2550
      %2552 = vadd.xlane.f32.xlu0 %v2521
      %v2553 = vpop.xlane.xlu0 %2552
      %2554 = vadd.xlane.f32.xlu0 %v2523
      %v2555 = vpop.xlane.xlu0 %2554
      %2556 = vadd.xlane.f32.xlu0 %v2525
      %v2557 = vpop.xlane.xlu0 %2556
      %2558 = vadd.xlane.f32.xlu0 %v2527
      %v2559 = vpop.xlane.xlu0 %2558
      %2560 = vadd.xlane.f32.xlu0 %v2529
      %v2561 = vpop.xlane.xlu0 %2560
      %2562 = vadd.xlane.f32.xlu0 %v2531
      %v2563 = vpop.xlane.xlu0 %2562
      %2564 = vadd.xlane.f32.xlu0 %v2533
      %v2565 = vpop.xlane.xlu0 %2564
      %2566 = vadd.xlane.f32.xlu0 %v2535
      %v2567 = vpop.xlane.xlu0 %2566
      %2568 = vadd.xlane.f32.xlu0 %v2537
      %v2569 = vpop.xlane.xlu0 %2568
      %2570 = vadd.xlane.f32.xlu0 %v2539
      %v2571 = vpop.xlane.xlu0 %2570
      %2572 = vadd.xlane.f32.xlu0 %v2541
      %v2573 = vpop.xlane.xlu0 %2572
      %v2574 = vpack.c.bf16 %v2513, %v2511
      %v2575 = vpack.c.bf16 %v2517, %v2515
      %v2576 = vpack.c.bf16 %v2521, %v2519
      %v2577 = vpack.c.bf16 %v2525, %v2523
      %v2578 = vpack.c.bf16 %v2529, %v2527
      %v2579 = vpack.c.bf16 %v2533, %v2531
      %v2580 = vpack.c.bf16 %v2537, %v2535
      %v2581 = vpack.c.bf16 %v2541, %v2539
      %2582 = vrot.lane.b32.xlu0 %v1424, 112
      %v2583 = vpop.permute.xlu0 %2582
      %2584 = vrot.lane.b32.xlu0 %v1425, 112
      %v2585 = vpop.permute.xlu0 %2584
      %2586 = vrot.lane.b32.xlu0 %v1426, 112
      %v2587 = vpop.permute.xlu0 %2586
      %2588 = vrot.lane.b32.xlu0 %v1427, 112
      %v2589 = vpop.permute.xlu0 %2588
      %2590 = vrot.lane.b32.xlu0 %v1428, 112
      %v2591 = vpop.permute.xlu0 %2590
      %2592 = vrot.lane.b32.xlu0 %v1429, 112
      %v2593 = vpop.permute.xlu0 %2592
      %2594 = vrot.lane.b32.xlu0 %v1430, 112
      %v2595 = vpop.permute.xlu0 %2594
      %2596 = vrot.lane.b32.xlu0 %v1431, 112
      %v2597 = vpop.permute.xlu0 %2596
      %2606 = vmatprep.subr.bf16.mxu0 0
      %2607 = vmatpush1.bf16.msra.mxu0 %v2597
      %2608 = vmatprep.subr.bf16.mxu0 0
      %2609 = vmatpush1.bf16.msra.mxu0 %v2595
      %2610 = vmatprep.subr.bf16.mxu0 0
      %2611 = vmatpush1.bf16.msra.mxu0 %v2593
      %2612 = vmatprep.subr.bf16.mxu0 0
      %2613 = vmatpush1.bf16.msra.mxu0 %v2591
      %2614 = vmatprep.subr.bf16.mxu0 0
      %2615 = vmatpush1.bf16.msra.mxu0 %v2589
      %2616 = vmatprep.subr.bf16.mxu0 0
      %2617 = vmatpush1.bf16.msra.mxu0 %v2587
      %2618 = vmatprep.subr.bf16.mxu0 0
      %2619 = vmatpush1.bf16.msra.mxu0 %v2585
      %2620 = vmatprep.subr.bf16.mxu0 0
      %2621 = vmatpush1.bf16.msra.mxu0 %v2583
      %2622 = vmatprep.subr.bf16.mxu0 0
      %2623 = vmatpush2.bf16.msra.mxu0 0
      %2624 = vmatprep.subr.bf16.mxu0 0
      %2625 = vmatpush2.bf16.msra.mxu0 0
      %2626 = vmatprep.subr.bf16.mxu0 0
      %2627 = vmatpush2.bf16.msra.mxu0 0
      %2628 = vmatprep.subr.bf16.mxu0 0
      %2629 = vmatpush2.bf16.msra.mxu0 0
      %2630 = vmatprep.subr.bf16.mxu0 0
      %2631 = vmatpush2.bf16.msra.mxu0 0
      %2632 = vmatprep.subr.bf16.mxu0 0
      %2633 = vmatpush2.bf16.msra.mxu0 0
      %2634 = vmatprep.subr.bf16.mxu0 0
      %2635 = vmatpush2.bf16.msra.mxu0 0
      %2636 = vmatprep.subr.bf16.mxu0 0
      %2637 = vmatpush2.bf16.msra.mxu0 0
      %2638 = vmatprep.mubr.bf16.mxu0 0
      %2639 = vmatmul.mubr.bf16.gmra.mxu0 %v2574
      %v2640 = vpop.f32.mrf.mxu0
      %v2641 = vadd.f32 0.0, %v2640
      %v2642 = vpop.f32.mrf.mxu0
      %v2643 = vpop.f32.mrf.mxu0
      %v2644 = vadd.f32 0.0, %v2643
      %v2645 = vpop.f32.mrf.mxu0
      %2646 = vmatprep.mubr.bf16.mxu0 0
      %2647 = vmatmul.mubr.bf16.gmra.mxu0 %v2575
      %v2648 = vpop.f32.mrf.mxu0
      %v2649 = vadd.f32 0.0, %v2648
      %v2650 = vpop.f32.mrf.mxu0
      %v2651 = vpop.f32.mrf.mxu0
      %v2652 = vadd.f32 0.0, %v2651
      %v2653 = vpop.f32.mrf.mxu0
      %2654 = vmatprep.mubr.bf16.mxu0 0
      %2655 = vmatmul.mubr.bf16.gmra.mxu0 %v2576
      %v2656 = vpop.f32.mrf.mxu0
      %v2657 = vadd.f32 0.0, %v2656
      %v2658 = vpop.f32.mrf.mxu0
      %v2659 = vpop.f32.mrf.mxu0
      %v2660 = vadd.f32 0.0, %v2659
      %v2661 = vpop.f32.mrf.mxu0
      %2662 = vmatprep.mubr.bf16.mxu0 0
      %2663 = vmatmul.mubr.bf16.gmra.mxu0 %v2577
      %v2664 = vpop.f32.mrf.mxu0
      %v2665 = vadd.f32 0.0, %v2664
      %v2666 = vpop.f32.mrf.mxu0
      %v2667 = vpop.f32.mrf.mxu0
      %v2668 = vadd.f32 0.0, %v2667
      %v2669 = vpop.f32.mrf.mxu0
      %2670 = vmatprep.mubr.bf16.mxu0 0
      %2671 = vmatmul.mubr.bf16.gmra.mxu0 %v2578
      %v2672 = vpop.f32.mrf.mxu0
      %v2673 = vadd.f32 0.0, %v2672
      %v2674 = vpop.f32.mrf.mxu0
      %v2675 = vpop.f32.mrf.mxu0
      %v2676 = vadd.f32 0.0, %v2675
      %v2677 = vpop.f32.mrf.mxu0
      %2678 = vmatprep.mubr.bf16.mxu0 0
      %2679 = vmatmul.mubr.bf16.gmra.mxu0 %v2579
      %v2680 = vpop.f32.mrf.mxu0
      %v2681 = vadd.f32 0.0, %v2680
      %v2682 = vpop.f32.mrf.mxu0
      %v2683 = vpop.f32.mrf.mxu0
      %v2684 = vadd.f32 0.0, %v2683
      %v2685 = vpop.f32.mrf.mxu0
      %2686 = vmatprep.mubr.bf16.mxu0 0
      %2687 = vmatmul.mubr.bf16.gmra.mxu0 %v2580
      %v2688 = vpop.f32.mrf.mxu0
      %v2689 = vadd.f32 0.0, %v2688
      %v2690 = vpop.f32.mrf.mxu0
      %v2691 = vpop.f32.mrf.mxu0
      %v2692 = vadd.f32 0.0, %v2691
      %v2693 = vpop.f32.mrf.mxu0
      %2694 = vmatprep.mubr.bf16.mxu0 0
      %2695 = vmatmul.mubr.bf16.gmra.mxu0 %v2581
      %v2696 = vpop.f32.mrf.mxu0
      %v2697 = vadd.f32 0.0, %v2696
      %v2698 = vpop.f32.mrf.mxu0
      %v2699 = vpop.f32.mrf.mxu0
      %v2700 = vadd.f32 0.0, %v2699
      %v2701 = vpop.f32.mrf.mxu0
      %2702 = vdwg.mxu0
      %v2703 = vrcp.pop %v2543
      %v2704 = vrcp.pop %v2545
      %v2705 = vrcp.pop %v2547
      %v2706 = vrcp.pop %v2549
      %v2707 = vrcp.pop %v2551
      %v2708 = vrcp.pop %v2553
      %v2709 = vrcp.pop %v2555
      %v2710 = vrcp.pop %v2557
      %v2711 = vrcp.pop %v2559
      %v2712 = vrcp.pop %v2561
      %v2713 = vrcp.pop %v2563
      %v2714 = vrcp.pop %v2565
      %v2715 = vrcp.pop %v2567
      %v2716 = vrcp.pop %v2569
      %v2717 = vrcp.pop %v2571
      %v2718 = vrcp.pop %v2573
      %v2719 = vmul.f32 %v2641, %v2703
      %v2720 = vmul.f32 %v2644, %v2704
      %v2721 = vmul.f32 %v2649, %v2705
      %v2722 = vmul.f32 %v2652, %v2706
      %v2723 = vmul.f32 %v2657, %v2707
      %v2724 = vmul.f32 %v2660, %v2708
      %v2725 = vmul.f32 %v2665, %v2709
      %v2726 = vmul.f32 %v2668, %v2710
      %v2727 = vmul.f32 %v2673, %v2711
      %v2728 = vmul.f32 %v2676, %v2712
      %v2729 = vmul.f32 %v2681, %v2713
      %v2730 = vmul.f32 %v2684, %v2714
      %v2731 = vmul.f32 %v2689, %v2715
      %v2732 = vmul.f32 %v2692, %v2716
      %v2733 = vmul.f32 %v2697, %v2717
      %v2734 = vmul.f32 %v2700, %v2718
      %v2735 = vpack.c.bf16 %v2720, %v2719
      %v2736 = vpack.c.bf16 %v2722, %v2721
      %v2737 = vpack.c.bf16 %v2724, %v2723
      %v2738 = vpack.c.bf16 %v2726, %v2725
      %v2739 = vpack.c.bf16 %v2728, %v2727
      %v2740 = vpack.c.bf16 %v2730, %v2729
      %v2741 = vpack.c.bf16 %v2732, %v2731
      %v2742 = vpack.c.bf16 %v2734, %v2733
      %v2751 = vunpack.c.l.b16 %v2735
      %v2752 = vunpack.c.h.b16 %v2735
      %v2753 = vunpack.c.l.b16 %v2736
      %v2754 = vunpack.c.h.b16 %v2736
      %v2755 = vunpack.c.l.b16 %v2737
      %v2756 = vunpack.c.h.b16 %v2737
      %v2757 = vunpack.c.l.b16 %v2738
      %v2758 = vunpack.c.h.b16 %v2738
      %v2759 = vunpack.c.l.b16 %v2739
      %v2760 = vunpack.c.h.b16 %v2739
      %v2761 = vunpack.c.l.b16 %v2740
      %v2762 = vunpack.c.h.b16 %v2740
      %v2763 = vunpack.c.l.b16 %v2741
      %v2764 = vunpack.c.h.b16 %v2741
      %v2765 = vunpack.c.l.b16 %v2742
      %v2766 = vunpack.c.h.b16 %v2742
      %v2767 = vpack.c.b16 %v2751, %v2751
      %v2768 = vpack.c.b16 %v2752, %v2752
      %v2769 = vpack.c.b16 %v2753, %v2753
      %v2770 = vpack.c.b16 %v2754, %v2754
      %v2771 = vpack.c.b16 %v2755, %v2755
      %v2772 = vpack.c.b16 %v2756, %v2756
      %v2773 = vpack.c.b16 %v2757, %v2757
      %v2774 = vpack.c.b16 %v2758, %v2758
      %v2775 = vpack.c.b16 %v2759, %v2759
      %v2776 = vpack.c.b16 %v2760, %v2760
      %v2777 = vpack.c.b16 %v2761, %v2761
      %v2778 = vpack.c.b16 %v2762, %v2762
      %v2779 = vpack.c.b16 %v2763, %v2763
      %v2780 = vpack.c.b16 %v2764, %v2764
      %v2781 = vpack.c.b16 %v2765, %v2765
      %v2782 = vpack.c.b16 %v2766, %v2766
      %2783 = vrot.lane.b32.xlu0 %v2767, 16
      %v2784 = vpop.permute.xlu0 %2783
      %2785 = vrot.lane.b32.xlu0 %v2768, 16
      %v2786 = vpop.permute.xlu0 %2785
      %2787 = vrot.lane.b32.xlu0 %v2769, 16
      %v2788 = vpop.permute.xlu0 %2787
      %2789 = vrot.lane.b32.xlu0 %v2770, 16
      %v2790 = vpop.permute.xlu0 %2789
      %2791 = vrot.lane.b32.xlu0 %v2771, 16
      %v2792 = vpop.permute.xlu0 %2791
      %2793 = vrot.lane.b32.xlu0 %v2772, 16
      %v2794 = vpop.permute.xlu0 %2793
      %2795 = vrot.lane.b32.xlu0 %v2773, 16
      %v2796 = vpop.permute.xlu0 %2795
      %2797 = vrot.lane.b32.xlu0 %v2774, 16
      %v2798 = vpop.permute.xlu0 %2797
      %2799 = vrot.lane.b32.xlu0 %v2775, 16
      %v2800 = vpop.permute.xlu0 %2799
      %2801 = vrot.lane.b32.xlu0 %v2776, 16
      %v2802 = vpop.permute.xlu0 %2801
      %2803 = vrot.lane.b32.xlu0 %v2777, 16
      %v2804 = vpop.permute.xlu0 %2803
      %2805 = vrot.lane.b32.xlu0 %v2778, 16
      %v2806 = vpop.permute.xlu0 %2805
      %2807 = vrot.lane.b32.xlu0 %v2779, 16
      %v2808 = vpop.permute.xlu0 %2807
      %2809 = vrot.lane.b32.xlu0 %v2780, 16
      %v2810 = vpop.permute.xlu0 %2809
      %2811 = vrot.lane.b32.xlu0 %v2781, 16
      %v2812 = vpop.permute.xlu0 %2811
      %2813 = vrot.lane.b32.xlu0 %v2782, 16
      %v2814 = vpop.permute.xlu0 %2813
      %vm2831 = vcmask 191616
      %2832 = vst.msk [vmem:[#allocation4] sm:$0xf] %vm2831, %v2784
      %2833 = vst.msk [vmem:[#allocation4 + $0x4] sm:$0xf] %vm2831, %v2786
      %2834 = vst.msk [vmem:[#allocation4 + $0x8] sm:$0xf] %vm2831, %v2788
      %2835 = vst.msk [vmem:[#allocation4 + $0xc] sm:$0xf] %vm2831, %v2790
      %2836 = vst.msk [vmem:[#allocation4 + $0x10] sm:$0xf] %vm2831, %v2792
      %2837 = vst.msk [vmem:[#allocation4 + $0x14] sm:$0xf] %vm2831, %v2794
      %2838 = vst.msk [vmem:[#allocation4 + $0x18] sm:$0xf] %vm2831, %v2796
      %2839 = vst.msk [vmem:[#allocation4 + $0x1c] sm:$0xf] %vm2831, %v2798
      %2840 = vst.msk [vmem:[#allocation4 + $0x20] sm:$0xf] %vm2831, %v2800
      %2841 = vst.msk [vmem:[#allocation4 + $0x24] sm:$0xf] %vm2831, %v2802
      %2842 = vst.msk [vmem:[#allocation4 + $0x28] sm:$0xf] %vm2831, %v2804
      %2843 = vst.msk [vmem:[#allocation4 + $0x2c] sm:$0xf] %vm2831, %v2806
      %2844 = vst.msk [vmem:[#allocation4 + $0x30] sm:$0xf] %vm2831, %v2808
      %2845 = vst.msk [vmem:[#allocation4 + $0x34] sm:$0xf] %vm2831, %v2810
      %2846 = vst.msk [vmem:[#allocation4 + $0x38] sm:$0xf] %vm2831, %v2812
      %2847 = vst.msk [vmem:[#allocation4 + $0x3c] sm:$0xf] %vm2831, %v2814
      %2848 = vrot.lane.b32.xlu0 %v1004, 104
      %v2849 = vpop.permute.xlu0 %2848
      %2850 = vrot.lane.b32.xlu0 %v1005, 104
      %v2851 = vpop.permute.xlu0 %2850
      %2852 = vrot.lane.b32.xlu0 %v1006, 104
      %v2853 = vpop.permute.xlu0 %2852
      %2854 = vrot.lane.b32.xlu0 %v1007, 104
      %v2855 = vpop.permute.xlu0 %2854
      %2856 = vrot.lane.b32.xlu0 %v1008, 104
      %v2857 = vpop.permute.xlu0 %2856
      %2858 = vrot.lane.b32.xlu0 %v1009, 104
      %v2859 = vpop.permute.xlu0 %2858
      %2860 = vrot.lane.b32.xlu0 %v1010, 104
      %v2861 = vpop.permute.xlu0 %2860
      %2862 = vrot.lane.b32.xlu0 %v1011, 104
      %v2863 = vpop.permute.xlu0 %2862
      %2864 = vrot.lane.b32.xlu0 %v1084, 104
      %v2865 = vpop.permute.xlu0 %2864
      %2866 = vrot.lane.b32.xlu0 %v1085, 104
      %v2867 = vpop.permute.xlu0 %2866
      %2868 = vrot.lane.b32.xlu0 %v1086, 104
      %v2869 = vpop.permute.xlu0 %2868
      %2870 = vrot.lane.b32.xlu0 %v1087, 104
      %v2871 = vpop.permute.xlu0 %2870
      %2872 = vrot.lane.b32.xlu0 %v1088, 104
      %v2873 = vpop.permute.xlu0 %2872
      %2874 = vrot.lane.b32.xlu0 %v1089, 104
      %v2875 = vpop.permute.xlu0 %2874
      %2876 = vrot.lane.b32.xlu0 %v1090, 104
      %v2877 = vpop.permute.xlu0 %2876
      %2878 = vrot.lane.b32.xlu0 %v1091, 104
      %v2879 = vpop.permute.xlu0 %2878
      %v2881 = vsel %vm1092, %v2849, 0
      %v2884 = vsel %vm1092, %v2851, 0
      %v2887 = vsel %vm1092, %v2853, 0
      %v2890 = vsel %vm1092, %v2855, 0
      %v2893 = vsel %vm1092, %v2857, 0
      %v2896 = vsel %vm1092, %v2859, 0
      %v2899 = vsel %vm1092, %v2861, 0
      %v2902 = vsel %vm1092, %v2863, 0
      %v2905 = vsel %vm1092, %v2865, 0
      %v2908 = vsel %vm1092, %v2867, 0
      %v2911 = vsel %vm1092, %v2869, 0
      %v2914 = vsel %vm1092, %v2871, 0
      %v2917 = vsel %vm1092, %v2873, 0
      %v2920 = vsel %vm1092, %v2875, 0
      %v2923 = vsel %vm1092, %v2877, 0
      %v2926 = vsel %vm1092, %v2879, 0
      %2928 = vmatprep.subr.bf16.mxu0 0
      %2929 = vmatpush1.bf16.xpose.msra.mxu0 %v2926
      %2930 = vmatprep.subr.bf16.mxu0 0
      %2931 = vmatpush1.bf16.xpose.msra.mxu0 %v2923
      %2932 = vmatprep.subr.bf16.mxu0 0
      %2933 = vmatpush1.bf16.xpose.msra.mxu0 %v2920
      %2934 = vmatprep.subr.bf16.mxu0 0
      %2935 = vmatpush1.bf16.xpose.msra.mxu0 %v2917
      %2936 = vmatprep.subr.bf16.mxu0 0
      %2937 = vmatpush1.bf16.xpose.msra.mxu0 %v2914
      %2938 = vmatprep.subr.bf16.mxu0 0
      %2939 = vmatpush1.bf16.xpose.msra.mxu0 %v2911
      %2940 = vmatprep.subr.bf16.mxu0 0
      %2941 = vmatpush1.bf16.xpose.msra.mxu0 %v2908
      %2942 = vmatprep.subr.bf16.mxu0 0
      %2943 = vmatpush1.bf16.xpose.msra.mxu0 %v2905
      %2944 = vmatprep.subr.bf16.mxu0 0
      %2945 = vmatpush2.bf16.xpose.msra.mxu0 0
      %2946 = vmatprep.subr.bf16.mxu0 0
      %2947 = vmatpush2.bf16.xpose.msra.mxu0 0
      %2948 = vmatprep.subr.bf16.mxu0 0
      %2949 = vmatpush2.bf16.xpose.msra.mxu0 0
      %2950 = vmatprep.subr.bf16.mxu0 0
      %2951 = vmatpush2.bf16.xpose.msra.mxu0 0
      %2952 = vmatprep.subr.bf16.mxu0 0
      %2953 = vmatpush2.bf16.xpose.msra.mxu0 0
      %2954 = vmatprep.subr.bf16.mxu0 0
      %2955 = vmatpush2.bf16.xpose.msra.mxu0 0
      %2956 = vmatprep.subr.bf16.mxu0 0
      %2957 = vmatpush2.bf16.xpose.msra.mxu0 0
      %2958 = vmatprep.subr.bf16.mxu0 0
      %2959 = vmatpush2.bf16.xpose.msra.mxu0 0
      %2960 = vmatprep.mubr.bf16.mxu0 0
      %2961 = vmatmul.mubr.bf16.gmra.mxu0 %v2881
      %v2962 = vpop.f32.mrf.mxu0
      %v2963 = vadd.f32 0.0, %v2962
      %v2964 = vpop.f32.mrf.mxu0
      %v2965 = vpop.f32.mrf.mxu0
      %v2966 = vadd.f32 0.0, %v2965
      %v2967 = vpop.f32.mrf.mxu0
      %2968 = vmatprep.mubr.bf16.mxu0 0
      %2969 = vmatmul.mubr.bf16.gmra.mxu0 %v2884
      %v2970 = vpop.f32.mrf.mxu0
      %v2971 = vadd.f32 0.0, %v2970
      %v2972 = vpop.f32.mrf.mxu0
      %v2973 = vpop.f32.mrf.mxu0
      %v2974 = vadd.f32 0.0, %v2973
      %v2975 = vpop.f32.mrf.mxu0
      %2976 = vmatprep.mubr.bf16.mxu0 0
      %2977 = vmatmul.mubr.bf16.gmra.mxu0 %v2887
      %v2978 = vpop.f32.mrf.mxu0
      %v2979 = vadd.f32 0.0, %v2978
      %v2980 = vpop.f32.mrf.mxu0
      %v2981 = vpop.f32.mrf.mxu0
      %v2982 = vadd.f32 0.0, %v2981
      %v2983 = vpop.f32.mrf.mxu0
      %2984 = vmatprep.mubr.bf16.mxu0 0
      %2985 = vmatmul.mubr.bf16.gmra.mxu0 %v2890
      %v2986 = vpop.f32.mrf.mxu0
      %v2987 = vadd.f32 0.0, %v2986
      %v2988 = vpop.f32.mrf.mxu0
      %v2989 = vpop.f32.mrf.mxu0
      %v2990 = vadd.f32 0.0, %v2989
      %v2991 = vpop.f32.mrf.mxu0
      %2992 = vmatprep.mubr.bf16.mxu0 0
      %2993 = vmatmul.mubr.bf16.gmra.mxu0 %v2893
      %v2994 = vpop.f32.mrf.mxu0
      %v2995 = vadd.f32 0.0, %v2994
      %v2996 = vpop.f32.mrf.mxu0
      %v2997 = vpop.f32.mrf.mxu0
      %v2998 = vadd.f32 0.0, %v2997
      %v2999 = vpop.f32.mrf.mxu0
      %3000 = vmatprep.mubr.bf16.mxu0 0
      %3001 = vmatmul.mubr.bf16.gmra.mxu0 %v2896
      %v3002 = vpop.f32.mrf.mxu0
      %v3003 = vadd.f32 0.0, %v3002
      %v3004 = vpop.f32.mrf.mxu0
      %v3005 = vpop.f32.mrf.mxu0
      %v3006 = vadd.f32 0.0, %v3005
      %v3007 = vpop.f32.mrf.mxu0
      %3008 = vmatprep.mubr.bf16.mxu0 0
      %3009 = vmatmul.mubr.bf16.gmra.mxu0 %v2899
      %v3010 = vpop.f32.mrf.mxu0
      %v3011 = vadd.f32 0.0, %v3010
      %v3012 = vpop.f32.mrf.mxu0
      %v3013 = vpop.f32.mrf.mxu0
      %v3014 = vadd.f32 0.0, %v3013
      %v3015 = vpop.f32.mrf.mxu0
      %3016 = vmatprep.mubr.bf16.mxu0 0
      %3017 = vmatmul.mubr.bf16.gmra.mxu0 %v2902
      %v3018 = vpop.f32.mrf.mxu0
      %v3019 = vadd.f32 0.0, %v3018
      %v3020 = vpop.f32.mrf.mxu0
      %v3021 = vpop.f32.mrf.mxu0
      %v3022 = vadd.f32 0.0, %v3021
      %v3023 = vpop.f32.mrf.mxu0
      %3024 = vdwg.mxu0
      %v3025 = vmul.f32 %v2963, 0.35355338
      %v3026 = vmul.f32 %v2966, 0.35355338
      %v3027 = vmul.f32 %v2971, 0.35355338
      %v3028 = vmul.f32 %v2974, 0.35355338
      %v3029 = vmul.f32 %v2979, 0.35355338
      %v3030 = vmul.f32 %v2982, 0.35355338
      %v3031 = vmul.f32 %v2987, 0.35355338
      %v3032 = vmul.f32 %v2990, 0.35355338
      %v3033 = vmul.f32 %v2995, 0.35355338
      %v3034 = vmul.f32 %v2998, 0.35355338
      %v3035 = vmul.f32 %v3003, 0.35355338
      %v3036 = vmul.f32 %v3006, 0.35355338
      %v3037 = vmul.f32 %v3011, 0.35355338
      %v3038 = vmul.f32 %v3014, 0.35355338
      %v3039 = vmul.f32 %v3019, 0.35355338
      %v3040 = vmul.f32 %v3022, 0.35355338
      %v3041 = vsel %vm1255, %v3025, -1e+30
      %v3042 = vsel %vm1255, %v3026, -1e+30
      %v3043 = vsel %vm1255, %v3027, -1e+30
      %v3044 = vsel %vm1255, %v3028, -1e+30
      %v3045 = vsel %vm1255, %v3029, -1e+30
      %v3046 = vsel %vm1255, %v3030, -1e+30
      %v3047 = vsel %vm1255, %v3031, -1e+30
      %v3048 = vsel %vm1255, %v3032, -1e+30
      %v3049 = vsel %vm1255, %v3033, -1e+30
      %v3050 = vsel %vm1255, %v3034, -1e+30
      %v3051 = vsel %vm1255, %v3035, -1e+30
      %v3052 = vsel %vm1255, %v3036, -1e+30
      %v3053 = vsel %vm1255, %v3037, -1e+30
      %v3054 = vsel %vm1255, %v3038, -1e+30
      %v3055 = vsel %vm1255, %v3039, -1e+30
      %v3056 = vsel %vm1255, %v3040, -1e+30
      %3057 = vmax.xlane.f32.xlu0 %v3041
      %v3058 = vpop.xlane.xlu0 %3057
      %3059 = vmax.xlane.f32.xlu0 %v3042
      %v3060 = vpop.xlane.xlu0 %3059
      %3061 = vmax.xlane.f32.xlu0 %v3043
      %v3062 = vpop.xlane.xlu0 %3061
      %3063 = vmax.xlane.f32.xlu0 %v3044
      %v3064 = vpop.xlane.xlu0 %3063
      %3065 = vmax.xlane.f32.xlu0 %v3045
      %v3066 = vpop.xlane.xlu0 %3065
      %3067 = vmax.xlane.f32.xlu0 %v3046
      %v3068 = vpop.xlane.xlu0 %3067
      %3069 = vmax.xlane.f32.xlu0 %v3047
      %v3070 = vpop.xlane.xlu0 %3069
      %3071 = vmax.xlane.f32.xlu0 %v3048
      %v3072 = vpop.xlane.xlu0 %3071
      %3073 = vmax.xlane.f32.xlu0 %v3049
      %v3074 = vpop.xlane.xlu0 %3073
      %3075 = vmax.xlane.f32.xlu0 %v3050
      %v3076 = vpop.xlane.xlu0 %3075
      %3077 = vmax.xlane.f32.xlu0 %v3051
      %v3078 = vpop.xlane.xlu0 %3077
      %3079 = vmax.xlane.f32.xlu0 %v3052
      %v3080 = vpop.xlane.xlu0 %3079
      %3081 = vmax.xlane.f32.xlu0 %v3053
      %v3082 = vpop.xlane.xlu0 %3081
      %3083 = vmax.xlane.f32.xlu0 %v3054
      %v3084 = vpop.xlane.xlu0 %3083
      %3085 = vmax.xlane.f32.xlu0 %v3055
      %v3086 = vpop.xlane.xlu0 %3085
      %3087 = vmax.xlane.f32.xlu0 %v3056
      %v3088 = vpop.xlane.xlu0 %3087
      %v3089 = vsub.f32 %v3041, %v3058
      %v3090 = vsub.f32 %v3042, %v3060
      %v3091 = vsub.f32 %v3043, %v3062
      %v3092 = vsub.f32 %v3044, %v3064
      %v3093 = vsub.f32 %v3045, %v3066
      %v3094 = vsub.f32 %v3046, %v3068
      %v3095 = vsub.f32 %v3047, %v3070
      %v3096 = vsub.f32 %v3048, %v3072
      %v3097 = vsub.f32 %v3049, %v3074
      %v3098 = vsub.f32 %v3050, %v3076
      %v3099 = vsub.f32 %v3051, %v3078
      %v3100 = vsub.f32 %v3052, %v3080
      %v3101 = vsub.f32 %v3053, %v3082
      %v3102 = vsub.f32 %v3054, %v3084
      %v3103 = vsub.f32 %v3055, %v3086
      %v3104 = vsub.f32 %v3056, %v3088
      %v3105 = vmul.f32 %v3089, 1.442695
      %v3106 = vpow.pop %v3105
      %v3107 = vmul.f32 %v3090, 1.442695
      %v3108 = vpow.pop %v3107
      %v3109 = vmul.f32 %v3091, 1.442695
      %v3110 = vpow.pop %v3109
      %v3111 = vmul.f32 %v3092, 1.442695
      %v3112 = vpow.pop %v3111
      %v3113 = vmul.f32 %v3093, 1.442695
      %v3114 = vpow.pop %v3113
      %v3115 = vmul.f32 %v3094, 1.442695
      %v3116 = vpow.pop %v3115
      %v3117 = vmul.f32 %v3095, 1.442695
      %v3118 = vpow.pop %v3117
      %v3119 = vmul.f32 %v3096, 1.442695
      %v3120 = vpow.pop %v3119
      %v3121 = vmul.f32 %v3097, 1.442695
      %v3122 = vpow.pop %v3121
      %v3123 = vmul.f32 %v3098, 1.442695
      %v3124 = vpow.pop %v3123
      %v3125 = vmul.f32 %v3099, 1.442695
      %v3126 = vpow.pop %v3125
      %v3127 = vmul.f32 %v3100, 1.442695
      %v3128 = vpow.pop %v3127
      %v3129 = vmul.f32 %v3101, 1.442695
      %v3130 = vpow.pop %v3129
      %v3131 = vmul.f32 %v3102, 1.442695
      %v3132 = vpow.pop %v3131
      %v3133 = vmul.f32 %v3103, 1.442695
      %v3134 = vpow.pop %v3133
      %v3135 = vmul.f32 %v3104, 1.442695
      %v3136 = vpow.pop %v3135
      %3137 = vadd.xlane.f32.xlu0 %v3106
      %v3138 = vpop.xlane.xlu0 %3137
      %3139 = vadd.xlane.f32.xlu0 %v3108
      %v3140 = vpop.xlane.xlu0 %3139
      %3141 = vadd.xlane.f32.xlu0 %v3110
      %v3142 = vpop.xlane.xlu0 %3141
      %3143 = vadd.xlane.f32.xlu0 %v3112
      %v3144 = vpop.xlane.xlu0 %3143
      %3145 = vadd.xlane.f32.xlu0 %v3114
      %v3146 = vpop.xlane.xlu0 %3145
      %3147 = vadd.xlane.f32.xlu0 %v3116
      %v3148 = vpop.xlane.xlu0 %3147
      %3149 = vadd.xlane.f32.xlu0 %v3118
      %v3150 = vpop.xlane.xlu0 %3149
      %3151 = vadd.xlane.f32.xlu0 %v3120
      %v3152 = vpop.xlane.xlu0 %3151
      %3153 = vadd.xlane.f32.xlu0 %v3122
      %v3154 = vpop.xlane.xlu0 %3153
      %3155 = vadd.xlane.f32.xlu0 %v3124
      %v3156 = vpop.xlane.xlu0 %3155
      %3157 = vadd.xlane.f32.xlu0 %v3126
      %v3158 = vpop.xlane.xlu0 %3157
      %3159 = vadd.xlane.f32.xlu0 %v3128
      %v3160 = vpop.xlane.xlu0 %3159
      %3161 = vadd.xlane.f32.xlu0 %v3130
      %v3162 = vpop.xlane.xlu0 %3161
      %3163 = vadd.xlane.f32.xlu0 %v3132
      %v3164 = vpop.xlane.xlu0 %3163
      %3165 = vadd.xlane.f32.xlu0 %v3134
      %v3166 = vpop.xlane.xlu0 %3165
      %3167 = vadd.xlane.f32.xlu0 %v3136
      %v3168 = vpop.xlane.xlu0 %3167
      %v3169 = vpack.c.bf16 %v3108, %v3106
      %v3170 = vpack.c.bf16 %v3112, %v3110
      %v3171 = vpack.c.bf16 %v3116, %v3114
      %v3172 = vpack.c.bf16 %v3120, %v3118
      %v3173 = vpack.c.bf16 %v3124, %v3122
      %v3174 = vpack.c.bf16 %v3128, %v3126
      %v3175 = vpack.c.bf16 %v3132, %v3130
      %v3176 = vpack.c.bf16 %v3136, %v3134
      %3177 = vrot.lane.b32.xlu0 %v1424, 104
      %v3178 = vpop.permute.xlu0 %3177
      %3179 = vrot.lane.b32.xlu0 %v1425, 104
      %v3180 = vpop.permute.xlu0 %3179
      %3181 = vrot.lane.b32.xlu0 %v1426, 104
      %v3182 = vpop.permute.xlu0 %3181
      %3183 = vrot.lane.b32.xlu0 %v1427, 104
      %v3184 = vpop.permute.xlu0 %3183
      %3185 = vrot.lane.b32.xlu0 %v1428, 104
      %v3186 = vpop.permute.xlu0 %3185
      %3187 = vrot.lane.b32.xlu0 %v1429, 104
      %v3188 = vpop.permute.xlu0 %3187
      %3189 = vrot.lane.b32.xlu0 %v1430, 104
      %v3190 = vpop.permute.xlu0 %3189
      %3191 = vrot.lane.b32.xlu0 %v1431, 104
      %v3192 = vpop.permute.xlu0 %3191
      %3201 = vmatprep.subr.bf16.mxu0 0
      %3202 = vmatpush1.bf16.msra.mxu0 %v3192
      %3203 = vmatprep.subr.bf16.mxu0 0
      %3204 = vmatpush1.bf16.msra.mxu0 %v3190
      %3205 = vmatprep.subr.bf16.mxu0 0
      %3206 = vmatpush1.bf16.msra.mxu0 %v3188
      %3207 = vmatprep.subr.bf16.mxu0 0
      %3208 = vmatpush1.bf16.msra.mxu0 %v3186
      %3209 = vmatprep.subr.bf16.mxu0 0
      %3210 = vmatpush1.bf16.msra.mxu0 %v3184
      %3211 = vmatprep.subr.bf16.mxu0 0
      %3212 = vmatpush1.bf16.msra.mxu0 %v3182
      %3213 = vmatprep.subr.bf16.mxu0 0
      %3214 = vmatpush1.bf16.msra.mxu0 %v3180
      %3215 = vmatprep.subr.bf16.mxu0 0
      %3216 = vmatpush1.bf16.msra.mxu0 %v3178
      %3217 = vmatprep.subr.bf16.mxu0 0
      %3218 = vmatpush2.bf16.msra.mxu0 0
      %3219 = vmatprep.subr.bf16.mxu0 0
      %3220 = vmatpush2.bf16.msra.mxu0 0
      %3221 = vmatprep.subr.bf16.mxu0 0
      %3222 = vmatpush2.bf16.msra.mxu0 0
      %3223 = vmatprep.subr.bf16.mxu0 0
      %3224 = vmatpush2.bf16.msra.mxu0 0
      %3225 = vmatprep.subr.bf16.mxu0 0
      %3226 = vmatpush2.bf16.msra.mxu0 0
      %3227 = vmatprep.subr.bf16.mxu0 0
      %3228 = vmatpush2.bf16.msra.mxu0 0
      %3229 = vmatprep.subr.bf16.mxu0 0
      %3230 = vmatpush2.bf16.msra.mxu0 0
      %3231 = vmatprep.subr.bf16.mxu0 0
      %3232 = vmatpush2.bf16.msra.mxu0 0
      %3233 = vmatprep.mubr.bf16.mxu0 0
      %3234 = vmatmul.mubr.bf16.gmra.mxu0 %v3169
      %v3235 = vpop.f32.mrf.mxu0
      %v3236 = vadd.f32 0.0, %v3235
      %v3237 = vpop.f32.mrf.mxu0
      %v3238 = vpop.f32.mrf.mxu0
      %v3239 = vadd.f32 0.0, %v3238
      %v3240 = vpop.f32.mrf.mxu0
      %3241 = vmatprep.mubr.bf16.mxu0 0
      %3242 = vmatmul.mubr.bf16.gmra.mxu0 %v3170
      %v3243 = vpop.f32.mrf.mxu0
      %v3244 = vadd.f32 0.0, %v3243
      %v3245 = vpop.f32.mrf.mxu0
      %v3246 = vpop.f32.mrf.mxu0
      %v3247 = vadd.f32 0.0, %v3246
      %v3248 = vpop.f32.mrf.mxu0
      %3249 = vmatprep.mubr.bf16.mxu0 0
      %3250 = vmatmul.mubr.bf16.gmra.mxu0 %v3171
      %v3251 = vpop.f32.mrf.mxu0
      %v3252 = vadd.f32 0.0, %v3251
      %v3253 = vpop.f32.mrf.mxu0
      %v3254 = vpop.f32.mrf.mxu0
      %v3255 = vadd.f32 0.0, %v3254
      %v3256 = vpop.f32.mrf.mxu0
      %3257 = vmatprep.mubr.bf16.mxu0 0
      %3258 = vmatmul.mubr.bf16.gmra.mxu0 %v3172
      %v3259 = vpop.f32.mrf.mxu0
      %v3260 = vadd.f32 0.0, %v3259
      %v3261 = vpop.f32.mrf.mxu0
      %v3262 = vpop.f32.mrf.mxu0
      %v3263 = vadd.f32 0.0, %v3262
      %v3264 = vpop.f32.mrf.mxu0
      %3265 = vmatprep.mubr.bf16.mxu0 0
      %3266 = vmatmul.mubr.bf16.gmra.mxu0 %v3173
      %v3267 = vpop.f32.mrf.mxu0
      %v3268 = vadd.f32 0.0, %v3267
      %v3269 = vpop.f32.mrf.mxu0
      %v3270 = vpop.f32.mrf.mxu0
      %v3271 = vadd.f32 0.0, %v3270
      %v3272 = vpop.f32.mrf.mxu0
      %3273 = vmatprep.mubr.bf16.mxu0 0
      %3274 = vmatmul.mubr.bf16.gmra.mxu0 %v3174
      %v3275 = vpop.f32.mrf.mxu0
      %v3276 = vadd.f32 0.0, %v3275
      %v3277 = vpop.f32.mrf.mxu0
      %v3278 = vpop.f32.mrf.mxu0
      %v3279 = vadd.f32 0.0, %v3278
      %v3280 = vpop.f32.mrf.mxu0
      %3281 = vmatprep.mubr.bf16.mxu0 0
      %3282 = vmatmul.mubr.bf16.gmra.mxu0 %v3175
      %v3283 = vpop.f32.mrf.mxu0
      %v3284 = vadd.f32 0.0, %v3283
      %v3285 = vpop.f32.mrf.mxu0
      %v3286 = vpop.f32.mrf.mxu0
      %v3287 = vadd.f32 0.0, %v3286
      %v3288 = vpop.f32.mrf.mxu0
      %3289 = vmatprep.mubr.bf16.mxu0 0
      %3290 = vmatmul.mubr.bf16.gmra.mxu0 %v3176
      %v3291 = vpop.f32.mrf.mxu0
      %v3292 = vadd.f32 0.0, %v3291
      %v3293 = vpop.f32.mrf.mxu0
      %v3294 = vpop.f32.mrf.mxu0
      %v3295 = vadd.f32 0.0, %v3294
      %v3296 = vpop.f32.mrf.mxu0
      %3297 = vdwg.mxu0
      %v3298 = vrcp.pop %v3138
      %v3299 = vrcp.pop %v3140
      %v3300 = vrcp.pop %v3142
      %v3301 = vrcp.pop %v3144
      %v3302 = vrcp.pop %v3146
      %v3303 = vrcp.pop %v3148
      %v3304 = vrcp.pop %v3150
      %v3305 = vrcp.pop %v3152
      %v3306 = vrcp.pop %v3154
      %v3307 = vrcp.pop %v3156
      %v3308 = vrcp.pop %v3158
      %v3309 = vrcp.pop %v3160
      %v3310 = vrcp.pop %v3162
      %v3311 = vrcp.pop %v3164
      %v3312 = vrcp.pop %v3166
      %v3313 = vrcp.pop %v3168
      %v3314 = vmul.f32 %v3236, %v3298
      %v3315 = vmul.f32 %v3239, %v3299
      %v3316 = vmul.f32 %v3244, %v3300
      %v3317 = vmul.f32 %v3247, %v3301
      %v3318 = vmul.f32 %v3252, %v3302
      %v3319 = vmul.f32 %v3255, %v3303
      %v3320 = vmul.f32 %v3260, %v3304
      %v3321 = vmul.f32 %v3263, %v3305
      %v3322 = vmul.f32 %v3268, %v3306
      %v3323 = vmul.f32 %v3271, %v3307
      %v3324 = vmul.f32 %v3276, %v3308
      %v3325 = vmul.f32 %v3279, %v3309
      %v3326 = vmul.f32 %v3284, %v3310
      %v3327 = vmul.f32 %v3287, %v3311
      %v3328 = vmul.f32 %v3292, %v3312
      %v3329 = vmul.f32 %v3295, %v3313
      %v3330 = vpack.c.bf16 %v3315, %v3314
      %v3331 = vpack.c.bf16 %v3317, %v3316
      %v3332 = vpack.c.bf16 %v3319, %v3318
      %v3333 = vpack.c.bf16 %v3321, %v3320
      %v3334 = vpack.c.bf16 %v3323, %v3322
      %v3335 = vpack.c.bf16 %v3325, %v3324
      %v3336 = vpack.c.bf16 %v3327, %v3326
      %v3337 = vpack.c.bf16 %v3329, %v3328
      %v3346 = vunpack.c.l.b16 %v3330
      %v3347 = vunpack.c.h.b16 %v3330
      %v3348 = vunpack.c.l.b16 %v3331
      %v3349 = vunpack.c.h.b16 %v3331
      %v3350 = vunpack.c.l.b16 %v3332
      %v3351 = vunpack.c.h.b16 %v3332
      %v3352 = vunpack.c.l.b16 %v3333
      %v3353 = vunpack.c.h.b16 %v3333
      %v3354 = vunpack.c.l.b16 %v3334
      %v3355 = vunpack.c.h.b16 %v3334
      %v3356 = vunpack.c.l.b16 %v3335
      %v3357 = vunpack.c.h.b16 %v3335
      %v3358 = vunpack.c.l.b16 %v3336
      %v3359 = vunpack.c.h.b16 %v3336
      %v3360 = vunpack.c.l.b16 %v3337
      %v3361 = vunpack.c.h.b16 %v3337
      %v3362 = vpack.c.b16 %v3346, %v3346
      %v3363 = vpack.c.b16 %v3347, %v3347
      %v3364 = vpack.c.b16 %v3348, %v3348
      %v3365 = vpack.c.b16 %v3349, %v3349
      %v3366 = vpack.c.b16 %v3350, %v3350
      %v3367 = vpack.c.b16 %v3351, %v3351
      %v3368 = vpack.c.b16 %v3352, %v3352
      %v3369 = vpack.c.b16 %v3353, %v3353
      %v3370 = vpack.c.b16 %v3354, %v3354
      %v3371 = vpack.c.b16 %v3355, %v3355
      %v3372 = vpack.c.b16 %v3356, %v3356
      %v3373 = vpack.c.b16 %v3357, %v3357
      %v3374 = vpack.c.b16 %v3358, %v3358
      %v3375 = vpack.c.b16 %v3359, %v3359
      %v3376 = vpack.c.b16 %v3360, %v3360
      %v3377 = vpack.c.b16 %v3361, %v3361
      %3378 = vrot.lane.b32.xlu0 %v3362, 24
      %v3379 = vpop.permute.xlu0 %3378
      %3380 = vrot.lane.b32.xlu0 %v3363, 24
      %v3381 = vpop.permute.xlu0 %3380
      %3382 = vrot.lane.b32.xlu0 %v3364, 24
      %v3383 = vpop.permute.xlu0 %3382
      %3384 = vrot.lane.b32.xlu0 %v3365, 24
      %v3385 = vpop.permute.xlu0 %3384
      %3386 = vrot.lane.b32.xlu0 %v3366, 24
      %v3387 = vpop.permute.xlu0 %3386
      %3388 = vrot.lane.b32.xlu0 %v3367, 24
      %v3389 = vpop.permute.xlu0 %3388
      %3390 = vrot.lane.b32.xlu0 %v3368, 24
      %v3391 = vpop.permute.xlu0 %3390
      %3392 = vrot.lane.b32.xlu0 %v3369, 24
      %v3393 = vpop.permute.xlu0 %3392
      %3394 = vrot.lane.b32.xlu0 %v3370, 24
      %v3395 = vpop.permute.xlu0 %3394
      %3396 = vrot.lane.b32.xlu0 %v3371, 24
      %v3397 = vpop.permute.xlu0 %3396
      %3398 = vrot.lane.b32.xlu0 %v3372, 24
      %v3399 = vpop.permute.xlu0 %3398
      %3400 = vrot.lane.b32.xlu0 %v3373, 24
      %v3401 = vpop.permute.xlu0 %3400
      %3402 = vrot.lane.b32.xlu0 %v3374, 24
      %v3403 = vpop.permute.xlu0 %3402
      %3404 = vrot.lane.b32.xlu0 %v3375, 24
      %v3405 = vpop.permute.xlu0 %3404
      %3406 = vrot.lane.b32.xlu0 %v3376, 24
      %v3407 = vpop.permute.xlu0 %3406
      %3408 = vrot.lane.b32.xlu0 %v3377, 24
      %v3409 = vpop.permute.xlu0 %3408
      %vm3426 = vcmask 257216
      %3427 = vst.msk [vmem:[#allocation4] sm:$0xf] %vm3426, %v3379
      %3428 = vst.msk [vmem:[#allocation4 + $0x4] sm:$0xf] %vm3426, %v3381
      %3429 = vst.msk [vmem:[#allocation4 + $0x8] sm:$0xf] %vm3426, %v3383
      %3430 = vst.msk [vmem:[#allocation4 + $0xc] sm:$0xf] %vm3426, %v3385
      %3431 = vst.msk [vmem:[#allocation4 + $0x10] sm:$0xf] %vm3426, %v3387
      %3432 = vst.msk [vmem:[#allocation4 + $0x14] sm:$0xf] %vm3426, %v3389
      %3433 = vst.msk [vmem:[#allocation4 + $0x18] sm:$0xf] %vm3426, %v3391
      %3434 = vst.msk [vmem:[#allocation4 + $0x1c] sm:$0xf] %vm3426, %v3393
      %3435 = vst.msk [vmem:[#allocation4 + $0x20] sm:$0xf] %vm3426, %v3395
      %3436 = vst.msk [vmem:[#allocation4 + $0x24] sm:$0xf] %vm3426, %v3397
      %3437 = vst.msk [vmem:[#allocation4 + $0x28] sm:$0xf] %vm3426, %v3399
      %3438 = vst.msk [vmem:[#allocation4 + $0x2c] sm:$0xf] %vm3426, %v3401
      %3439 = vst.msk [vmem:[#allocation4 + $0x30] sm:$0xf] %vm3426, %v3403
      %3440 = vst.msk [vmem:[#allocation4 + $0x34] sm:$0xf] %vm3426, %v3405
      %3441 = vst.msk [vmem:[#allocation4 + $0x38] sm:$0xf] %vm3426, %v3407
      %3442 = vst.msk [vmem:[#allocation4 + $0x3c] sm:$0xf] %vm3426, %v3409
      %v3443 = vld [vmem:[#allocation4] sm:$0xf]
      %v3444 = vld [vmem:[#allocation4 + $0x4] sm:$0xf]
      %v3445 = vld [vmem:[#allocation4 + $0x8] sm:$0xf]
      %v3446 = vld [vmem:[#allocation4 + $0xc] sm:$0xf]
      %v3447 = vld [vmem:[#allocation4 + $0x10] sm:$0xf]
      %v3448 = vld [vmem:[#allocation4 + $0x14] sm:$0xf]
      %v3449 = vld [vmem:[#allocation4 + $0x18] sm:$0xf]
      %v3450 = vld [vmem:[#allocation4 + $0x1c] sm:$0xf]
      %v3451 = vld [vmem:[#allocation4 + $0x20] sm:$0xf]
      %v3452 = vld [vmem:[#allocation4 + $0x24] sm:$0xf]
      %v3453 = vld [vmem:[#allocation4 + $0x28] sm:$0xf]
      %v3454 = vld [vmem:[#allocation4 + $0x2c] sm:$0xf]
      %v3455 = vld [vmem:[#allocation4 + $0x30] sm:$0xf]
      %v3456 = vld [vmem:[#allocation4 + $0x34] sm:$0xf]
      %v3457 = vld [vmem:[#allocation4 + $0x38] sm:$0xf]
      %v3458 = vld [vmem:[#allocation4 + $0x3c] sm:$0xf]
      %v3459 = vld [vmem:[%s296] sm:$0xf]
      %v3460 = vld [vmem:[%s296 + $0x4] sm:$0xf]
      %v3461 = vld [vmem:[%s296 + $0x8] sm:$0xf]
      %v3462 = vld [vmem:[%s296 + $0xc] sm:$0xf]
      %v3479 = vunpack.c.l.b16 %v3443
      %v3480 = vunpack.c.l.b16 %v3444
      %v3481 = vunpack.c.l.b16 %v3445
      %v3482 = vunpack.c.l.b16 %v3446
      %v3483 = vunpack.c.l.b16 %v3447
      %v3484 = vunpack.c.l.b16 %v3448
      %v3485 = vunpack.c.l.b16 %v3449
      %v3486 = vunpack.c.l.b16 %v3450
      %v3487 = vunpack.c.l.b16 %v3451
      %v3488 = vunpack.c.l.b16 %v3452
      %v3489 = vunpack.c.l.b16 %v3453
      %v3490 = vunpack.c.l.b16 %v3454
      %v3491 = vunpack.c.l.b16 %v3455
      %v3492 = vunpack.c.l.b16 %v3456
      %v3493 = vunpack.c.l.b16 %v3457
      %v3494 = vunpack.c.l.b16 %v3458
      %v3495 = vpack.c.b16 %v3480, %v3479
      %v3496 = vpack.c.b16 %v3482, %v3481
      %v3497 = vpack.c.b16 %v3484, %v3483
      %v3498 = vpack.c.b16 %v3486, %v3485
      %v3499 = vpack.c.b16 %v3488, %v3487
      %v3500 = vpack.c.b16 %v3490, %v3489
      %v3501 = vpack.c.b16 %v3492, %v3491
      %v3502 = vpack.c.b16 %v3494, %v3493
      %v3507 = vunpack.c.l.b16 %v3459
      %v3508 = vunpack.c.l.b16 %v3460
      %v3509 = vunpack.c.l.b16 %v3461
      %v3510 = vunpack.c.l.b16 %v3462
      %v3511 = vpack.c.b16 %v3508, %v3507
      %v3512 = vpack.c.b16 %v3510, %v3509
      %v3516 = vsel %vm882, %v3495, 0
      %v3519 = vsel %vm882, %v3496, 0
      %v3522 = vsel %vm882, %v3497, 0
      %v3525 = vsel %vm882, %v3498, 0
      %v3528 = vsel %vm882, %v3499, 0
      %v3531 = vsel %vm882, %v3500, 0
      %v3534 = vsel %vm882, %v3501, 0
      %v3537 = vsel %vm882, %v3502, 0
      %3539 = vmatprep.subr.bf16.mxu0 0
      %3540 = vmatpush1.bf16.msra.mxu0 0
      %3541 = vmatprep.subr.bf16.mxu0 0
      %3542 = vmatpush1.bf16.msra.mxu0 0
      %3543 = vmatprep.subr.bf16.mxu0 0
      %3544 = vmatpush1.bf16.msra.mxu0 0
      %3545 = vmatprep.subr.bf16.mxu0 0
      %3546 = vmatpush1.bf16.msra.mxu0 0
      %3547 = vmatprep.subr.bf16.mxu0 0
      %3548 = vmatpush1.bf16.msra.mxu0 0
      %3549 = vmatprep.subr.bf16.mxu0 0
      %3550 = vmatpush1.bf16.msra.mxu0 0
      %3551 = vmatprep.subr.bf16.mxu0 0
      %3552 = vmatpush1.bf16.msra.mxu0 %v3512
      %3553 = vmatprep.subr.bf16.mxu0 0
      %3554 = vmatpush1.bf16.msra.mxu0 %v3511
      %3555 = vmatprep.subr.bf16.mxu0 0
      %3556 = vmatpush2.bf16.msra.mxu0 0
      %3557 = vmatprep.subr.bf16.mxu0 0
      %3558 = vmatpush2.bf16.msra.mxu0 0
      %3559 = vmatprep.subr.bf16.mxu0 0
      %3560 = vmatpush2.bf16.msra.mxu0 0
      %3561 = vmatprep.subr.bf16.mxu0 0
      %3562 = vmatpush2.bf16.msra.mxu0 0
      %3563 = vmatprep.subr.bf16.mxu0 0
      %3564 = vmatpush2.bf16.msra.mxu0 0
      %3565 = vmatprep.subr.bf16.mxu0 0
      %3566 = vmatpush2.bf16.msra.mxu0 0
      %3567 = vmatprep.subr.bf16.mxu0 0
      %3568 = vmatpush2.bf16.msra.mxu0 0
      %3569 = vmatprep.subr.bf16.mxu0 0
      %3570 = vmatpush2.bf16.msra.mxu0 0
      %3571 = vmatprep.mubr.bf16.mxu0 0
      %3572 = vmatmul.mubr.bf16.gmra.mxu0 %v3516
      %v3573 = vpop.f32.mrf.mxu0
      %v3574 = vadd.f32 0.0, %v3573
      %v3575 = vpop.f32.mrf.mxu0
      %v3576 = vpop.f32.mrf.mxu0
      %v3577 = vadd.f32 0.0, %v3576
      %v3578 = vpop.f32.mrf.mxu0
      %3579 = vmatprep.mubr.bf16.mxu0 0
      %3580 = vmatmul.mubr.bf16.gmra.mxu0 %v3519
      %v3581 = vpop.f32.mrf.mxu0
      %v3582 = vadd.f32 0.0, %v3581
      %v3583 = vpop.f32.mrf.mxu0
      %v3584 = vpop.f32.mrf.mxu0
      %v3585 = vadd.f32 0.0, %v3584
      %v3586 = vpop.f32.mrf.mxu0
      %3587 = vmatprep.mubr.bf16.mxu0 0
      %3588 = vmatmul.mubr.bf16.gmra.mxu0 %v3522
      %v3589 = vpop.f32.mrf.mxu0
      %v3590 = vadd.f32 0.0, %v3589
      %v3591 = vpop.f32.mrf.mxu0
      %v3592 = vpop.f32.mrf.mxu0
      %v3593 = vadd.f32 0.0, %v3592
      %v3594 = vpop.f32.mrf.mxu0
      %3595 = vmatprep.mubr.bf16.mxu0 0
      %3596 = vmatmul.mubr.bf16.gmra.mxu0 %v3525
      %v3597 = vpop.f32.mrf.mxu0
      %v3598 = vadd.f32 0.0, %v3597
      %v3599 = vpop.f32.mrf.mxu0
      %v3600 = vpop.f32.mrf.mxu0
      %v3601 = vadd.f32 0.0, %v3600
      %v3602 = vpop.f32.mrf.mxu0
      %3603 = vmatprep.mubr.bf16.mxu0 0
      %3604 = vmatmul.mubr.bf16.gmra.mxu0 %v3528
      %v3605 = vpop.f32.mrf.mxu0
      %v3606 = vadd.f32 0.0, %v3605
      %v3607 = vpop.f32.mrf.mxu0
      %v3608 = vpop.f32.mrf.mxu0
      %v3609 = vadd.f32 0.0, %v3608
      %v3610 = vpop.f32.mrf.mxu0
      %3611 = vmatprep.mubr.bf16.mxu0 0
      %3612 = vmatmul.mubr.bf16.gmra.mxu0 %v3531
      %v3613 = vpop.f32.mrf.mxu0
      %v3614 = vadd.f32 0.0, %v3613
      %v3615 = vpop.f32.mrf.mxu0
      %v3616 = vpop.f32.mrf.mxu0
      %v3617 = vadd.f32 0.0, %v3616
      %v3618 = vpop.f32.mrf.mxu0
      %3619 = vmatprep.mubr.bf16.mxu0 0
      %3620 = vmatmul.mubr.bf16.gmra.mxu0 %v3534
      %v3621 = vpop.f32.mrf.mxu0
      %v3622 = vadd.f32 0.0, %v3621
      %v3623 = vpop.f32.mrf.mxu0
      %v3624 = vpop.f32.mrf.mxu0
      %v3625 = vadd.f32 0.0, %v3624
      %v3626 = vpop.f32.mrf.mxu0
      %3627 = vmatprep.mubr.bf16.mxu0 0
      %3628 = vmatmul.mubr.bf16.gmra.mxu0 %v3537
      %v3629 = vpop.f32.mrf.mxu0
      %v3630 = vadd.f32 0.0, %v3629
      %v3631 = vpop.f32.mrf.mxu0
      %v3632 = vpop.f32.mrf.mxu0
      %v3633 = vadd.f32 0.0, %v3632
      %v3634 = vpop.f32.mrf.mxu0
      %3635 = vdwg.mxu0
      %p3636 = scmp.eq.s32.totalorder %s23, 0
      // Predicated region
      $region45: #{tpu_custom_call.1} parent=39 // pred_check
        %p3637 = pneg %p3636
      $region46: #{tpu_custom_call.1} parent=39 // pred_check_branch
        %3639 = sbr.rel (%p3637) target = $region48
      $region47: #{tpu_custom_call.1} parent=39 // pred_region
        %3640 = vst.msk [vmem:[#allocation5] sm:$0xff] %vm882, %v3574
        %3641 = vst.msk [vmem:[#allocation5 + $0x8] sm:$0xff] %vm882, %v3577
        %3642 = vst.msk [vmem:[#allocation5 + $0x10] sm:$0xff] %vm882, %v3582
        %3643 = vst.msk [vmem:[#allocation5 + $0x18] sm:$0xff] %vm882, %v3585
        %3644 = vst.msk [vmem:[#allocation5 + $0x20] sm:$0xff] %vm882, %v3590
        %3645 = vst.msk [vmem:[#allocation5 + $0x28] sm:$0xff] %vm882, %v3593
        %3646 = vst.msk [vmem:[#allocation5 + $0x30] sm:$0xff] %vm882, %v3598
        %3647 = vst.msk [vmem:[#allocation5 + $0x38] sm:$0xff] %vm882, %v3601
        %3648 = vst.msk [vmem:[#allocation5 + $0x40] sm:$0xff] %vm882, %v3606
        %3649 = vst.msk [vmem:[#allocation5 + $0x48] sm:$0xff] %vm882, %v3609
        %3650 = vst.msk [vmem:[#allocation5 + $0x50] sm:$0xff] %vm882, %v3614
        %3651 = vst.msk [vmem:[#allocation5 + $0x58] sm:$0xff] %vm882, %v3617
        %3652 = vst.msk [vmem:[#allocation5 + $0x60] sm:$0xff] %vm882, %v3622
        %3653 = vst.msk [vmem:[#allocation5 + $0x68] sm:$0xff] %vm882, %v3625
        %3654 = vst.msk [vmem:[#allocation5 + $0x70] sm:$0xff] %vm882, %v3630
        %3655 = vst.msk [vmem:[#allocation5 + $0x78] sm:$0xff] %vm882, %v3633
      $region48: #{tpu_custom_call.1} parent=39 // pred_fallthru
        _
      %p3656 = scmp.gt.s32.totalorder %s23, 0
      // Predicated region
      $region49: #{tpu_custom_call.1} parent=39 // pred_check
        %p3657 = pneg %p3656
      $region50: #{tpu_custom_call.1} parent=39 // pred_check_branch
        %3659 = sbr.rel (%p3657) target = $region52
      $region51: #{tpu_custom_call.1} parent=39 // pred_region
        %v3660 = vld [vmem:[#allocation5] sm:$0xff]
        %v3661 = vld [vmem:[#allocation5 + $0x8] sm:$0xff]
        %v3662 = vld [vmem:[#allocation5 + $0x10] sm:$0xff]
        %v3663 = vld [vmem:[#allocation5 + $0x18] sm:$0xff]
        %v3664 = vld [vmem:[#allocation5 + $0x20] sm:$0xff]
        %v3665 = vld [vmem:[#allocation5 + $0x28] sm:$0xff]
        %v3666 = vld [vmem:[#allocation5 + $0x30] sm:$0xff]
        %v3667 = vld [vmem:[#allocation5 + $0x38] sm:$0xff]
        %v3668 = vld [vmem:[#allocation5 + $0x40] sm:$0xff]
        %v3669 = vld [vmem:[#allocation5 + $0x48] sm:$0xff]
        %v3670 = vld [vmem:[#allocation5 + $0x50] sm:$0xff]
        %v3671 = vld [vmem:[#allocation5 + $0x58] sm:$0xff]
        %v3672 = vld [vmem:[#allocation5 + $0x60] sm:$0xff]
        %v3673 = vld [vmem:[#allocation5 + $0x68] sm:$0xff]
        %v3674 = vld [vmem:[#allocation5 + $0x70] sm:$0xff]
        %v3675 = vld [vmem:[#allocation5 + $0x78] sm:$0xff]
        %v3676 = vadd.f32 %v3660, %v3574
        %v3677 = vadd.f32 %v3661, %v3577
        %v3678 = vadd.f32 %v3662, %v3582
        %v3679 = vadd.f32 %v3663, %v3585
        %v3680 = vadd.f32 %v3664, %v3590
        %v3681 = vadd.f32 %v3665, %v3593
        %v3682 = vadd.f32 %v3666, %v3598
        %v3683 = vadd.f32 %v3667, %v3601
        %v3684 = vadd.f32 %v3668, %v3606
        %v3685 = vadd.f32 %v3669, %v3609
        %v3686 = vadd.f32 %v3670, %v3614
        %v3687 = vadd.f32 %v3671, %v3617
        %v3688 = vadd.f32 %v3672, %v3622
        %v3689 = vadd.f32 %v3673, %v3625
        %v3690 = vadd.f32 %v3674, %v3630
        %v3691 = vadd.f32 %v3675, %v3633
        %3692 = vst.msk [vmem:[#allocation5] sm:$0xff] %vm882, %v3676
        %3693 = vst.msk [vmem:[#allocation5 + $0x8] sm:$0xff] %vm882, %v3677
        %3694 = vst.msk [vmem:[#allocation5 + $0x10] sm:$0xff] %vm882, %v3678
        %3695 = vst.msk [vmem:[#allocation5 + $0x18] sm:$0xff] %vm882, %v3679
        %3696 = vst.msk [vmem:[#allocation5 + $0x20] sm:$0xff] %vm882, %v3680
        %3697 = vst.msk [vmem:[#allocation5 + $0x28] sm:$0xff] %vm882, %v3681
        %3698 = vst.msk [vmem:[#allocation5 + $0x30] sm:$0xff] %vm882, %v3682
        %3699 = vst.msk [vmem:[#allocation5 + $0x38] sm:$0xff] %vm882, %v3683
        %3700 = vst.msk [vmem:[#allocation5 + $0x40] sm:$0xff] %vm882, %v3684
        %3701 = vst.msk [vmem:[#allocation5 + $0x48] sm:$0xff] %vm882, %v3685
        %3702 = vst.msk [vmem:[#allocation5 + $0x50] sm:$0xff] %vm882, %v3686
        %3703 = vst.msk [vmem:[#allocation5 + $0x58] sm:$0xff] %vm882, %v3687
        %3704 = vst.msk [vmem:[#allocation5 + $0x60] sm:$0xff] %vm882, %v3688
        %3705 = vst.msk [vmem:[#allocation5 + $0x68] sm:$0xff] %vm882, %v3689
        %3706 = vst.msk [vmem:[#allocation5 + $0x70] sm:$0xff] %vm882, %v3690
        %3707 = vst.msk [vmem:[#allocation5 + $0x78] sm:$0xff] %vm882, %v3691
      $region52: #{tpu_custom_call.1} parent=39 // pred_fallthru
        _
      // Predicated region
      $region53: #{tpu_custom_call.1} parent=39 // pred_check
        %p3708 = pneg %p3636
      $region54: #{tpu_custom_call.1} parent=39 // pred_check_branch
        %3710 = sbr.rel (%p3708) target = $region56
      $region55: #{tpu_custom_call.1} parent=39 // pred_region
        %v3711 = vld [vmem:[#allocation5] sm:$0xff]
        %v3712 = vld [vmem:[#allocation5 + $0x8] sm:$0xff]
        %v3713 = vld [vmem:[#allocation5 + $0x10] sm:$0xff]
        %v3714 = vld [vmem:[#allocation5 + $0x18] sm:$0xff]
        %v3715 = vld [vmem:[#allocation5 + $0x20] sm:$0xff]
        %v3716 = vld [vmem:[#allocation5 + $0x28] sm:$0xff]
        %v3717 = vld [vmem:[#allocation5 + $0x30] sm:$0xff]
        %v3718 = vld [vmem:[#allocation5 + $0x38] sm:$0xff]
        %v3719 = vld [vmem:[#allocation5 + $0x40] sm:$0xff]
        %v3720 = vld [vmem:[#allocation5 + $0x48] sm:$0xff]
        %v3721 = vld [vmem:[#allocation5 + $0x50] sm:$0xff]
        %v3722 = vld [vmem:[#allocation5 + $0x58] sm:$0xff]
        %v3723 = vld [vmem:[#allocation5 + $0x60] sm:$0xff]
        %v3724 = vld [vmem:[#allocation5 + $0x68] sm:$0xff]
        %v3725 = vld [vmem:[#allocation5 + $0x70] sm:$0xff]
        %v3726 = vld [vmem:[#allocation5 + $0x78] sm:$0xff]
        %v3727 = vld [vmem:[%s4] sm:$0x1]
        %v3729 = vlaneseq
        %v3730 = vshrl.u32 %v3729, 7
        %v3731 = vsub.s32 0, %v3730
        %v3732 = vrot.slane %v3727, %v3731
        %v3734 = vadd.f32 %v3711, %v3732
        %v3735 = vadd.f32 %v3712, %v3732
        %v3736 = vadd.f32 %v3713, %v3732
        %v3737 = vadd.f32 %v3714, %v3732
        %v3738 = vadd.f32 %v3715, %v3732
        %v3739 = vadd.f32 %v3716, %v3732
        %v3740 = vadd.f32 %v3717, %v3732
        %v3741 = vadd.f32 %v3718, %v3732
        %v3742 = vadd.f32 %v3719, %v3732
        %v3743 = vadd.f32 %v3720, %v3732
        %v3744 = vadd.f32 %v3721, %v3732
        %v3745 = vadd.f32 %v3722, %v3732
        %v3746 = vadd.f32 %v3723, %v3732
        %v3747 = vadd.f32 %v3724, %v3732
        %v3748 = vadd.f32 %v3725, %v3732
        %v3749 = vadd.f32 %v3726, %v3732
        %3750 = vst.msk [vmem:[%s306] sm:$0xff] %vm882, %v3734
        %3751 = vst.msk [vmem:[%s306 + $0x8] sm:$0xff] %vm882, %v3735
        %3752 = vst.msk [vmem:[%s306 + $0x10] sm:$0xff] %vm882, %v3736
        %3753 = vst.msk [vmem:[%s306 + $0x18] sm:$0xff] %vm882, %v3737
        %3754 = vst.msk [vmem:[%s306 + $0x20] sm:$0xff] %vm882, %v3738
        %3755 = vst.msk [vmem:[%s306 + $0x28] sm:$0xff] %vm882, %v3739
        %3756 = vst.msk [vmem:[%s306 + $0x30] sm:$0xff] %vm882, %v3740
        %3757 = vst.msk [vmem:[%s306 + $0x38] sm:$0xff] %vm882, %v3741
        %3758 = vst.msk [vmem:[%s306 + $0x40] sm:$0xff] %vm882, %v3742
        %3759 = vst.msk [vmem:[%s306 + $0x48] sm:$0xff] %vm882, %v3743
        %3760 = vst.msk [vmem:[%s306 + $0x50] sm:$0xff] %vm882, %v3744
        %3761 = vst.msk [vmem:[%s306 + $0x58] sm:$0xff] %vm882, %v3745
        %3762 = vst.msk [vmem:[%s306 + $0x60] sm:$0xff] %vm882, %v3746
        %3763 = vst.msk [vmem:[%s306 + $0x68] sm:$0xff] %vm882, %v3747
        %3764 = vst.msk [vmem:[%s306 + $0x70] sm:$0xff] %vm882, %v3748
        %3765 = vst.msk [vmem:[%s306 + $0x78] sm:$0xff] %vm882, %v3749
      $region56: #{tpu_custom_call.1} parent=39 // pred_fallthru
        _
      %s3766 = smul.u32 16, %s22
      %p3767 = scmp.lt.s32.totalorder %s21, 1
      %s3768 = scalar_select %p3767, %s21, 1
      %p3769 = scmp.lt.s32.totalorder %s3766, 15
      %s3770 = scalar_select %p3769, %s3766, 15
      %s3771 = smul.addr %s3768, 16
      %s3772 = sadd.s32 %s3770, %s3771
      %s3773 = smul.addr %s3772, 8
      %s3774 = scalar_lea.vmem %s5, %s3773
      // Predicated region
      $region57: #{tpu_custom_call.1} parent=39 // pred_check
        %p3775 = pneg %p180
      $region58: #{tpu_custom_call.1} parent=39 // pred_check_branch
        %3777 = sbr.rel (%p3775) target = $region60
      $region59: #{tpu_custom_call.1} parent=39 // pred_region
        %s3778 = smul.u32 16, %s22
      $region60: #{tpu_custom_call.1} parent=39 // pred_fallthru
        _
    $region40: #{tpu_custom_call.1} parent=5 // pred_fallthru
      _
    %p3779 = scmp.le.s32.totalorder 2, %s11
    // Predicated region
    $region61: #{tpu_custom_call.1} parent=5 // pred_check
      %p3780 = pneg %p3779
    $region62: #{tpu_custom_call.1} parent=5 // pred_check_branch
      %3782 = sbr.rel (%p3780) target = $region64
    $region63: #{tpu_custom_call.1} parent=5 // pred_region
      %s3783 = ssub.s32 %s11, 2
      // Predicated region
      $region65: #{tpu_custom_call.1} parent=63 // pred_check
        %p3784 = pneg %p186
      $region66: #{tpu_custom_call.1} parent=63 // pred_check_branch
        %3786 = sbr.rel (%p3784) target = $region68
      $region67: #{tpu_custom_call.1} parent=63 // pred_region
        %s3787 = smul.u32 16, %s25
        %p3788 = scmp.lt.s32.totalorder %s24, 1
        %s3789 = scalar_select %p3788, %s24, 1
        %p3790 = scmp.lt.s32.totalorder %s3787, 15
        %s3791 = scalar_select %p3790, %s3787, 15
        %s3792 = smul.addr %s3789, 16
        %s3793 = sadd.s32 %s3791, %s3792
        %s3794 = smul.addr %s3793, 8
        %s3795 = scalar_lea.vmem %s5, %s3794
      $region68: #{tpu_custom_call.1} parent=63 // pred_fallthru
        _
    $region64: #{tpu_custom_call.1} parent=5 // pred_fallthru
      _
  $region6: #{tpu_custom_call.1} parent=0 // loop_footer
    %s15 = sadd.s32 1, %s11
  $region7: #{tpu_custom_call.1} parent=0 // loop_footer_branch
    %10 = sbr.rel target = $region3
  $region8: #{tpu_custom_call.1} parent=0 // loop_exit
    _

</llo_original>
